<compile_context>
chip_gen: v6e
topology: v6e:2x2x1
jax: 0.10.0
libtpu: 0.0.40
codegen_flags: <defaults>
</compile_context>

<pallas_src>
import jax
import jax.numpy as jnp
from jax.experimental import pallas as pl
from jax.experimental.pallas import tpu as pltpu

EPS = 1e-5
LANE = 128  # TPU lane width; all conv output channels are padded to this.


def _round_up(x, m):
    return ((x + m - 1) // m) * m


# ---------------------------------------------------------------------------
# Fused single-K-step matmul kernel:
#   out = relu_mask( x @ w_bnfolded + bias [+ residual] )
# ---------------------------------------------------------------------------
def _make_matmul_kernel(relu, relu_cols, has_residual):
    """relu_cols=None -> ReLU on all columns; int -> ReLU only on cols < relu_cols."""

    def compute(x_ref, w_ref, b_ref, r_ref, o_ref):
        y = jnp.dot(x_ref[...], w_ref[...], preferred_element_type=jnp.float32)
        y = y + b_ref[...]
        if has_residual:
            y = y + r_ref[...].astype(jnp.float32)
        if relu:
            if relu_cols is None:
                y = jnp.maximum(y, 0.0)
            else:
                col = jax.lax.broadcasted_iota(jnp.int32, y.shape, 1)
                y = jnp.where(col < relu_cols, jnp.maximum(y, 0.0), y)
        o_ref[...] = y.astype(o_ref.dtype)

    if has_residual:
        def kernel(x_ref, w_ref, b_ref, r_ref, o_ref):
            compute(x_ref, w_ref, b_ref, r_ref, o_ref)
    else:
        def kernel(x_ref, w_ref, b_ref, o_ref):
            compute(x_ref, w_ref, b_ref, None, o_ref)
    return kernel


def _fused_matmul_bias_act(x2d, w2d, bias2d, res2d=None, relu=True,
                           relu_cols=None, out_dtype=jnp.bfloat16):
    """Single-K-step MXU matmul with fused bias / residual / (masked) ReLU.

    x2d:    (M, K)        activations/patches (real channels only), cast to bf16
    w2d:    (K_pad, N_pad) BN-folded, pre-padded bf16 weights (K_pad,N_pad % 128 == 0)
    bias2d: (1, N_pad)     f32 bias
    res2d:  (M, N_pad)     optional residual
    """
    M, K = x2d.shape
    K_pad, N_pad = w2d.shape
    assert K <= K_pad and K_pad % 128 == 0 and N_pad % 128 == 0

    # ---- M tiling: keep >=2 parallel tiles when possible (v7x has 2 TCs) ----
    M16 = _round_up(M, 16)
    if M16 >= 32:
        tm = min(256, _round_up((M16 + 1) // 2, 16))
    else:
        tm = M16
    M_pad = _round_up(M16, tm)
    grid = (M_pad // tm,)

    x_p = jnp.pad(x2d.astype(jnp.bfloat16), ((0, M_pad - M), (0, K_pad - K)))
    b_p = bias2d.astype(jnp.float32)

    args = [x_p, w2d.astype(jnp.bfloat16), b_p]
    in_specs = [
        pl.BlockSpec((tm, K_pad), lambda i: (i, 0)),
        pl.BlockSpec((K_pad, N_pad), lambda i: (0, 0)),
        pl.BlockSpec((1, N_pad), lambda i: (0, 0)),
    ]
    if res2d is not None:
        r_p = jnp.pad(res2d.astype(jnp.bfloat16), ((0, M_pad - M), (0, 0)))
        args.append(r_p)
        in_specs.append(pl.BlockSpec((tm, N_pad), lambda i: (i, 0)))

    # Double-buffered VMEM estimate (bf16 x/w/res/out tiles + f32 bias), 2x margin.
    vmem_est = 2 * (tm * K_pad * 2 + K_pad * N_pad * 2 + tm * N_pad * 2 + N_pad * 4)
    if res2d is not None:
        vmem_est += 2 * tm * N_pad * 2
    vmem_limit = int(min(32 * 1024 * 1024, max(4 * 1024 * 1024, 2 * vmem_est)))

    kernel = _make_matmul_kernel(relu=relu, relu_cols=relu_cols,
                                 has_residual=res2d is not None)

    out = pl.pallas_call(
        kernel,
        grid=grid,
        in_specs=in_specs,
        out_specs=pl.BlockSpec((tm, N_pad), lambda i: (i, 0)),
        out_shape=jax.ShapeDtypeStruct((M_pad, N_pad), out_dtype),
        compiler_params=pltpu.CompilerParams(
            dimension_semantics=("parallel",),
            vmem_limit_bytes=vmem_limit,
        ),
    )(*args)
    return out[:M]


# ---------------------------------------------------------------------------
# im2col glue (real channels only) and plain-XLA maxpool
# ---------------------------------------------------------------------------
def _im2col(x_nhwc, c_real, kh, kw, stride, pad):
    N, H, W, _ = x_nhwc.shape
    x = x_nhwc[..., :c_real]
    xp = jnp.pad(x, ((0, 0), (pad, pad), (pad, pad), (0, 0))) if pad > 0 else x
    Ho = (H + 2 * pad - kh) // stride + 1
    Wo = (W + 2 * pad - kw) // stride + 1
    taps = []
    for i in range(kh):
        for j in range(kw):
            taps.append(xp[:, i:i + stride * Ho:stride, j:j + stride * Wo:stride, :])
    patches = jnp.concatenate(taps, axis=-1)          # (N, Ho, Wo, kh*kw*c_real)
    return patches.reshape(N * Ho * Wo, kh * kw * c_real), (N, Ho, Wo)


def maxpool_3x3_s2_p1(x_nhwc):
    # Trivial 9-way max on a ~128 KiB tensor: plain XLA per perf review.
    N, H, W, C = x_nhwc.shape
    Ho = (H + 2 - 3) // 2 + 1
    Wo = (W + 2 - 3) // 2 + 1
    xp = jnp.pad(x_nhwc, ((0, 0), (1, 1), (1, 1), (0, 0)),
                 constant_values=-jnp.inf)
    out = None
    for i in range(3):
        for j in range(3):
            tap = xp[:, i:i + 2 * Ho:2, j:j + 2 * Wo:2, :]
            out = tap if out is None else jnp.maximum(out, tap)
    return out


# ---------------------------------------------------------------------------
# One-time parameter preparation (BN fold, pad, bf16 cast, ds fusion)
# ---------------------------------------------------------------------------
def _fold_bn(w_oihw, bn):
    scale, bias = bn
    cout = w_oihw.shape[0]
    w_hwio = jnp.transpose(w_oihw, (2, 3, 1, 0)) * scale.reshape(1, 1, 1, cout)
    return w_hwio, bias


def _prep_conv(w_oihw, bn, stride, pad, relu_cols=None):
    cout, cin, kh, kw = w_oihw.shape
    w_hwio, bias = _fold_bn(w_oihw, bn)
    K = kh * kw * cin
    K_pad = _round_up(K, 128)
    N_pad = _round_up(cout, LANE)
    w2d = jnp.pad(w_hwio.reshape(K, cout),
                  ((0, K_pad - K), (0, N_pad - cout))).astype(jnp.bfloat16)
    bias_p = jnp.pad(bias, (0, N_pad - cout)).reshape(1, N_pad).astype(jnp.float32)
    return {"w2d": w2d, "bias": bias_p, "c_in": cin, "kh": kh, "kw": kw,
            "stride": stride, "pad": pad, "relu_cols": relu_cols}


def _prep_conv1_ds(w1_oihw, bn1, ds_w_oihw, ds_bn, stride):
    """Fuse the block's 3x3 conv1 and its 1x1 downsample into one matmul.

    The 1x1/stride-s downsample reads exactly the center tap of conv1's
    3x3/stride-s/pad-1 im2col, so its weights occupy the center-tap rows and
    its output columns are concatenated after conv1's (N_pad = 256).
    ReLU is applied only to the conv1 columns ([0, 128))."""
    cout1, cin, kh, kw = w1_oihw.shape      # 3x3
    cds = ds_w_oihw.shape[0]
    w1_hwio, b1 = _fold_bn(w1_oihw, bn1)
    wds_hwio, bds = _fold_bn(ds_w_oihw, ds_bn)   # (1,1,cin,cds)
    K = kh * kw * cin
    K_pad = _round_up(K, 128)
    w1_2d = jnp.pad(w1_hwio.reshape(K, cout1),
                    ((0, K_pad - K), (0, LANE - cout1)))
    center = (kh // 2) * kw + (kw // 2)          # tap index 4 for 3x3
    wds_2d = jnp.zeros((K_pad, LANE), jnp.float32)
    wds_2d = wds_2d.at[center * cin:(center + 1) * cin, :cds].set(
        wds_hwio.reshape(cin, cds))
    w2d = jnp.concatenate([w1_2d, wds_2d], axis=1).astype(jnp.bfloat16)
    bias = jnp.concatenate([jnp.pad(b1, (0, LANE - cout1)),
                            jnp.pad(bds, (0, LANE - cds))])
    bias = bias.reshape(1, 2 * LANE).astype(jnp.float32)
    return {"w2d": w2d, "bias": bias, "c_in": cin, "kh": kh, "kw": kw,
            "stride": stride, "pad": 1, "relu_cols": LANE}


def prepare_resnet_params(params):
    prep = {"stem": _prep_conv(params["conv1_w"], params["bn1"], stride=1, pad=1)}
    blocks = []
    for blk in params["blocks"]:
        stride = blk["stride"]
        if blk["ds_w"] is not None:
            conv1 = _prep_conv1_ds(blk["conv1_w"], blk["bn1"],
                                   blk["ds_w"], blk["ds_bn"], stride)
            fused_ds = True
        else:
            conv1 = _prep_conv(blk["conv1_w"], blk["bn1"], stride=stride, pad=1)
            fused_ds = False
        conv2 = _prep_conv(blk["conv2_w"], blk["bn2"], stride=1, pad=1)
        blocks.append({"fused_ds": fused_ds, "conv1": conv1, "conv2": conv2})
    prep["blocks"] = blocks
    prep["fc_w"] = params["fc_w"]
    prep["fc_b"] = params["fc_b"]
    return prep


# ---------------------------------------------------------------------------
# Deterministic parameter initialization (matches the module's __init__)
# ---------------------------------------------------------------------------
def _kaiming_conv(key, cout, cin, kh, kw):
    # kaiming_normal_, mode='fan_out', relu -> std = sqrt(2 / (cout*kh*kw))
    std = (2.0 / (cout * kh * kw)) ** 0.5
    return jax.random.normal(key, (cout, cin, kh, kw), jnp.float32) * std


def _bn_params(c):
    gamma = jnp.ones((c,), jnp.float32)
    beta = jnp.zeros((c,), jnp.float32)
    mean = jnp.zeros((c,), jnp.float32)
    var = jnp.ones((c,), jnp.float32)
    scale = gamma / jnp.sqrt(var + EPS)
    bias = beta - mean * scale
    return scale, bias


def init_resnet_params(key, scaling=0.125, layers=(1, 1, 1, 1), num_classes=10):
    assert int(64 * scaling) > 0
    inplanes = int(64 * scaling)
    keys = iter(jax.random.split(key, 128))
    params = {}

    params["conv1_w"] = _kaiming_conv(next(keys), inplanes, 3, 3, 3)
    params["bn1"] = _bn_params(inplanes)

    blocks = []
    plane_cfg = [int(64 * scaling), int(128 * scaling),
                 int(256 * scaling), int(512 * scaling)]
    stride_cfg = [1, 2, 2, 2]
    expansion = 1  # BasicBlock
    for planes, n_layers, first_stride in zip(plane_cfg, layers, stride_cfg):
        for li in range(n_layers):
            stride = first_stride if li == 0 else 1
            blk = {"stride": stride}
            blk["conv1_w"] = _kaiming_conv(next(keys), planes, inplanes, 3, 3)
            blk["bn1"] = _bn_params(planes)
            blk["conv2_w"] = _kaiming_conv(next(keys), planes, planes, 3, 3)
            blk["bn2"] = _bn_params(planes)
            if stride != 1 or inplanes != planes * expansion:
                blk["ds_w"] = _kaiming_conv(next(keys), planes * expansion,
                                            inplanes, 1, 1)
                blk["ds_bn"] = _bn_params(planes * expansion)
            else:
                blk["ds_w"] = None
            blocks.append(blk)
            inplanes = planes * expansion
    params["blocks"] = blocks

    fan_in = int(512 * scaling) * expansion
    bound = 1.0 / (fan_in ** 0.5)
    params["fc_w"] = jax.random.uniform(next(keys), (fan_in, num_classes),
                                        jnp.float32, -bound, bound)
    params["fc_b"] = jax.random.uniform(next(keys), (num_classes,),
                                        jnp.float32, -bound, bound)
    return params


# ---------------------------------------------------------------------------
# Forward pass
# ---------------------------------------------------------------------------
def conv_layer(x_nhwc, p, residual=None):
    x2d, (N, Ho, Wo) = _im2col(x_nhwc, p["c_in"], p["kh"], p["kw"],
                               p["stride"], p["pad"])
    res2d = None
    if residual is not None:
        res2d = residual.reshape(N * Ho * Wo, residual.shape[-1])
    y = _fused_matmul_bias_act(x2d, p["w2d"], p["bias"], res2d=res2d,
                               relu=True, relu_cols=p["relu_cols"])
    return y.reshape(N, Ho, Wo, -1)


def resnet_forward(prep, x_nchw):
    x = jnp.transpose(x_nchw, (0, 2, 3, 1)).astype(jnp.bfloat16)  # NCHW -> NHWC
    x = conv_layer(x, prep["stem"])          # (N, H, W, 128) lane-dense
    x = maxpool_3x3_s2_p1(x)
    for blk in prep["blocks"]:
        if blk["fused_ds"]:
            y = conv_layer(x, blk["conv1"])  # (N, Ho, Wo, 256): [conv1 | identity]
            out, identity = y[..., :LANE], y[..., LANE:]
        else:
            out = conv_layer(x, blk["conv1"])
            identity = x
        x = conv_layer(out, blk["conv2"], residual=identity)
    # AdaptiveAvgPool2d((1,1)) + flatten + FC: tiny reductions, plain JAX/XLA
    # per perf review (a pallas_call would be pure launch/DMA overhead here).
    feat = jnp.mean(x.astype(jnp.float32), axis=(1, 2))   # (N, 128)
    fan_in = prep["fc_w"].shape[0]
    feat = feat[:, :fan_in]                                # drop padded channels
    return jnp.dot(feat, prep["fc_w"]) + prep["fc_b"]


if __name__ == "__main__":
    key = jax.random.PRNGKey(0)
    k_params, k_x = jax.random.split(key)

    # Small config: scaling=1/8 -> channels 8/16/32/64, layers=[1,1,1,1], 10 classes.
    raw_params = init_resnet_params(k_params, scaling=0.125, layers=(1, 1, 1, 1),
                                    num_classes=10)
    prep = prepare_resnet_params(raw_params)   # one-time weight preprocessing

    # Input in PyTorch NCHW convention: (batch=2, channels=3, H=16, W=16).
    x = jax.random.normal(k_x, (2, 3, 16, 16), jnp.float32)

    fwd = jax.jit(lambda inp: resnet_forward(prep, inp))
    out = jax.block_until_ready(fwd(x))
    assert out.shape == (2, 10), out.shape
    assert bool(jnp.all(jnp.isfinite(out)))
    print("KERNEL_OK")
</pallas_src>

<mosaic_0001>
module attributes {stable_mosaic.version = 11 : i64} {
  func.func @kernel(%arg0: i32, %arg1: memref<256x128xbf16, #tpu.memory_space<vmem>>, %arg2: memref<128x128xbf16, #tpu.memory_space<vmem>>, %arg3: memref<1x128xf32, #tpu.memory_space<vmem>>, %arg4: memref<256x128xbf16, #tpu.memory_space<vmem>>) attributes {dimension_semantics = [#tpu.dimension_semantics<parallel>], iteration_bounds = array<i64: 2>, scalar_prefetch = 0 : i64, scratch_operands = 0 : i64, tpu.core_type = #tpu.core_type<tc>, window_params = [{transform_indices = @transform_0, window_bounds = array<i64: 256, 128>}, {pipeline_mode = #tpu.pipeline_mode<synchronous>, transform_indices = @transform_1, window_bounds = array<i64: 128, 128>}, {pipeline_mode = #tpu.pipeline_mode<synchronous>, transform_indices = @transform_2, window_bounds = array<i64: 1, 128>}, {transform_indices = @transform_3, window_bounds = array<i64: 256, 128>}]} {
    %c0 = arith.constant 0 : index
    %c0_0 = arith.constant 0 : index
    %0 = vector.load %arg1[%c0, %c0_0] : memref<256x128xbf16, #tpu.memory_space<vmem>>, vector<256x128xbf16>
    %c0_1 = arith.constant 0 : index
    %c0_2 = arith.constant 0 : index
    %1 = vector.load %arg2[%c0_1, %c0_2] : memref<128x128xbf16, #tpu.memory_space<vmem>>, vector<128x128xbf16>
    %cst = arith.constant dense<0.000000e+00> : vector<256x128xf32>
    %2 = tpu.matmul %0, %1, %cst {dimension_numbers = #tpu.dot_dimension_numbers<[1], [0], [0], [1], [0, 0, 1, 1], [], []>} : vector<256x128xbf16>, vector<128x128xbf16>, vector<256x128xf32> -> vector<256x128xf32>
    %c0_3 = arith.constant 0 : index
    %c0_4 = arith.constant 0 : index
    %3 = vector.load %arg3[%c0_3, %c0_4] : memref<1x128xf32, #tpu.memory_space<vmem>>, vector<1x128xf32>
    %4 = vector.broadcast %3 : vector<1x128xf32> to vector<256x128xf32>
    %5 = arith.addf %2, %4 : vector<256x128xf32>
    %cst_5 = arith.constant 0.000000e+00 : f32
    %6 = vector.broadcast %cst_5 : f32 to vector<256x128xf32>
    %7 = arith.maximumf %5, %6 : vector<256x128xf32>
    %8 = arith.truncf %7 : vector<256x128xf32> to vector<256x128xbf16>
    %c0_6 = arith.constant 0 : index
    %c0_7 = arith.constant 0 : index
    %9 = vector.load %arg4[%c0_6, %c0_7] : memref<256x128xbf16, #tpu.memory_space<vmem>>, vector<256x128xbf16>
    tpu.vector_store %arg4[%c0_6, %c0_7], %8 {strides = array<i32>} : memref<256x128xbf16, #tpu.memory_space<vmem>>, vector<256x128xbf16>,
    return
  }
  func.func @transform_0(%arg0: i32) -> (i32, i32) {
    %c0_i32 = arith.constant 0 : i32
    %c0_i32_0 = arith.constant 0 : i32
    return %arg0, %c0_i32 : i32, i32
  }
  func.func @transform_1(%arg0: i32) -> (i32, i32) {
    %c0_i32 = arith.constant 0 : i32
    %c0_i32_0 = arith.constant 0 : i32
    %c0_i32_1 = arith.constant 0 : i32
    return %c0_i32, %c0_i32_0 : i32, i32
  }
  func.func @transform_2(%arg0: i32) -> (i32, i32) {
    %c0_i32 = arith.constant 0 : i32
    %c0_i32_0 = arith.constant 0 : i32
    %c0_i32_1 = arith.constant 0 : i32
    return %c0_i32, %c0_i32_0 : i32, i32
  }
  func.func @transform_3(%arg0: i32) -> (i32, i32) {
    %c0_i32 = arith.constant 0 : i32
    %c0_i32_0 = arith.constant 0 : i32
    return %arg0, %c0_i32 : i32, i32
  }
}

module attributes {stable_mosaic.version = 11 : i64} {
  func.func @kernel(%arg0: i32, %arg1: memref<64x128xbf16, #tpu.memory_space<vmem>>, %arg2: memref<128x128xbf16, #tpu.memory_space<vmem>>, %arg3: memref<1x128xf32, #tpu.memory_space<vmem>>, %arg4: memref<64x128xbf16, #tpu.memory_space<vmem>>) attributes {dimension_semantics = [#tpu.dimension_semantics<parallel>], iteration_bounds = array<i64: 2>, scalar_prefetch = 0 : i64, scratch_operands = 0 : i64, tpu.core_type = #tpu.core_type<tc>, window_params = [{transform_indices = @transform_0, window_bounds = array<i64: 64, 128>}, {pipeline_mode = #tpu.pipeline_mode<synchronous>, transform_indices = @transform_1, window_bounds = array<i64: 128, 128>}, {pipeline_mode = #tpu.pipeline_mode<synchronous>, transform_indices = @transform_2, window_bounds = array<i64: 1, 128>}, {transform_indices = @transform_3, window_bounds = array<i64: 64, 128>}]} {
    %c0 = arith.constant 0 : index
    %c0_0 = arith.constant 0 : index
    %0 = vector.load %arg1[%c0, %c0_0] : memref<64x128xbf16, #tpu.memory_space<vmem>>, vector<64x128xbf16>
    %c0_1 = arith.constant 0 : index
    %c0_2 = arith.constant 0 : index
    %1 = vector.load %arg2[%c0_1, %c0_2] : memref<128x128xbf16, #tpu.memory_space<vmem>>, vector<128x128xbf16>
    %cst = arith.constant dense<0.000000e+00> : vector<64x128xf32>
    %2 = tpu.matmul %0, %1, %cst {dimension_numbers = #tpu.dot_dimension_numbers<[1], [0], [0], [1], [0, 0, 1, 1], [], []>} : vector<64x128xbf16>, vector<128x128xbf16>, vector<64x128xf32> -> vector<64x128xf32>
    %c0_3 = arith.constant 0 : index
    %c0_4 = arith.constant 0 : index
    %3 = vector.load %arg3[%c0_3, %c0_4] : memref<1x128xf32, #tpu.memory_space<vmem>>, vector<1x128xf32>
    %4 = vector.broadcast %3 : vector<1x128xf32> to vector<64x128xf32>
    %5 = arith.addf %2, %4 : vector<64x128xf32>
    %cst_5 = arith.constant 0.000000e+00 : f32
    %6 = vector.broadcast %cst_5 : f32 to vector<64x128xf32>
    %7 = arith.maximumf %5, %6 : vector<64x128xf32>
    %8 = arith.truncf %7 : vector<64x128xf32> to vector<64x128xbf16>
    %c0_6 = arith.constant 0 : index
    %c0_7 = arith.constant 0 : index
    %9 = vector.load %arg4[%c0_6, %c0_7] : memref<64x128xbf16, #tpu.memory_space<vmem>>, vector<64x128xbf16>
    tpu.vector_store %arg4[%c0_6, %c0_7], %8 {strides = array<i32>} : memref<64x128xbf16, #tpu.memory_space<vmem>>, vector<64x128xbf16>,
    return
  }
  func.func @transform_0(%arg0: i32) -> (i32, i32) {
    %c0_i32 = arith.constant 0 : i32
    %c0_i32_0 = arith.constant 0 : i32
    return %arg0, %c0_i32 : i32, i32
  }
  func.func @transform_1(%arg0: i32) -> (i32, i32) {
    %c0_i32 = arith.constant 0 : i32
    %c0_i32_0 = arith.constant 0 : i32
    %c0_i32_1 = arith.constant 0 : i32
    return %c0_i32, %c0_i32_0 : i32, i32
  }
  func.func @transform_2(%arg0: i32) -> (i32, i32) {
    %c0_i32 = arith.constant 0 : i32
    %c0_i32_0 = arith.constant 0 : i32
    %c0_i32_1 = arith.constant 0 : i32
    return %c0_i32, %c0_i32_0 : i32, i32
  }
  func.func @transform_3(%arg0: i32) -> (i32, i32) {
    %c0_i32 = arith.constant 0 : i32
    %c0_i32_0 = arith.constant 0 : i32
    return %arg0, %c0_i32 : i32, i32
  }
}

module attributes {stable_mosaic.version = 11 : i64} {
  func.func @kernel(%arg0: i32, %arg1: memref<64x128xbf16, #tpu.memory_space<vmem>>, %arg2: memref<128x128xbf16, #tpu.memory_space<vmem>>, %arg3: memref<1x128xf32, #tpu.memory_space<vmem>>, %arg4: memref<64x128xbf16, #tpu.memory_space<vmem>>, %arg5: memref<64x128xbf16, #tpu.memory_space<vmem>>) attributes {dimension_semantics = [#tpu.dimension_semantics<parallel>], iteration_bounds = array<i64: 2>, scalar_prefetch = 0 : i64, scratch_operands = 0 : i64, tpu.core_type = #tpu.core_type<tc>, window_params = [{transform_indices = @transform_0, window_bounds = array<i64: 64, 128>}, {pipeline_mode = #tpu.pipeline_mode<synchronous>, transform_indices = @transform_1, window_bounds = array<i64: 128, 128>}, {pipeline_mode = #tpu.pipeline_mode<synchronous>, transform_indices = @transform_2, window_bounds = array<i64: 1, 128>}, {transform_indices = @transform_3, window_bounds = array<i64: 64, 128>}, {transform_indices = @transform_4, window_bounds = array<i64: 64, 128>}]} {
    %c0 = arith.constant 0 : index
    %c0_0 = arith.constant 0 : index
    %0 = vector.load %arg1[%c0, %c0_0] : memref<64x128xbf16, #tpu.memory_space<vmem>>, vector<64x128xbf16>
    %c0_1 = arith.constant 0 : index
    %c0_2 = arith.constant 0 : index
    %1 = vector.load %arg2[%c0_1, %c0_2] : memref<128x128xbf16, #tpu.memory_space<vmem>>, vector<128x128xbf16>
    %cst = arith.constant dense<0.000000e+00> : vector<64x128xf32>
    %2 = tpu.matmul %0, %1, %cst {dimension_numbers = #tpu.dot_dimension_numbers<[1], [0], [0], [1], [0, 0, 1, 1], [], []>} : vector<64x128xbf16>, vector<128x128xbf16>, vector<64x128xf32> -> vector<64x128xf32>
    %c0_3 = arith.constant 0 : index
    %c0_4 = arith.constant 0 : index
    %3 = vector.load %arg3[%c0_3, %c0_4] : memref<1x128xf32, #tpu.memory_space<vmem>>, vector<1x128xf32>
    %4 = vector.broadcast %3 : vector<1x128xf32> to vector<64x128xf32>
    %5 = arith.addf %2, %4 : vector<64x128xf32>
    %c0_5 = arith.constant 0 : index
    %c0_6 = arith.constant 0 : index
    %6 = vector.load %arg4[%c0_5, %c0_6] : memref<64x128xbf16, #tpu.memory_space<vmem>>, vector<64x128xbf16>
    %7 = arith.extf %6 : vector<64x128xbf16> to vector<64x128xf32>
    %8 = arith.addf %5, %7 : vector<64x128xf32>
    %cst_7 = arith.constant 0.000000e+00 : f32
    %9 = vector.broadcast %cst_7 : f32 to vector<64x128xf32>
    %10 = arith.maximumf %8, %9 : vector<64x128xf32>
    %11 = arith.truncf %10 : vector<64x128xf32> to vector<64x128xbf16>
    %c0_8 = arith.constant 0 : index
    %c0_9 = arith.constant 0 : index
    %12 = vector.load %arg5[%c0_8, %c0_9] : memref<64x128xbf16, #tpu.memory_space<vmem>>, vector<64x128xbf16>
    tpu.vector_store %arg5[%c0_8, %c0_9], %11 {strides = array<i32>} : memref<64x128xbf16, #tpu.memory_space<vmem>>, vector<64x128xbf16>,
    return
  }
  func.func @transform_0(%arg0: i32) -> (i32, i32) {
    %c0_i32 = arith.constant 0 : i32
    %c0_i32_0 = arith.constant 0 : i32
    return %arg0, %c0_i32 : i32, i32
  }
  func.func @transform_1(%arg0: i32) -> (i32, i32) {
    %c0_i32 = arith.constant 0 : i32
    %c0_i32_0 = arith.constant 0 : i32
    %c0_i32_1 = arith.constant 0 : i32
    return %c0_i32, %c0_i32_0 : i32, i32
  }
  func.func @transform_2(%arg0: i32) -> (i32, i32) {
    %c0_i32 = arith.constant 0 : i32
    %c0_i32_0 = arith.constant 0 : i32
    %c0_i32_1 = arith.constant 0 : i32
    return %c0_i32, %c0_i32_0 : i32, i32
  }
  func.func @transform_3(%arg0: i32) -> (i32, i32) {
    %c0_i32 = arith.constant 0 : i32
    %c0_i32_0 = arith.constant 0 : i32
    return %arg0, %c0_i32 : i32, i32
  }
  func.func @transform_4(%arg0: i32) -> (i32, i32) {
    %c0_i32 = arith.constant 0 : i32
    %c0_i32_0 = arith.constant 0 : i32
    return %arg0, %c0_i32 : i32, i32
  }
}

module attributes {stable_mosaic.version = 11 : i64} {
  func.func @kernel(%arg0: i32, %arg1: memref<16x128xbf16, #tpu.memory_space<vmem>>, %arg2: memref<128x256xbf16, #tpu.memory_space<vmem>>, %arg3: memref<1x256xf32, #tpu.memory_space<vmem>>, %arg4: memref<16x256xbf16, #tpu.memory_space<vmem>>) attributes {dimension_semantics = [#tpu.dimension_semantics<parallel>], iteration_bounds = array<i64: 2>, scalar_prefetch = 0 : i64, scratch_operands = 0 : i64, tpu.core_type = #tpu.core_type<tc>, window_params = [{transform_indices = @transform_0, window_bounds = array<i64: 16, 128>}, {pipeline_mode = #tpu.pipeline_mode<synchronous>, transform_indices = @transform_1, window_bounds = array<i64: 128, 256>}, {pipeline_mode = #tpu.pipeline_mode<synchronous>, transform_indices = @transform_2, window_bounds = array<i64: 1, 256>}, {transform_indices = @transform_3, window_bounds = array<i64: 16, 256>}]} {
    %c0 = arith.constant 0 : index
    %c0_0 = arith.constant 0 : index
    %0 = vector.load %arg1[%c0, %c0_0] : memref<16x128xbf16, #tpu.memory_space<vmem>>, vector<16x128xbf16>
    %c0_1 = arith.constant 0 : index
    %c0_2 = arith.constant 0 : index
    %1 = vector.load %arg2[%c0_1, %c0_2] : memref<128x256xbf16, #tpu.memory_space<vmem>>, vector<128x256xbf16>
    %cst = arith.constant dense<0.000000e+00> : vector<16x256xf32>
    %2 = tpu.matmul %0, %1, %cst {dimension_numbers = #tpu.dot_dimension_numbers<[1], [0], [0], [1], [0, 0, 1, 1], [], []>} : vector<16x128xbf16>, vector<128x256xbf16>, vector<16x256xf32> -> vector<16x256xf32>
    %c0_3 = arith.constant 0 : index
    %c0_4 = arith.constant 0 : index
    %3 = vector.load %arg3[%c0_3, %c0_4] : memref<1x256xf32, #tpu.memory_space<vmem>>, vector<1x256xf32>
    %4 = vector.broadcast %3 : vector<1x256xf32> to vector<16x256xf32>
    %5 = arith.addf %2, %4 : vector<16x256xf32>
    %6 = tpu.iota {dimensions = array<i32: 1>} : vector<16x256xi32>
    %c128_i32 = arith.constant 128 : i32
    %7 = vector.broadcast %c128_i32 : i32 to vector<16x256xi32>
    %8 = arith.cmpi slt, %6, %7 : vector<16x256xi32>
    %cst_5 = arith.constant 0.000000e+00 : f32
    %9 = vector.broadcast %cst_5 : f32 to vector<16x256xf32>
    %10 = arith.maximumf %5, %9 : vector<16x256xf32>
    %11 = arith.select %8, %10, %5 : vector<16x256xi1>, vector<16x256xf32>
    %12 = arith.truncf %11 : vector<16x256xf32> to vector<16x256xbf16>
    %c0_6 = arith.constant 0 : index
    %c0_7 = arith.constant 0 : index
    %13 = vector.load %arg4[%c0_6, %c0_7] : memref<16x256xbf16, #tpu.memory_space<vmem>>, vector<16x256xbf16>
    tpu.vector_store %arg4[%c0_6, %c0_7], %12 {strides = array<i32>} : memref<16x256xbf16, #tpu.memory_space<vmem>>, vector<16x256xbf16>,
    return
  }
  func.func @transform_0(%arg0: i32) -> (i32, i32) {
    %c0_i32 = arith.constant 0 : i32
    %c0_i32_0 = arith.constant 0 : i32
    return %arg0, %c0_i32 : i32, i32
  }
  func.func @transform_1(%arg0: i32) -> (i32, i32) {
    %c0_i32 = arith.constant 0 : i32
    %c0_i32_0 = arith.constant 0 : i32
    %c0_i32_1 = arith.constant 0 : i32
    return %c0_i32, %c0_i32_0 : i32, i32
  }
  func.func @transform_2(%arg0: i32) -> (i32, i32) {
    %c0_i32 = arith.constant 0 : i32
    %c0_i32_0 = arith.constant 0 : i32
    %c0_i32_1 = arith.constant 0 : i32
    return %c0_i32, %c0_i32_0 : i32, i32
  }
  func.func @transform_3(%arg0: i32) -> (i32, i32) {
    %c0_i32 = arith.constant 0 : i32
    %c0_i32_0 = arith.constant 0 : i32
    return %arg0, %c0_i32 : i32, i32
  }
}

module attributes {stable_mosaic.version = 11 : i64} {
  func.func @kernel(%arg0: i32, %arg1: memref<16x256xbf16, #tpu.memory_space<vmem>>, %arg2: memref<256x128xbf16, #tpu.memory_space<vmem>>, %arg3: memref<1x128xf32, #tpu.memory_space<vmem>>, %arg4: memref<16x128xbf16, #tpu.memory_space<vmem>>, %arg5: memref<16x128xbf16, #tpu.memory_space<vmem>>) attributes {dimension_semantics = [#tpu.dimension_semantics<parallel>], iteration_bounds = array<i64: 2>, scalar_prefetch = 0 : i64, scratch_operands = 0 : i64, tpu.core_type = #tpu.core_type<tc>, window_params = [{transform_indices = @transform_0, window_bounds = array<i64: 16, 256>}, {pipeline_mode = #tpu.pipeline_mode<synchronous>, transform_indices = @transform_1, window_bounds = array<i64: 256, 128>}, {pipeline_mode = #tpu.pipeline_mode<synchronous>, transform_indices = @transform_2, window_bounds = array<i64: 1, 128>}, {transform_indices = @transform_3, window_bounds = array<i64: 16, 128>}, {transform_indices = @transform_4, window_bounds = array<i64: 16, 128>}]} {
    %c0 = arith.constant 0 : index
    %c0_0 = arith.constant 0 : index
    %0 = vector.load %arg1[%c0, %c0_0] : memref<16x256xbf16, #tpu.memory_space<vmem>>, vector<16x256xbf16>
    %c0_1 = arith.constant 0 : index
    %c0_2 = arith.constant 0 : index
    %1 = vector.load %arg2[%c0_1, %c0_2] : memref<256x128xbf16, #tpu.memory_space<vmem>>, vector<256x128xbf16>
    %cst = arith.constant dense<0.000000e+00> : vector<16x128xf32>
    %2 = tpu.matmul %0, %1, %cst {dimension_numbers = #tpu.dot_dimension_numbers<[1], [0], [0], [1], [0, 0, 1, 1], [], []>} : vector<16x256xbf16>, vector<256x128xbf16>, vector<16x128xf32> -> vector<16x128xf32>
    %c0_3 = arith.constant 0 : index
    %c0_4 = arith.constant 0 : index
    %3 = vector.load %arg3[%c0_3, %c0_4] : memref<1x128xf32, #tpu.memory_space<vmem>>, vector<1x128xf32>
    %4 = vector.broadcast %3 : vector<1x128xf32> to vector<16x128xf32>
    %5 = arith.addf %2, %4 : vector<16x128xf32>
    %c0_5 = arith.constant 0 : index
    %c0_6 = arith.constant 0 : index
    %6 = vector.load %arg4[%c0_5, %c0_6] : memref<16x128xbf16, #tpu.memory_space<vmem>>, vector<16x128xbf16>
    %7 = arith.extf %6 : vector<16x128xbf16> to vector<16x128xf32>
    %8 = arith.addf %5, %7 : vector<16x128xf32>
    %cst_7 = arith.constant 0.000000e+00 : f32
    %9 = vector.broadcast %cst_7 : f32 to vector<16x128xf32>
    %10 = arith.maximumf %8, %9 : vector<16x128xf32>
    %11 = arith.truncf %10 : vector<16x128xf32> to vector<16x128xbf16>
    %c0_8 = arith.constant 0 : index
    %c0_9 = arith.constant 0 : index
    %12 = vector.load %arg5[%c0_8, %c0_9] : memref<16x128xbf16, #tpu.memory_space<vmem>>, vector<16x128xbf16>
    tpu.vector_store %arg5[%c0_8, %c0_9], %11 {strides = array<i32>} : memref<16x128xbf16, #tpu.memory_space<vmem>>, vector<16x128xbf16>,
    return
  }
  func.func @transform_0(%arg0: i32) -> (i32, i32) {
    %c0_i32 = arith.constant 0 : i32
    %c0_i32_0 = arith.constant 0 : i32
    return %arg0, %c0_i32 : i32, i32
  }
  func.func @transform_1(%arg0: i32) -> (i32, i32) {
    %c0_i32 = arith.constant 0 : i32
    %c0_i32_0 = arith.constant 0 : i32
    %c0_i32_1 = arith.constant 0 : i32
    return %c0_i32, %c0_i32_0 : i32, i32
  }
  func.func @transform_2(%arg0: i32) -> (i32, i32) {
    %c0_i32 = arith.constant 0 : i32
    %c0_i32_0 = arith.constant 0 : i32
    %c0_i32_1 = arith.constant 0 : i32
    return %c0_i32, %c0_i32_0 : i32, i32
  }
  func.func @transform_3(%arg0: i32) -> (i32, i32) {
    %c0_i32 = arith.constant 0 : i32
    %c0_i32_0 = arith.constant 0 : i32
    return %arg0, %c0_i32 : i32, i32
  }
  func.func @transform_4(%arg0: i32) -> (i32, i32) {
    %c0_i32 = arith.constant 0 : i32
    %c0_i32_0 = arith.constant 0 : i32
    return %arg0, %c0_i32 : i32, i32
  }
}

module attributes {stable_mosaic.version = 11 : i64} {
  func.func @kernel(%arg0: i32, %arg1: memref<16x256xbf16, #tpu.memory_space<vmem>>, %arg2: memref<256x256xbf16, #tpu.memory_space<vmem>>, %arg3: memref<1x256xf32, #tpu.memory_space<vmem>>, %arg4: memref<16x256xbf16, #tpu.memory_space<vmem>>) attributes {dimension_semantics = [#tpu.dimension_semantics<parallel>], iteration_bounds = array<i64: 1>, scalar_prefetch = 0 : i64, scratch_operands = 0 : i64, tpu.core_type = #tpu.core_type<tc>, window_params = [{transform_indices = @transform_0, window_bounds = array<i64: 16, 256>}, {pipeline_mode = #tpu.pipeline_mode<synchronous>, transform_indices = @transform_1, window_bounds = array<i64: 256, 256>}, {pipeline_mode = #tpu.pipeline_mode<synchronous>, transform_indices = @transform_2, window_bounds = array<i64: 1, 256>}, {transform_indices = @transform_3, window_bounds = array<i64: 16, 256>}]} {
    %c0 = arith.constant 0 : index
    %c0_0 = arith.constant 0 : index
    %0 = vector.load %arg1[%c0, %c0_0] : memref<16x256xbf16, #tpu.memory_space<vmem>>, vector<16x256xbf16>
    %c0_1 = arith.constant 0 : index
    %c0_2 = arith.constant 0 : index
    %1 = vector.load %arg2[%c0_1, %c0_2] : memref<256x256xbf16, #tpu.memory_space<vmem>>, vector<256x256xbf16>
    %cst = arith.constant dense<0.000000e+00> : vector<16x256xf32>
    %2 = tpu.matmul %0, %1, %cst {dimension_numbers = #tpu.dot_dimension_numbers<[1], [0], [0], [1], [0, 0, 1, 1], [], []>} : vector<16x256xbf16>, vector<256x256xbf16>, vector<16x256xf32> -> vector<16x256xf32>
    %c0_3 = arith.constant 0 : index
    %c0_4 = arith.constant 0 : index
    %3 = vector.load %arg3[%c0_3, %c0_4] : memref<1x256xf32, #tpu.memory_space<vmem>>, vector<1x256xf32>
    %4 = vector.broadcast %3 : vector<1x256xf32> to vector<16x256xf32>
    %5 = arith.addf %2, %4 : vector<16x256xf32>
    %6 = tpu.iota {dimensions = array<i32: 1>} : vector<16x256xi32>
    %c128_i32 = arith.constant 128 : i32
    %7 = vector.broadcast %c128_i32 : i32 to vector<16x256xi32>
    %8 = arith.cmpi slt, %6, %7 : vector<16x256xi32>
    %cst_5 = arith.constant 0.000000e+00 : f32
    %9 = vector.broadcast %cst_5 : f32 to vector<16x256xf32>
    %10 = arith.maximumf %5, %9 : vector<16x256xf32>
    %11 = arith.select %8, %10, %5 : vector<16x256xi1>, vector<16x256xf32>
    %12 = arith.truncf %11 : vector<16x256xf32> to vector<16x256xbf16>
    %c0_6 = arith.constant 0 : index
    %c0_7 = arith.constant 0 : index
    %13 = vector.load %arg4[%c0_6, %c0_7] : memref<16x256xbf16, #tpu.memory_space<vmem>>, vector<16x256xbf16>
    tpu.vector_store %arg4[%c0_6, %c0_7], %12 {strides = array<i32>} : memref<16x256xbf16, #tpu.memory_space<vmem>>, vector<16x256xbf16>,
    return
  }
  func.func @transform_0(%arg0: i32) -> (i32, i32) {
    %c0_i32 = arith.constant 0 : i32
    %c0_i32_0 = arith.constant 0 : i32
    return %arg0, %c0_i32 : i32, i32
  }
  func.func @transform_1(%arg0: i32) -> (i32, i32) {
    %c0_i32 = arith.constant 0 : i32
    %c0_i32_0 = arith.constant 0 : i32
    %c0_i32_1 = arith.constant 0 : i32
    return %c0_i32, %c0_i32_0 : i32, i32
  }
  func.func @transform_2(%arg0: i32) -> (i32, i32) {
    %c0_i32 = arith.constant 0 : i32
    %c0_i32_0 = arith.constant 0 : i32
    %c0_i32_1 = arith.constant 0 : i32
    return %c0_i32, %c0_i32_0 : i32, i32
  }
  func.func @transform_3(%arg0: i32) -> (i32, i32) {
    %c0_i32 = arith.constant 0 : i32
    %c0_i32_0 = arith.constant 0 : i32
    return %arg0, %c0_i32 : i32, i32
  }
}

module attributes {stable_mosaic.version = 11 : i64} {
  func.func @kernel(%arg0: i32, %arg1: memref<16x384xbf16, #tpu.memory_space<vmem>>, %arg2: memref<384x128xbf16, #tpu.memory_space<vmem>>, %arg3: memref<1x128xf32, #tpu.memory_space<vmem>>, %arg4: memref<16x128xbf16, #tpu.memory_space<vmem>>, %arg5: memref<16x128xbf16, #tpu.memory_space<vmem>>) attributes {dimension_semantics = [#tpu.dimension_semantics<parallel>], iteration_bounds = array<i64: 1>, scalar_prefetch = 0 : i64, scratch_operands = 0 : i64, tpu.core_type = #tpu.core_type<tc>, window_params = [{transform_indices = @transform_0, window_bounds = array<i64: 16, 384>}, {pipeline_mode = #tpu.pipeline_mode<synchronous>, transform_indices = @transform_1, window_bounds = array<i64: 384, 128>}, {pipeline_mode = #tpu.pipeline_mode<synchronous>, transform_indices = @transform_2, window_bounds = array<i64: 1, 128>}, {transform_indices = @transform_3, window_bounds = array<i64: 16, 128>}, {transform_indices = @transform_4, window_bounds = array<i64: 16, 128>}]} {
    %c0 = arith.constant 0 : index
    %c0_0 = arith.constant 0 : index
    %0 = vector.load %arg1[%c0, %c0_0] : memref<16x384xbf16, #tpu.memory_space<vmem>>, vector<16x384xbf16>
    %c0_1 = arith.constant 0 : index
    %c0_2 = arith.constant 0 : index
    %1 = vector.load %arg2[%c0_1, %c0_2] : memref<384x128xbf16, #tpu.memory_space<vmem>>, vector<384x128xbf16>
    %cst = arith.constant dense<0.000000e+00> : vector<16x128xf32>
    %2 = tpu.matmul %0, %1, %cst {dimension_numbers = #tpu.dot_dimension_numbers<[1], [0], [0], [1], [0, 0, 1, 1], [], []>} : vector<16x384xbf16>, vector<384x128xbf16>, vector<16x128xf32> -> vector<16x128xf32>
    %c0_3 = arith.constant 0 : index
    %c0_4 = arith.constant 0 : index
    %3 = vector.load %arg3[%c0_3, %c0_4] : memref<1x128xf32, #tpu.memory_space<vmem>>, vector<1x128xf32>
    %4 = vector.broadcast %3 : vector<1x128xf32> to vector<16x128xf32>
    %5 = arith.addf %2, %4 : vector<16x128xf32>
    %c0_5 = arith.constant 0 : index
    %c0_6 = arith.constant 0 : index
    %6 = vector.load %arg4[%c0_5, %c0_6] : memref<16x128xbf16, #tpu.memory_space<vmem>>, vector<16x128xbf16>
    %7 = arith.extf %6 : vector<16x128xbf16> to vector<16x128xf32>
    %8 = arith.addf %5, %7 : vector<16x128xf32>
    %cst_7 = arith.constant 0.000000e+00 : f32
    %9 = vector.broadcast %cst_7 : f32 to vector<16x128xf32>
    %10 = arith.maximumf %8, %9 : vector<16x128xf32>
    %11 = arith.truncf %10 : vector<16x128xf32> to vector<16x128xbf16>
    %c0_8 = arith.constant 0 : index
    %c0_9 = arith.constant 0 : index
    %12 = vector.load %arg5[%c0_8, %c0_9] : memref<16x128xbf16, #tpu.memory_space<vmem>>, vector<16x128xbf16>
    tpu.vector_store %arg5[%c0_8, %c0_9], %11 {strides = array<i32>} : memref<16x128xbf16, #tpu.memory_space<vmem>>, vector<16x128xbf16>,
    return
  }
  func.func @transform_0(%arg0: i32) -> (i32, i32) {
    %c0_i32 = arith.constant 0 : i32
    %c0_i32_0 = arith.constant 0 : i32
    return %arg0, %c0_i32 : i32, i32
  }
  func.func @transform_1(%arg0: i32) -> (i32, i32) {
    %c0_i32 = arith.constant 0 : i32
    %c0_i32_0 = arith.constant 0 : i32
    %c0_i32_1 = arith.constant 0 : i32
    return %c0_i32, %c0_i32_0 : i32, i32
  }
  func.func @transform_2(%arg0: i32) -> (i32, i32) {
    %c0_i32 = arith.constant 0 : i32
    %c0_i32_0 = arith.constant 0 : i32
    %c0_i32_1 = arith.constant 0 : i32
    return %c0_i32, %c0_i32_0 : i32, i32
  }
  func.func @transform_3(%arg0: i32) -> (i32, i32) {
    %c0_i32 = arith.constant 0 : i32
    %c0_i32_0 = arith.constant 0 : i32
    return %arg0, %c0_i32 : i32, i32
  }
  func.func @transform_4(%arg0: i32) -> (i32, i32) {
    %c0_i32 = arith.constant 0 : i32
    %c0_i32_0 = arith.constant 0 : i32
    return %arg0, %c0_i32 : i32, i32
  }
}

module attributes {stable_mosaic.version = 11 : i64} {
  func.func @kernel(%arg0: i32, %arg1: memref<16x384xbf16, #tpu.memory_space<vmem>>, %arg2: memref<384x256xbf16, #tpu.memory_space<vmem>>, %arg3: memref<1x256xf32, #tpu.memory_space<vmem>>, %arg4: memref<16x256xbf16, #tpu.memory_space<vmem>>) attributes {dimension_semantics = [#tpu.dimension_semantics<parallel>], iteration_bounds = array<i64: 1>, scalar_prefetch = 0 : i64, scratch_operands = 0 : i64, tpu.core_type = #tpu.core_type<tc>, window_params = [{transform_indices = @transform_0, window_bounds = array<i64: 16, 384>}, {pipeline_mode = #tpu.pipeline_mode<synchronous>, transform_indices = @transform_1, window_bounds = array<i64: 384, 256>}, {pipeline_mode = #tpu.pipeline_mode<synchronous>, transform_indices = @transform_2, window_bounds = array<i64: 1, 256>}, {transform_indices = @transform_3, window_bounds = array<i64: 16, 256>}]} {
    %c0 = arith.constant 0 : index
    %c0_0 = arith.constant 0 : index
    %0 = vector.load %arg1[%c0, %c0_0] : memref<16x384xbf16, #tpu.memory_space<vmem>>, vector<16x384xbf16>
    %c0_1 = arith.constant 0 : index
    %c0_2 = arith.constant 0 : index
    %1 = vector.load %arg2[%c0_1, %c0_2] : memref<384x256xbf16, #tpu.memory_space<vmem>>, vector<384x256xbf16>
    %cst = arith.constant dense<0.000000e+00> : vector<16x256xf32>
    %2 = tpu.matmul %0, %1, %cst {dimension_numbers = #tpu.dot_dimension_numbers<[1], [0], [0], [1], [0, 0, 1, 1], [], []>} : vector<16x384xbf16>, vector<384x256xbf16>, vector<16x256xf32> -> vector<16x256xf32>
    %c0_3 = arith.constant 0 : index
    %c0_4 = arith.constant 0 : index
    %3 = vector.load %arg3[%c0_3, %c0_4] : memref<1x256xf32, #tpu.memory_space<vmem>>, vector<1x256xf32>
    %4 = vector.broadcast %3 : vector<1x256xf32> to vector<16x256xf32>
    %5 = arith.addf %2, %4 : vector<16x256xf32>
    %6 = tpu.iota {dimensions = array<i32: 1>} : vector<16x256xi32>
    %c128_i32 = arith.constant 128 : i32
    %7 = vector.broadcast %c128_i32 : i32 to vector<16x256xi32>
    %8 = arith.cmpi slt, %6, %7 : vector<16x256xi32>
    %cst_5 = arith.constant 0.000000e+00 : f32
    %9 = vector.broadcast %cst_5 : f32 to vector<16x256xf32>
    %10 = arith.maximumf %5, %9 : vector<16x256xf32>
    %11 = arith.select %8, %10, %5 : vector<16x256xi1>, vector<16x256xf32>
    %12 = arith.truncf %11 : vector<16x256xf32> to vector<16x256xbf16>
    %c0_6 = arith.constant 0 : index
    %c0_7 = arith.constant 0 : index
    %13 = vector.load %arg4[%c0_6, %c0_7] : memref<16x256xbf16, #tpu.memory_space<vmem>>, vector<16x256xbf16>
    tpu.vector_store %arg4[%c0_6, %c0_7], %12 {strides = array<i32>} : memref<16x256xbf16, #tpu.memory_space<vmem>>, vector<16x256xbf16>,
    return
  }
  func.func @transform_0(%arg0: i32) -> (i32, i32) {
    %c0_i32 = arith.constant 0 : i32
    %c0_i32_0 = arith.constant 0 : i32
    return %arg0, %c0_i32 : i32, i32
  }
  func.func @transform_1(%arg0: i32) -> (i32, i32) {
    %c0_i32 = arith.constant 0 : i32
    %c0_i32_0 = arith.constant 0 : i32
    %c0_i32_1 = arith.constant 0 : i32
    return %c0_i32, %c0_i32_0 : i32, i32
  }
  func.func @transform_2(%arg0: i32) -> (i32, i32) {
    %c0_i32 = arith.constant 0 : i32
    %c0_i32_0 = arith.constant 0 : i32
    %c0_i32_1 = arith.constant 0 : i32
    return %c0_i32, %c0_i32_0 : i32, i32
  }
  func.func @transform_3(%arg0: i32) -> (i32, i32) {
    %c0_i32 = arith.constant 0 : i32
    %c0_i32_0 = arith.constant 0 : i32
    return %arg0, %c0_i32 : i32, i32
  }
}

module attributes {stable_mosaic.version = 11 : i64} {
  func.func @kernel(%arg0: i32, %arg1: memref<16x640xbf16, #tpu.memory_space<vmem>>, %arg2: memref<640x128xbf16, #tpu.memory_space<vmem>>, %arg3: memref<1x128xf32, #tpu.memory_space<vmem>>, %arg4: memref<16x128xbf16, #tpu.memory_space<vmem>>, %arg5: memref<16x128xbf16, #tpu.memory_space<vmem>>) attributes {dimension_semantics = [#tpu.dimension_semantics<parallel>], iteration_bounds = array<i64: 1>, scalar_prefetch = 0 : i64, scratch_operands = 0 : i64, tpu.core_type = #tpu.core_type<tc>, window_params = [{transform_indices = @transform_0, window_bounds = array<i64: 16, 640>}, {pipeline_mode = #tpu.pipeline_mode<synchronous>, transform_indices = @transform_1, window_bounds = array<i64: 640, 128>}, {pipeline_mode = #tpu.pipeline_mode<synchronous>, transform_indices = @transform_2, window_bounds = array<i64: 1, 128>}, {transform_indices = @transform_3, window_bounds = array<i64: 16, 128>}, {transform_indices = @transform_4, window_bounds = array<i64: 16, 128>}]} {
    %c0 = arith.constant 0 : index
    %c0_0 = arith.constant 0 : index
    %0 = vector.load %arg1[%c0, %c0_0] : memref<16x640xbf16, #tpu.memory_space<vmem>>, vector<16x640xbf16>
    %c0_1 = arith.constant 0 : index
    %c0_2 = arith.constant 0 : index
    %1 = vector.load %arg2[%c0_1, %c0_2] : memref<640x128xbf16, #tpu.memory_space<vmem>>, vector<640x128xbf16>
    %cst = arith.constant dense<0.000000e+00> : vector<16x128xf32>
    %2 = tpu.matmul %0, %1, %cst {dimension_numbers = #tpu.dot_dimension_numbers<[1], [0], [0], [1], [0, 0, 1, 1], [], []>} : vector<16x640xbf16>, vector<640x128xbf16>, vector<16x128xf32> -> vector<16x128xf32>
    %c0_3 = arith.constant 0 : index
    %c0_4 = arith.constant 0 : index
    %3 = vector.load %arg3[%c0_3, %c0_4] : memref<1x128xf32, #tpu.memory_space<vmem>>, vector<1x128xf32>
    %4 = vector.broadcast %3 : vector<1x128xf32> to vector<16x128xf32>
    %5 = arith.addf %2, %4 : vector<16x128xf32>
    %c0_5 = arith.constant 0 : index
    %c0_6 = arith.constant 0 : index
    %6 = vector.load %arg4[%c0_5, %c0_6] : memref<16x128xbf16, #tpu.memory_space<vmem>>, vector<16x128xbf16>
    %7 = arith.extf %6 : vector<16x128xbf16> to vector<16x128xf32>
    %8 = arith.addf %5, %7 : vector<16x128xf32>
    %cst_7 = arith.constant 0.000000e+00 : f32
    %9 = vector.broadcast %cst_7 : f32 to vector<16x128xf32>
    %10 = arith.maximumf %8, %9 : vector<16x128xf32>
    %11 = arith.truncf %10 : vector<16x128xf32> to vector<16x128xbf16>
    %c0_8 = arith.constant 0 : index
    %c0_9 = arith.constant 0 : index
    %12 = vector.load %arg5[%c0_8, %c0_9] : memref<16x128xbf16, #tpu.memory_space<vmem>>, vector<16x128xbf16>
    tpu.vector_store %arg5[%c0_8, %c0_9], %11 {strides = array<i32>} : memref<16x128xbf16, #tpu.memory_space<vmem>>, vector<16x128xbf16>,
    return
  }
  func.func @transform_0(%arg0: i32) -> (i32, i32) {
    %c0_i32 = arith.constant 0 : i32
    %c0_i32_0 = arith.constant 0 : i32
    return %arg0, %c0_i32 : i32, i32
  }
  func.func @transform_1(%arg0: i32) -> (i32, i32) {
    %c0_i32 = arith.constant 0 : i32
    %c0_i32_0 = arith.constant 0 : i32
    %c0_i32_1 = arith.constant 0 : i32
    return %c0_i32, %c0_i32_0 : i32, i32
  }
  func.func @transform_2(%arg0: i32) -> (i32, i32) {
    %c0_i32 = arith.constant 0 : i32
    %c0_i32_0 = arith.constant 0 : i32
    %c0_i32_1 = arith.constant 0 : i32
    return %c0_i32, %c0_i32_0 : i32, i32
  }
  func.func @transform_3(%arg0: i32) -> (i32, i32) {
    %c0_i32 = arith.constant 0 : i32
    %c0_i32_0 = arith.constant 0 : i32
    return %arg0, %c0_i32 : i32, i32
  }
  func.func @transform_4(%arg0: i32) -> (i32, i32) {
    %c0_i32 = arith.constant 0 : i32
    %c0_i32_0 = arith.constant 0 : i32
    return %arg0, %c0_i32 : i32, i32
  }
}

</mosaic_0001>

<llo_original>
// kernel: _lambda_.9
$region0: #{_lambda_.9}
  #allocation0 [shape = 'u32[]', space=smem, size = 0x4, offset = 0x4, fixed_abs, tag = 'smem constant byte address 0x4 - core index']
  #allocation1 [shape = 'u32[144,128]{1,0:T(1,128)}', space=vmem, size = 0x12000, scoped, tag = 'internal scratch']
  %s0 = inlined_call_operand.vmem [shape: bf16[512,128], index: 0, kind: input, shape index: {}]
  %s1 = inlined_call_operand.vmem [shape: bf16[128,128], index: 1, kind: input, shape index: {}]
  %s2 = inlined_call_operand.vmem [shape: f32[1,128], index: 2, kind: input, shape index: {}]
  %s3 = inlined_call_operand.vmem [shape: bf16[512,128], index: 3, kind: output, shape index: {}]
  %s4 = sld [smem:[#allocation0]]
  $region45: #{_lambda_.9} parent=0
    _
  %s6 = ssub.s32 1, %s4
  %s7 = scalar_select 0, %s6, %s4
  loop: start=0, step=1, limit=4
  $region2: #{_lambda_.9} parent=0 // loop_pre_header
    _
  $region3: #{_lambda_.9} parent=0 // loop_header
    %s9 = sphi 0, %s13
    %p10 = scmp.ge.s32.totalorder %s9, 4
    %s19 = sphi 0, %s21
    %s22 = sphi 0, %s19
    %s23 = sphi 0, %s22
    %s39 = sphi 0, %s23
    %s43 = sphi 0, %s43
    %s45 = sphi 0, %s43
    %s46 = sphi 0, %s45
    %s60 = sphi 0, %s46
    %s64 = sphi 0, %s64
    %s66 = sphi 0, %s64
    %s67 = sphi 0, %s66
    %s81 = sphi 0, %s67
    %s87 = sphi 0, %s89
    %s90 = sphi 0, %s87
    %s91 = sphi 0, %s90
    %s107 = sphi 0, %s91
  $region4: #{_lambda_.9} parent=0 // loop_header_branch
    %12 = sbr.rel (%p10) target = $region8
  $region5: #{_lambda_.9} parent=0 // loop_body
    %s14 = ssub.s32 %s9, 1
    %s15 = ssub.s32 %s9, 2
    %s16 = sadd.s32 %s9, 1
    %s17 = ssub.s32 %s9, %s16
    %p18 = scmp.eq.s32.totalorder %s17, 0
    %s20 = sadd.s32 %s19, 1
    %s21 = scalar_select %p18, %s19, %s20
    %p24 = pneg %p18
    %p25 = scmp.eq.s32.totalorder %s9, 1
    %p26 = por %p24, %p25
    %p27 = scmp.ne.s32.totalorder %s19, %s22
    %p28 = scmp.eq.s32.totalorder %s9, 0
    %p29 = por %p27, %p28
    %p30 = scmp.ne.s32.totalorder %s19, %s22
    %p31 = scmp.eq.s32.totalorder %s14, 1
    %p32 = por %p30, %p31
    %p33 = scmp.ne.s32.totalorder %s22, %s23
    %p34 = scmp.eq.s32.totalorder %s14, 0
    %p35 = por %p33, %p34
    %p36 = scmp.ne.s32.totalorder %s22, %s23
    %p37 = scmp.eq.s32.totalorder %s15, 1
    %p38 = por %p36, %p37
    %p40 = scmp.ne.s32.totalorder %s23, %s39
    %p41 = scmp.eq.s32.totalorder %s15, 0
    %p42 = por %p40, %p41
    %s44 = sadd.s32 %s43, 1
    %p47 = scmp.eq.s32.totalorder %s9, 1
    %p48 = scmp.ne.s32.totalorder %s43, %s45
    %p49 = scmp.eq.s32.totalorder %s9, 0
    %p50 = por %p48, %p49
    %p51 = scmp.ne.s32.totalorder %s43, %s45
    %p52 = scmp.eq.s32.totalorder %s14, 1
    %p53 = por %p51, %p52
    %p54 = scmp.ne.s32.totalorder %s45, %s46
    %p55 = scmp.eq.s32.totalorder %s14, 0
    %p56 = por %p54, %p55
    %p57 = scmp.ne.s32.totalorder %s45, %s46
    %p58 = scmp.eq.s32.totalorder %s15, 1
    %p59 = por %p57, %p58
    %p61 = scmp.ne.s32.totalorder %s46, %s60
    %p62 = scmp.eq.s32.totalorder %s15, 0
    %p63 = por %p61, %p62
    %s65 = sadd.s32 %s64, 1
    %p68 = scmp.eq.s32.totalorder %s9, 1
    %p69 = scmp.ne.s32.totalorder %s64, %s66
    %p70 = scmp.eq.s32.totalorder %s9, 0
    %p71 = por %p69, %p70
    %p72 = scmp.ne.s32.totalorder %s64, %s66
    %p73 = scmp.eq.s32.totalorder %s14, 1
    %p74 = por %p72, %p73
    %p75 = scmp.ne.s32.totalorder %s66, %s67
    %p76 = scmp.eq.s32.totalorder %s14, 0
    %p77 = por %p75, %p76
    %p78 = scmp.ne.s32.totalorder %s66, %s67
    %p79 = scmp.eq.s32.totalorder %s15, 1
    %p80 = por %p78, %p79
    %p82 = scmp.ne.s32.totalorder %s67, %s81
    %p83 = scmp.eq.s32.totalorder %s15, 0
    %p84 = por %p82, %p83
    %s85 = ssub.s32 %s9, %s16
    %p86 = scmp.eq.s32.totalorder %s85, 0
    %s88 = sadd.s32 %s87, 1
    %s89 = scalar_select %p86, %s87, %s88
    %p92 = pneg %p86
    %p93 = scmp.eq.s32.totalorder %s9, 1
    %p94 = por %p92, %p93
    %p95 = scmp.ne.s32.totalorder %s87, %s90
    %p96 = scmp.eq.s32.totalorder %s9, 0
    %p97 = por %p95, %p96
    %p98 = scmp.ne.s32.totalorder %s87, %s90
    %p99 = scmp.eq.s32.totalorder %s14, 1
    %p100 = por %p98, %p99
    %p101 = scmp.ne.s32.totalorder %s90, %s91
    %p102 = scmp.eq.s32.totalorder %s14, 0
    %p103 = por %p101, %p102
    %p104 = scmp.ne.s32.totalorder %s90, %s91
    %p105 = scmp.eq.s32.totalorder %s15, 1
    %p106 = por %p104, %p105
    %p108 = scmp.ne.s32.totalorder %s91, %s107
    %p109 = scmp.eq.s32.totalorder %s15, 0
    %p110 = por %p108, %p109
    %p111 = scmp.le.s32.totalorder 1, %s9
    %p112 = scmp.lt.s32.totalorder %s9, 3
    %p113 = pnand %p111, %p112
    %p114 = pneg %p113
    // Predicated region
    $region9: #{_lambda_.9} parent=5 // pred_check
      _
    $region10: #{_lambda_.9} parent=5 // pred_check_branch
      %116 = sbr.rel (%p113) target = $region12
    $region11: #{_lambda_.9} parent=5 // pred_region
      %s117 = ssub.s32 %s9, 1
      // Predicated region
      $region13: #{_lambda_.9} parent=11 // pred_check
        %p118 = pneg %p56
      $region14: #{_lambda_.9} parent=11 // pred_check_branch
        %120 = sbr.rel (%p118) target = $region16
      $region15: #{_lambda_.9} parent=11 // pred_region
        _
      $region16: #{_lambda_.9} parent=11 // pred_fallthru
        _
      // Predicated region
      $region17: #{_lambda_.9} parent=11 // pred_check
        %p121 = pneg %p77
      $region18: #{_lambda_.9} parent=11 // pred_check_branch
        %123 = sbr.rel (%p121) target = $region20
      $region19: #{_lambda_.9} parent=11 // pred_region
        _
      $region20: #{_lambda_.9} parent=11 // pred_fallthru
        _
    $region12: #{_lambda_.9} parent=5 // pred_fallthru
      _
    %p124 = scmp.lt.s32.totalorder %s9, 2
    // Predicated region
    $region21: #{_lambda_.9} parent=5 // pred_check
      %p125 = pneg %p124
    $region22: #{_lambda_.9} parent=5 // pred_check_branch
      %127 = sbr.rel (%p125) target = $region24
    $region23: #{_lambda_.9} parent=5 // pred_region
      // Predicated region
      $region25: #{_lambda_.9} parent=23 // pred_check
        %p128 = pneg %p29
      $region26: #{_lambda_.9} parent=23 // pred_check_branch
        %130 = sbr.rel (%p128) target = $region28
      $region27: #{_lambda_.9} parent=23 // pred_region
        %s131 = smul.u32 32, %s9
        %p132 = scmp.lt.s32.totalorder %s131, 63
        %s133 = scalar_select %p132, %s131, 63
        %s134 = smul.addr %s133, 4
        %s135 = scalar_lea.vmem %s0, %s134
        %s136 = smul.u32 32, %s9
      $region28: #{_lambda_.9} parent=23 // pred_fallthru
        _
    $region24: #{_lambda_.9} parent=5 // pred_fallthru
      _
    %p137 = scmp.le.s32.totalorder 1, %s9
    %p138 = scmp.lt.s32.totalorder %s9, 3
    %p139 = pnand %p137, %p138
    %p140 = pneg %p139
    // Predicated region
    $region29: #{_lambda_.9} parent=5 // pred_check
      _
    $region30: #{_lambda_.9} parent=5 // pred_check_branch
      %142 = sbr.rel (%p139) target = $region32
    $region31: #{_lambda_.9} parent=5 // pred_region
      %s143 = ssub.s32 %s9, 1
      %s144 = smul.u32 32, %s14
      %p145 = scmp.lt.s32.totalorder %s144, 63
      %s146 = scalar_select %p145, %s144, 63
      %s147 = smul.addr %s146, 4
      %s148 = scalar_lea.vmem %s0, %s147
      %p149 = pneg %p35
      %p150 = pneg %p32
      %p151 = pneg %p56
      %p152 = pneg %p53
      %p153 = pneg %p77
      %p154 = pneg %p74
      %p155 = pneg %p103
      %p156 = pneg %p100
      %s157 = smul.u32 32, %s14
      %p158 = scmp.lt.s32.totalorder %s157, 63
      %s159 = scalar_select %p158, %s157, 63
      %s160 = smul.addr %s159, 4
      %s161 = scalar_lea.vmem %s3, %s160
      %s162 = smul.u32 32, %s14
      %p163 = scmp.lt.s32.totalorder %s162, 63
      %s164 = scalar_select %p163, %s162, 63
      %s165 = smul.addr %s164, 4
      %s166 = scalar_lea.vmem %s0, %s165
      %s167 = smul.u32 32, %s14
      %s168 = smul.u32 32, %s14
      %p169 = scmp.lt.s32.totalorder %s168, 63
      %s170 = scalar_select %p169, %s168, 63
      %s171 = smul.addr %s170, 4
      %s172 = scalar_lea.vmem %s3, %s171
      %s173 = smul.u32 32, %s14
      %v175 = vld [vmem:[%s166] sm:$0xf]
      %v176 = vld [vmem:[%s166 + $0x4] sm:$0xf]
      %v177 = vld [vmem:[%s166 + $0x8] sm:$0xf]
      %v178 = vld [vmem:[%s166 + $0xc] sm:$0xf]
      %v179 = vld [vmem:[%s166 + $0x10] sm:$0xf]
      %v180 = vld [vmem:[%s166 + $0x14] sm:$0xf]
      %v181 = vld [vmem:[%s166 + $0x18] sm:$0xf]
      %v182 = vld [vmem:[%s166 + $0x1c] sm:$0xf]
      %v183 = vld [vmem:[%s166 + $0x20] sm:$0xf]
      %v184 = vld [vmem:[%s166 + $0x24] sm:$0xf]
      %v185 = vld [vmem:[%s166 + $0x28] sm:$0xf]
      %v186 = vld [vmem:[%s166 + $0x2c] sm:$0xf]
      %v187 = vld [vmem:[%s166 + $0x30] sm:$0xf]
      %v188 = vld [vmem:[%s166 + $0x34] sm:$0xf]
      %v189 = vld [vmem:[%s166 + $0x38] sm:$0xf]
      %v190 = vld [vmem:[%s166 + $0x3c] sm:$0xf]
      %v191 = vld [vmem:[%s166 + $0x40] sm:$0xf]
      %v192 = vld [vmem:[%s166 + $0x44] sm:$0xf]
      %v193 = vld [vmem:[%s166 + $0x48] sm:$0xf]
      %v194 = vld [vmem:[%s166 + $0x4c] sm:$0xf]
      %v195 = vld [vmem:[%s166 + $0x50] sm:$0xf]
      %v196 = vld [vmem:[%s166 + $0x54] sm:$0xf]
      %v197 = vld [vmem:[%s166 + $0x58] sm:$0xf]
      %v198 = vld [vmem:[%s166 + $0x5c] sm:$0xf]
      %v199 = vld [vmem:[%s166 + $0x60] sm:$0xf]
      %v200 = vld [vmem:[%s166 + $0x64] sm:$0xf]
      %v201 = vld [vmem:[%s166 + $0x68] sm:$0xf]
      %v202 = vld [vmem:[%s166 + $0x6c] sm:$0xf]
      %v203 = vld [vmem:[%s166 + $0x70] sm:$0xf]
      %v204 = vld [vmem:[%s166 + $0x74] sm:$0xf]
      %v205 = vld [vmem:[%s166 + $0x78] sm:$0xf]
      %v206 = vld [vmem:[%s166 + $0x7c] sm:$0xf]
      %v207 = vld [vmem:[%s1] sm:$0xf]
      %v208 = vld [vmem:[%s1 + $0x4] sm:$0xf]
      %v209 = vld [vmem:[%s1 + $0x8] sm:$0xf]
      %v210 = vld [vmem:[%s1 + $0xc] sm:$0xf]
      %v211 = vld [vmem:[%s1 + $0x10] sm:$0xf]
      %v212 = vld [vmem:[%s1 + $0x14] sm:$0xf]
      %v213 = vld [vmem:[%s1 + $0x18] sm:$0xf]
      %v214 = vld [vmem:[%s1 + $0x1c] sm:$0xf]
      %v215 = vld [vmem:[%s1 + $0x20] sm:$0xf]
      %v216 = vld [vmem:[%s1 + $0x24] sm:$0xf]
      %v217 = vld [vmem:[%s1 + $0x28] sm:$0xf]
      %v218 = vld [vmem:[%s1 + $0x2c] sm:$0xf]
      %v219 = vld [vmem:[%s1 + $0x30] sm:$0xf]
      %v220 = vld [vmem:[%s1 + $0x34] sm:$0xf]
      %v221 = vld [vmem:[%s1 + $0x38] sm:$0xf]
      %v222 = vld [vmem:[%s1 + $0x3c] sm:$0xf]
      %v223 = vld [vmem:[%s2] sm:$0x1]
      %v225 = vlaneseq
      %v226 = vshrl.u32 %v225, 7
      %v227 = vsub.s32 0, %v226
      %v228 = vrot.slane %v223, %v227
      %v262 = vunpack.c.l.b16 %v175
      %v263 = vunpack.c.l.b16 %v176
      %v264 = vunpack.c.l.b16 %v177
      %v265 = vunpack.c.l.b16 %v178
      %v266 = vunpack.c.l.b16 %v179
      %v267 = vunpack.c.l.b16 %v180
      %v268 = vunpack.c.l.b16 %v181
      %v269 = vunpack.c.l.b16 %v182
      %v270 = vunpack.c.l.b16 %v183
      %v271 = vunpack.c.l.b16 %v184
      %v272 = vunpack.c.l.b16 %v185
      %v273 = vunpack.c.l.b16 %v186
      %v274 = vunpack.c.l.b16 %v187
      %v275 = vunpack.c.l.b16 %v188
      %v276 = vunpack.c.l.b16 %v189
      %v277 = vunpack.c.l.b16 %v190
      %v278 = vunpack.c.l.b16 %v191
      %v279 = vunpack.c.l.b16 %v192
      %v280 = vunpack.c.l.b16 %v193
      %v281 = vunpack.c.l.b16 %v194
      %v282 = vunpack.c.l.b16 %v195
      %v283 = vunpack.c.l.b16 %v196
      %v284 = vunpack.c.l.b16 %v197
      %v285 = vunpack.c.l.b16 %v198
      %v286 = vunpack.c.l.b16 %v199
      %v287 = vunpack.c.l.b16 %v200
      %v288 = vunpack.c.l.b16 %v201
      %v289 = vunpack.c.l.b16 %v202
      %v290 = vunpack.c.l.b16 %v203
      %v291 = vunpack.c.l.b16 %v204
      %v292 = vunpack.c.l.b16 %v205
      %v293 = vunpack.c.l.b16 %v206
      %v294 = vpack.c.b16 %v263, %v262
      %v295 = vpack.c.b16 %v265, %v264
      %v296 = vpack.c.b16 %v267, %v266
      %v297 = vpack.c.b16 %v269, %v268
      %v298 = vpack.c.b16 %v271, %v270
      %v299 = vpack.c.b16 %v273, %v272
      %v300 = vpack.c.b16 %v275, %v274
      %v301 = vpack.c.b16 %v277, %v276
      %v302 = vpack.c.b16 %v279, %v278
      %v303 = vpack.c.b16 %v281, %v280
      %v304 = vpack.c.b16 %v283, %v282
      %v305 = vpack.c.b16 %v285, %v284
      %v306 = vpack.c.b16 %v287, %v286
      %v307 = vpack.c.b16 %v289, %v288
      %v308 = vpack.c.b16 %v291, %v290
      %v309 = vpack.c.b16 %v293, %v292
      %v342 = vunpack.c.l.b16 %v207
      %v343 = vunpack.c.l.b16 %v208
      %v344 = vunpack.c.l.b16 %v209
      %v345 = vunpack.c.l.b16 %v210
      %v346 = vunpack.c.l.b16 %v211
      %v347 = vunpack.c.l.b16 %v212
      %v348 = vunpack.c.l.b16 %v213
      %v349 = vunpack.c.l.b16 %v214
      %v350 = vunpack.c.l.b16 %v215
      %v351 = vunpack.c.l.b16 %v216
      %v352 = vunpack.c.l.b16 %v217
      %v353 = vunpack.c.l.b16 %v218
      %v354 = vunpack.c.l.b16 %v219
      %v355 = vunpack.c.l.b16 %v220
      %v356 = vunpack.c.l.b16 %v221
      %v357 = vunpack.c.l.b16 %v222
      %v358 = vpack.c.b16 %v343, %v342
      %v359 = vpack.c.b16 %v345, %v344
      %v360 = vpack.c.b16 %v347, %v346
      %v361 = vpack.c.b16 %v349, %v348
      %v362 = vpack.c.b16 %v351, %v350
      %v363 = vpack.c.b16 %v353, %v352
      %v364 = vpack.c.b16 %v355, %v354
      %v365 = vpack.c.b16 %v357, %v356
      %374 = vmatprep.subr.bf16.mxu0 0
      %375 = vmatpush1.bf16.msra.mxu0 %v365
      %376 = vmatprep.subr.bf16.mxu0 0
      %377 = vmatpush1.bf16.msra.mxu0 %v364
      %378 = vmatprep.subr.bf16.mxu0 0
      %379 = vmatpush1.bf16.msra.mxu0 %v363
      %380 = vmatprep.subr.bf16.mxu0 0
      %381 = vmatpush1.bf16.msra.mxu0 %v362
      %382 = vmatprep.subr.bf16.mxu0 0
      %383 = vmatpush1.bf16.msra.mxu0 %v361
      %384 = vmatprep.subr.bf16.mxu0 0
      %385 = vmatpush1.bf16.msra.mxu0 %v360
      %386 = vmatprep.subr.bf16.mxu0 0
      %387 = vmatpush1.bf16.msra.mxu0 %v359
      %388 = vmatprep.subr.bf16.mxu0 0
      %389 = vmatpush1.bf16.msra.mxu0 %v358
      %390 = vmatprep.subr.bf16.mxu0 0
      %391 = vmatpush2.bf16.msra.mxu0 0
      %392 = vmatprep.subr.bf16.mxu0 0
      %393 = vmatpush2.bf16.msra.mxu0 0
      %394 = vmatprep.subr.bf16.mxu0 0
      %395 = vmatpush2.bf16.msra.mxu0 0
      %396 = vmatprep.subr.bf16.mxu0 0
      %397 = vmatpush2.bf16.msra.mxu0 0
      %398 = vmatprep.subr.bf16.mxu0 0
      %399 = vmatpush2.bf16.msra.mxu0 0
      %400 = vmatprep.subr.bf16.mxu0 0
      %401 = vmatpush2.bf16.msra.mxu0 0
      %402 = vmatprep.subr.bf16.mxu0 0
      %403 = vmatpush2.bf16.msra.mxu0 0
      %404 = vmatprep.subr.bf16.mxu0 0
      %405 = vmatpush2.bf16.msra.mxu0 0
      %406 = vmatprep.mubr.bf16.mxu0 0
      %407 = vmatmul.mubr.bf16.gmra.mxu0 %v294
      %v408 = vpop.f32.mrf.mxu0
      %v409 = vadd.f32 %v228, %v408
      %v410 = vpop.f32.mrf.mxu0
      %v411 = vpop.f32.mrf.mxu0
      %v412 = vadd.f32 %v228, %v411
      %v413 = vpop.f32.mrf.mxu0
      %414 = vmatprep.mubr.bf16.mxu0 0
      %415 = vmatmul.mubr.bf16.gmra.mxu0 %v295
      %v416 = vpop.f32.mrf.mxu0
      %v417 = vadd.f32 %v228, %v416
      %v418 = vpop.f32.mrf.mxu0
      %v419 = vpop.f32.mrf.mxu0
      %v420 = vadd.f32 %v228, %v419
      %v421 = vpop.f32.mrf.mxu0
      %422 = vmatprep.mubr.bf16.mxu0 0
      %423 = vmatmul.mubr.bf16.gmra.mxu0 %v296
      %v424 = vpop.f32.mrf.mxu0
      %v425 = vadd.f32 %v228, %v424
      %v426 = vpop.f32.mrf.mxu0
      %v427 = vpop.f32.mrf.mxu0
      %v428 = vadd.f32 %v228, %v427
      %v429 = vpop.f32.mrf.mxu0
      %430 = vmatprep.mubr.bf16.mxu0 0
      %431 = vmatmul.mubr.bf16.gmra.mxu0 %v297
      %v432 = vpop.f32.mrf.mxu0
      %v433 = vadd.f32 %v228, %v432
      %v434 = vpop.f32.mrf.mxu0
      %v435 = vpop.f32.mrf.mxu0
      %v436 = vadd.f32 %v228, %v435
      %v437 = vpop.f32.mrf.mxu0
      %438 = vmatprep.mubr.bf16.mxu0 0
      %439 = vmatmul.mubr.bf16.gmra.mxu0 %v298
      %v440 = vpop.f32.mrf.mxu0
      %v441 = vadd.f32 %v228, %v440
      %v442 = vpop.f32.mrf.mxu0
      %v443 = vpop.f32.mrf.mxu0
      %v444 = vadd.f32 %v228, %v443
      %v445 = vpop.f32.mrf.mxu0
      %446 = vmatprep.mubr.bf16.mxu0 0
      %447 = vmatmul.mubr.bf16.gmra.mxu0 %v299
      %v448 = vpop.f32.mrf.mxu0
      %v449 = vadd.f32 %v228, %v448
      %v450 = vpop.f32.mrf.mxu0
      %v451 = vpop.f32.mrf.mxu0
      %v452 = vadd.f32 %v228, %v451
      %v453 = vpop.f32.mrf.mxu0
      %454 = vmatprep.mubr.bf16.mxu0 0
      %455 = vmatmul.mubr.bf16.gmra.mxu0 %v300
      %v456 = vpop.f32.mrf.mxu0
      %v457 = vadd.f32 %v228, %v456
      %v458 = vpop.f32.mrf.mxu0
      %v459 = vpop.f32.mrf.mxu0
      %v460 = vadd.f32 %v228, %v459
      %v461 = vpop.f32.mrf.mxu0
      %462 = vmatprep.mubr.bf16.mxu0 0
      %463 = vmatmul.mubr.bf16.gmra.mxu0 %v301
      %v464 = vpop.f32.mrf.mxu0
      %v465 = vadd.f32 %v228, %v464
      %v466 = vpop.f32.mrf.mxu0
      %v467 = vpop.f32.mrf.mxu0
      %v468 = vadd.f32 %v228, %v467
      %v469 = vpop.f32.mrf.mxu0
      %470 = vmatprep.mubr.bf16.mxu0 0
      %471 = vmatmul.mubr.bf16.gmra.mxu0 %v302
      %v472 = vpop.f32.mrf.mxu0
      %v473 = vadd.f32 %v228, %v472
      %v474 = vpop.f32.mrf.mxu0
      %v475 = vpop.f32.mrf.mxu0
      %v476 = vadd.f32 %v228, %v475
      %v477 = vpop.f32.mrf.mxu0
      %478 = vmatprep.mubr.bf16.mxu0 0
      %479 = vmatmul.mubr.bf16.gmra.mxu0 %v303
      %v480 = vpop.f32.mrf.mxu0
      %v481 = vadd.f32 %v228, %v480
      %v482 = vpop.f32.mrf.mxu0
      %v483 = vpop.f32.mrf.mxu0
      %v484 = vadd.f32 %v228, %v483
      %v485 = vpop.f32.mrf.mxu0
      %486 = vmatprep.mubr.bf16.mxu0 0
      %487 = vmatmul.mubr.bf16.gmra.mxu0 %v304
      %v488 = vpop.f32.mrf.mxu0
      %v489 = vadd.f32 %v228, %v488
      %v490 = vpop.f32.mrf.mxu0
      %v491 = vpop.f32.mrf.mxu0
      %v492 = vadd.f32 %v228, %v491
      %v493 = vpop.f32.mrf.mxu0
      %494 = vmatprep.mubr.bf16.mxu0 0
      %495 = vmatmul.mubr.bf16.gmra.mxu0 %v305
      %v496 = vpop.f32.mrf.mxu0
      %v497 = vadd.f32 %v228, %v496
      %v498 = vpop.f32.mrf.mxu0
      %v499 = vpop.f32.mrf.mxu0
      %v500 = vadd.f32 %v228, %v499
      %v501 = vpop.f32.mrf.mxu0
      %502 = vmatprep.mubr.bf16.mxu0 0
      %503 = vmatmul.mubr.bf16.gmra.mxu0 %v306
      %v504 = vpop.f32.mrf.mxu0
      %v505 = vadd.f32 %v228, %v504
      %v506 = vpop.f32.mrf.mxu0
      %v507 = vpop.f32.mrf.mxu0
      %v508 = vadd.f32 %v228, %v507
      %v509 = vpop.f32.mrf.mxu0
      %510 = vmatprep.mubr.bf16.mxu0 0
      %511 = vmatmul.mubr.bf16.gmra.mxu0 %v307
      %v512 = vpop.f32.mrf.mxu0
      %v513 = vadd.f32 %v228, %v512
      %v514 = vpop.f32.mrf.mxu0
      %v515 = vpop.f32.mrf.mxu0
      %v516 = vadd.f32 %v228, %v515
      %v517 = vpop.f32.mrf.mxu0
      %518 = vmatprep.mubr.bf16.mxu0 0
      %519 = vmatmul.mubr.bf16.gmra.mxu0 %v308
      %v520 = vpop.f32.mrf.mxu0
      %v521 = vadd.f32 %v228, %v520
      %v522 = vpop.f32.mrf.mxu0
      %v523 = vpop.f32.mrf.mxu0
      %v524 = vadd.f32 %v228, %v523
      %v525 = vpop.f32.mrf.mxu0
      %526 = vmatprep.mubr.bf16.mxu0 0
      %527 = vmatmul.mubr.bf16.gmra.mxu0 %v309
      %v528 = vpop.f32.mrf.mxu0
      %v529 = vadd.f32 %v228, %v528
      %v530 = vpop.f32.mrf.mxu0
      %v531 = vpop.f32.mrf.mxu0
      %v532 = vadd.f32 %v228, %v531
      %v533 = vpop.f32.mrf.mxu0
      %534 = vdwg.mxu0
      %v535 = vmax.f32 %v409, 0.0
      %v536 = vmax.f32 %v412, 0.0
      %v537 = vmax.f32 %v417, 0.0
      %v538 = vmax.f32 %v420, 0.0
      %v539 = vmax.f32 %v425, 0.0
      %v540 = vmax.f32 %v428, 0.0
      %v541 = vmax.f32 %v433, 0.0
      %v542 = vmax.f32 %v436, 0.0
      %v543 = vmax.f32 %v441, 0.0
      %v544 = vmax.f32 %v444, 0.0
      %v545 = vmax.f32 %v449, 0.0
      %v546 = vmax.f32 %v452, 0.0
      %v547 = vmax.f32 %v457, 0.0
      %v548 = vmax.f32 %v460, 0.0
      %v549 = vmax.f32 %v465, 0.0
      %v550 = vmax.f32 %v468, 0.0
      %v551 = vmax.f32 %v473, 0.0
      %v552 = vmax.f32 %v476, 0.0
      %v553 = vmax.f32 %v481, 0.0
      %v554 = vmax.f32 %v484, 0.0
      %v555 = vmax.f32 %v489, 0.0
      %v556 = vmax.f32 %v492, 0.0
      %v557 = vmax.f32 %v497, 0.0
      %v558 = vmax.f32 %v500, 0.0
      %v559 = vmax.f32 %v505, 0.0
      %v560 = vmax.f32 %v508, 0.0
      %v561 = vmax.f32 %v513, 0.0
      %v562 = vmax.f32 %v516, 0.0
      %v563 = vmax.f32 %v521, 0.0
      %v564 = vmax.f32 %v524, 0.0
      %v565 = vmax.f32 %v529, 0.0
      %v566 = vmax.f32 %v532, 0.0
      %v567 = vpack.c.bf16 %v536, %v535
      %v568 = vpack.c.bf16 %v538, %v537
      %v569 = vpack.c.bf16 %v540, %v539
      %v570 = vpack.c.bf16 %v542, %v541
      %v571 = vpack.c.bf16 %v544, %v543
      %v572 = vpack.c.bf16 %v546, %v545
      %v573 = vpack.c.bf16 %v548, %v547
      %v574 = vpack.c.bf16 %v550, %v549
      %v575 = vpack.c.bf16 %v552, %v551
      %v576 = vpack.c.bf16 %v554, %v553
      %v577 = vpack.c.bf16 %v556, %v555
      %v578 = vpack.c.bf16 %v558, %v557
      %v579 = vpack.c.bf16 %v560, %v559
      %v580 = vpack.c.bf16 %v562, %v561
      %v581 = vpack.c.bf16 %v564, %v563
      %v582 = vpack.c.bf16 %v566, %v565
      %v599 = vunpack.c.l.b16 %v567
      %v600 = vunpack.c.h.b16 %v567
      %v601 = vunpack.c.l.b16 %v568
      %v602 = vunpack.c.h.b16 %v568
      %v603 = vunpack.c.l.b16 %v569
      %v604 = vunpack.c.h.b16 %v569
      %v605 = vunpack.c.l.b16 %v570
      %v606 = vunpack.c.h.b16 %v570
      %v607 = vunpack.c.l.b16 %v571
      %v608 = vunpack.c.h.b16 %v571
      %v609 = vunpack.c.l.b16 %v572
      %v610 = vunpack.c.h.b16 %v572
      %v611 = vunpack.c.l.b16 %v573
      %v612 = vunpack.c.h.b16 %v573
      %v613 = vunpack.c.l.b16 %v574
      %v614 = vunpack.c.h.b16 %v574
      %v615 = vunpack.c.l.b16 %v575
      %v616 = vunpack.c.h.b16 %v575
      %v617 = vunpack.c.l.b16 %v576
      %v618 = vunpack.c.h.b16 %v576
      %v619 = vunpack.c.l.b16 %v577
      %v620 = vunpack.c.h.b16 %v577
      %v621 = vunpack.c.l.b16 %v578
      %v622 = vunpack.c.h.b16 %v578
      %v623 = vunpack.c.l.b16 %v579
      %v624 = vunpack.c.h.b16 %v579
      %v625 = vunpack.c.l.b16 %v580
      %v626 = vunpack.c.h.b16 %v580
      %v627 = vunpack.c.l.b16 %v581
      %v628 = vunpack.c.h.b16 %v581
      %v629 = vunpack.c.l.b16 %v582
      %v630 = vunpack.c.h.b16 %v582
      %v631 = vpack.c.b16 %v599, %v599
      %v632 = vpack.c.b16 %v600, %v600
      %v633 = vpack.c.b16 %v601, %v601
      %v634 = vpack.c.b16 %v602, %v602
      %v635 = vpack.c.b16 %v603, %v603
      %v636 = vpack.c.b16 %v604, %v604
      %v637 = vpack.c.b16 %v605, %v605
      %v638 = vpack.c.b16 %v606, %v606
      %v639 = vpack.c.b16 %v607, %v607
      %v640 = vpack.c.b16 %v608, %v608
      %v641 = vpack.c.b16 %v609, %v609
      %v642 = vpack.c.b16 %v610, %v610
      %v643 = vpack.c.b16 %v611, %v611
      %v644 = vpack.c.b16 %v612, %v612
      %v645 = vpack.c.b16 %v613, %v613
      %v646 = vpack.c.b16 %v614, %v614
      %v647 = vpack.c.b16 %v615, %v615
      %v648 = vpack.c.b16 %v616, %v616
      %v649 = vpack.c.b16 %v617, %v617
      %v650 = vpack.c.b16 %v618, %v618
      %v651 = vpack.c.b16 %v619, %v619
      %v652 = vpack.c.b16 %v620, %v620
      %v653 = vpack.c.b16 %v621, %v621
      %v654 = vpack.c.b16 %v622, %v622
      %v655 = vpack.c.b16 %v623, %v623
      %v656 = vpack.c.b16 %v624, %v624
      %v657 = vpack.c.b16 %v625, %v625
      %v658 = vpack.c.b16 %v626, %v626
      %v659 = vpack.c.b16 %v627, %v627
      %v660 = vpack.c.b16 %v628, %v628
      %v661 = vpack.c.b16 %v629, %v629
      %v662 = vpack.c.b16 %v630, %v630
      %695 = vst [vmem:[%s172] sm:$0xf] %v631
      %696 = vst [vmem:[%s172 + $0x4] sm:$0xf] %v632
      %697 = vst [vmem:[%s172 + $0x8] sm:$0xf] %v633
      %698 = vst [vmem:[%s172 + $0xc] sm:$0xf] %v634
      %699 = vst [vmem:[%s172 + $0x10] sm:$0xf] %v635
      %700 = vst [vmem:[%s172 + $0x14] sm:$0xf] %v636
      %701 = vst [vmem:[%s172 + $0x18] sm:$0xf] %v637
      %702 = vst [vmem:[%s172 + $0x1c] sm:$0xf] %v638
      %703 = vst [vmem:[%s172 + $0x20] sm:$0xf] %v639
      %704 = vst [vmem:[%s172 + $0x24] sm:$0xf] %v640
      %705 = vst [vmem:[%s172 + $0x28] sm:$0xf] %v641
      %706 = vst [vmem:[%s172 + $0x2c] sm:$0xf] %v642
      %707 = vst [vmem:[%s172 + $0x30] sm:$0xf] %v643
      %708 = vst [vmem:[%s172 + $0x34] sm:$0xf] %v644
      %709 = vst [vmem:[%s172 + $0x38] sm:$0xf] %v645
      %710 = vst [vmem:[%s172 + $0x3c] sm:$0xf] %v646
      %711 = vst [vmem:[%s172 + $0x40] sm:$0xf] %v647
      %712 = vst [vmem:[%s172 + $0x44] sm:$0xf] %v648
      %713 = vst [vmem:[%s172 + $0x48] sm:$0xf] %v649
      %714 = vst [vmem:[%s172 + $0x4c] sm:$0xf] %v650
      %715 = vst [vmem:[%s172 + $0x50] sm:$0xf] %v651
      %716 = vst [vmem:[%s172 + $0x54] sm:$0xf] %v652
      %717 = vst [vmem:[%s172 + $0x58] sm:$0xf] %v653
      %718 = vst [vmem:[%s172 + $0x5c] sm:$0xf] %v654
      %719 = vst [vmem:[%s172 + $0x60] sm:$0xf] %v655
      %720 = vst [vmem:[%s172 + $0x64] sm:$0xf] %v656
      %721 = vst [vmem:[%s172 + $0x68] sm:$0xf] %v657
      %722 = vst [vmem:[%s172 + $0x6c] sm:$0xf] %v658
      %723 = vst [vmem:[%s172 + $0x70] sm:$0xf] %v659
      %724 = vst [vmem:[%s172 + $0x74] sm:$0xf] %v660
      %725 = vst [vmem:[%s172 + $0x78] sm:$0xf] %v661
      %726 = vst [vmem:[%s172 + $0x7c] sm:$0xf] %v662
      %s727 = smul.u32 32, %s14
      %p728 = scmp.lt.s32.totalorder %s727, 63
      %s729 = scalar_select %p728, %s727, 63
      %s730 = smul.addr %s729, 4
      %s731 = scalar_lea.vmem %s3, %s730
      // Predicated region
      $region33: #{_lambda_.9} parent=31 // pred_check
        %p732 = pneg %p100
      $region34: #{_lambda_.9} parent=31 // pred_check_branch
        %734 = sbr.rel (%p732) target = $region36
      $region35: #{_lambda_.9} parent=31 // pred_region
        %s735 = smul.u32 32, %s14
      $region36: #{_lambda_.9} parent=31 // pred_fallthru
        _
    $region32: #{_lambda_.9} parent=5 // pred_fallthru
      _
    %p736 = scmp.le.s32.totalorder 2, %s9
    // Predicated region
    $region37: #{_lambda_.9} parent=5 // pred_check
      %p737 = pneg %p736
    $region38: #{_lambda_.9} parent=5 // pred_check_branch
      %739 = sbr.rel (%p737) target = $region40
    $region39: #{_lambda_.9} parent=5 // pred_region
      %s740 = ssub.s32 %s9, 2
      // Predicated region
      $region41: #{_lambda_.9} parent=39 // pred_check
        %p741 = pneg %p106
      $region42: #{_lambda_.9} parent=39 // pred_check_branch
        %743 = sbr.rel (%p741) target = $region44
      $region43: #{_lambda_.9} parent=39 // pred_region
        %s744 = smul.u32 32, %s15
        %p745 = scmp.lt.s32.totalorder %s744, 63
        %s746 = scalar_select %p745, %s744, 63
        %s747 = smul.addr %s746, 4
        %s748 = scalar_lea.vmem %s3, %s747
      $region44: #{_lambda_.9} parent=39 // pred_fallthru
        _
    $region40: #{_lambda_.9} parent=5 // pred_fallthru
      _
  $region6: #{_lambda_.9} parent=0 // loop_footer
    %s13 = sadd.s32 1, %s9
  $region7: #{_lambda_.9} parent=0 // loop_footer_branch
    %8 = sbr.rel target = $region3
  $region8: #{_lambda_.9} parent=0 // loop_exit
    _

// kernel: _lambda_.10
$region0: #{_lambda_.10}
  #allocation0 [shape = 'u32[]', space=smem, size = 0x4, offset = 0x4, fixed_abs, tag = 'smem constant byte address 0x4 - core index']
  #allocation1 [shape = 'u32[144,128]{1,0:T(1,128)}', space=vmem, size = 0x12000, scoped, tag = 'internal scratch']
  %s0 = inlined_call_operand.vmem [shape: bf16[128,128], index: 0, kind: input, shape index: {}]
  %s1 = inlined_call_operand.vmem [shape: bf16[128,128], index: 1, kind: input, shape index: {}]
  %s2 = inlined_call_operand.vmem [shape: f32[1,128], index: 2, kind: input, shape index: {}]
  %s3 = inlined_call_operand.vmem [shape: bf16[128,128], index: 3, kind: output, shape index: {}]
  %s4 = sld [smem:[#allocation0]]
  $region45: #{_lambda_.10} parent=0
    _
  %s6 = ssub.s32 1, %s4
  %s7 = scalar_select 0, %s6, %s4
  loop: start=0, step=1, limit=4
  $region2: #{_lambda_.10} parent=0 // loop_pre_header
    _
  $region3: #{_lambda_.10} parent=0 // loop_header
    %s9 = sphi 0, %s13
    %p10 = scmp.ge.s32.totalorder %s9, 4
    %s19 = sphi 0, %s21
    %s22 = sphi 0, %s19
    %s23 = sphi 0, %s22
    %s39 = sphi 0, %s23
    %s43 = sphi 0, %s43
    %s45 = sphi 0, %s43
    %s46 = sphi 0, %s45
    %s60 = sphi 0, %s46
    %s64 = sphi 0, %s64
    %s66 = sphi 0, %s64
    %s67 = sphi 0, %s66
    %s81 = sphi 0, %s67
    %s87 = sphi 0, %s89
    %s90 = sphi 0, %s87
    %s91 = sphi 0, %s90
    %s107 = sphi 0, %s91
  $region4: #{_lambda_.10} parent=0 // loop_header_branch
    %12 = sbr.rel (%p10) target = $region8
  $region5: #{_lambda_.10} parent=0 // loop_body
    %s14 = ssub.s32 %s9, 1
    %s15 = ssub.s32 %s9, 2
    %s16 = sadd.s32 %s9, 1
    %s17 = ssub.s32 %s9, %s16
    %p18 = scmp.eq.s32.totalorder %s17, 0
    %s20 = sadd.s32 %s19, 1
    %s21 = scalar_select %p18, %s19, %s20
    %p24 = pneg %p18
    %p25 = scmp.eq.s32.totalorder %s9, 1
    %p26 = por %p24, %p25
    %p27 = scmp.ne.s32.totalorder %s19, %s22
    %p28 = scmp.eq.s32.totalorder %s9, 0
    %p29 = por %p27, %p28
    %p30 = scmp.ne.s32.totalorder %s19, %s22
    %p31 = scmp.eq.s32.totalorder %s14, 1
    %p32 = por %p30, %p31
    %p33 = scmp.ne.s32.totalorder %s22, %s23
    %p34 = scmp.eq.s32.totalorder %s14, 0
    %p35 = por %p33, %p34
    %p36 = scmp.ne.s32.totalorder %s22, %s23
    %p37 = scmp.eq.s32.totalorder %s15, 1
    %p38 = por %p36, %p37
    %p40 = scmp.ne.s32.totalorder %s23, %s39
    %p41 = scmp.eq.s32.totalorder %s15, 0
    %p42 = por %p40, %p41
    %s44 = sadd.s32 %s43, 1
    %p47 = scmp.eq.s32.totalorder %s9, 1
    %p48 = scmp.ne.s32.totalorder %s43, %s45
    %p49 = scmp.eq.s32.totalorder %s9, 0
    %p50 = por %p48, %p49
    %p51 = scmp.ne.s32.totalorder %s43, %s45
    %p52 = scmp.eq.s32.totalorder %s14, 1
    %p53 = por %p51, %p52
    %p54 = scmp.ne.s32.totalorder %s45, %s46
    %p55 = scmp.eq.s32.totalorder %s14, 0
    %p56 = por %p54, %p55
    %p57 = scmp.ne.s32.totalorder %s45, %s46
    %p58 = scmp.eq.s32.totalorder %s15, 1
    %p59 = por %p57, %p58
    %p61 = scmp.ne.s32.totalorder %s46, %s60
    %p62 = scmp.eq.s32.totalorder %s15, 0
    %p63 = por %p61, %p62
    %s65 = sadd.s32 %s64, 1
    %p68 = scmp.eq.s32.totalorder %s9, 1
    %p69 = scmp.ne.s32.totalorder %s64, %s66
    %p70 = scmp.eq.s32.totalorder %s9, 0
    %p71 = por %p69, %p70
    %p72 = scmp.ne.s32.totalorder %s64, %s66
    %p73 = scmp.eq.s32.totalorder %s14, 1
    %p74 = por %p72, %p73
    %p75 = scmp.ne.s32.totalorder %s66, %s67
    %p76 = scmp.eq.s32.totalorder %s14, 0
    %p77 = por %p75, %p76
    %p78 = scmp.ne.s32.totalorder %s66, %s67
    %p79 = scmp.eq.s32.totalorder %s15, 1
    %p80 = por %p78, %p79
    %p82 = scmp.ne.s32.totalorder %s67, %s81
    %p83 = scmp.eq.s32.totalorder %s15, 0
    %p84 = por %p82, %p83
    %s85 = ssub.s32 %s9, %s16
    %p86 = scmp.eq.s32.totalorder %s85, 0
    %s88 = sadd.s32 %s87, 1
    %s89 = scalar_select %p86, %s87, %s88
    %p92 = pneg %p86
    %p93 = scmp.eq.s32.totalorder %s9, 1
    %p94 = por %p92, %p93
    %p95 = scmp.ne.s32.totalorder %s87, %s90
    %p96 = scmp.eq.s32.totalorder %s9, 0
    %p97 = por %p95, %p96
    %p98 = scmp.ne.s32.totalorder %s87, %s90
    %p99 = scmp.eq.s32.totalorder %s14, 1
    %p100 = por %p98, %p99
    %p101 = scmp.ne.s32.totalorder %s90, %s91
    %p102 = scmp.eq.s32.totalorder %s14, 0
    %p103 = por %p101, %p102
    %p104 = scmp.ne.s32.totalorder %s90, %s91
    %p105 = scmp.eq.s32.totalorder %s15, 1
    %p106 = por %p104, %p105
    %p108 = scmp.ne.s32.totalorder %s91, %s107
    %p109 = scmp.eq.s32.totalorder %s15, 0
    %p110 = por %p108, %p109
    %p111 = scmp.le.s32.totalorder 1, %s9
    %p112 = scmp.lt.s32.totalorder %s9, 3
    %p113 = pnand %p111, %p112
    %p114 = pneg %p113
    // Predicated region
    $region9: #{_lambda_.10} parent=5 // pred_check
      _
    $region10: #{_lambda_.10} parent=5 // pred_check_branch
      %116 = sbr.rel (%p113) target = $region12
    $region11: #{_lambda_.10} parent=5 // pred_region
      %s117 = ssub.s32 %s9, 1
      // Predicated region
      $region13: #{_lambda_.10} parent=11 // pred_check
        %p118 = pneg %p56
      $region14: #{_lambda_.10} parent=11 // pred_check_branch
        %120 = sbr.rel (%p118) target = $region16
      $region15: #{_lambda_.10} parent=11 // pred_region
        _
      $region16: #{_lambda_.10} parent=11 // pred_fallthru
        _
      // Predicated region
      $region17: #{_lambda_.10} parent=11 // pred_check
        %p121 = pneg %p77
      $region18: #{_lambda_.10} parent=11 // pred_check_branch
        %123 = sbr.rel (%p121) target = $region20
      $region19: #{_lambda_.10} parent=11 // pred_region
        _
      $region20: #{_lambda_.10} parent=11 // pred_fallthru
        _
    $region12: #{_lambda_.10} parent=5 // pred_fallthru
      _
    %p124 = scmp.lt.s32.totalorder %s9, 2
    // Predicated region
    $region21: #{_lambda_.10} parent=5 // pred_check
      %p125 = pneg %p124
    $region22: #{_lambda_.10} parent=5 // pred_check_branch
      %127 = sbr.rel (%p125) target = $region24
    $region23: #{_lambda_.10} parent=5 // pred_region
      // Predicated region
      $region25: #{_lambda_.10} parent=23 // pred_check
        %p128 = pneg %p29
      $region26: #{_lambda_.10} parent=23 // pred_check_branch
        %130 = sbr.rel (%p128) target = $region28
      $region27: #{_lambda_.10} parent=23 // pred_region
        %s131 = smul.u32 8, %s9
        %p132 = scmp.lt.s32.totalorder %s131, 15
        %s133 = scalar_select %p132, %s131, 15
        %s134 = smul.addr %s133, 4
        %s135 = scalar_lea.vmem %s0, %s134
        %s136 = smul.u32 8, %s9
      $region28: #{_lambda_.10} parent=23 // pred_fallthru
        _
    $region24: #{_lambda_.10} parent=5 // pred_fallthru
      _
    %p137 = scmp.le.s32.totalorder 1, %s9
    %p138 = scmp.lt.s32.totalorder %s9, 3
    %p139 = pnand %p137, %p138
    %p140 = pneg %p139
    // Predicated region
    $region29: #{_lambda_.10} parent=5 // pred_check
      _
    $region30: #{_lambda_.10} parent=5 // pred_check_branch
      %142 = sbr.rel (%p139) target = $region32
    $region31: #{_lambda_.10} parent=5 // pred_region
      %s143 = ssub.s32 %s9, 1
      %s144 = smul.u32 8, %s14
      %p145 = scmp.lt.s32.totalorder %s144, 15
      %s146 = scalar_select %p145, %s144, 15
      %s147 = smul.addr %s146, 4
      %s148 = scalar_lea.vmem %s0, %s147
      %p149 = pneg %p35
      %p150 = pneg %p32
      %p151 = pneg %p56
      %p152 = pneg %p53
      %p153 = pneg %p77
      %p154 = pneg %p74
      %p155 = pneg %p103
      %p156 = pneg %p100
      %s157 = smul.u32 8, %s14
      %p158 = scmp.lt.s32.totalorder %s157, 15
      %s159 = scalar_select %p158, %s157, 15
      %s160 = smul.addr %s159, 4
      %s161 = scalar_lea.vmem %s3, %s160
      %s162 = smul.u32 8, %s14
      %p163 = scmp.lt.s32.totalorder %s162, 15
      %s164 = scalar_select %p163, %s162, 15
      %s165 = smul.addr %s164, 4
      %s166 = scalar_lea.vmem %s0, %s165
      %s167 = smul.u32 8, %s14
      %s168 = smul.u32 8, %s14
      %p169 = scmp.lt.s32.totalorder %s168, 15
      %s170 = scalar_select %p169, %s168, 15
      %s171 = smul.addr %s170, 4
      %s172 = scalar_lea.vmem %s3, %s171
      %s173 = smul.u32 8, %s14
      %v175 = vld [vmem:[%s166] sm:$0xf]
      %v176 = vld [vmem:[%s166 + $0x4] sm:$0xf]
      %v177 = vld [vmem:[%s166 + $0x8] sm:$0xf]
      %v178 = vld [vmem:[%s166 + $0xc] sm:$0xf]
      %v179 = vld [vmem:[%s166 + $0x10] sm:$0xf]
      %v180 = vld [vmem:[%s166 + $0x14] sm:$0xf]
      %v181 = vld [vmem:[%s166 + $0x18] sm:$0xf]
      %v182 = vld [vmem:[%s166 + $0x1c] sm:$0xf]
      %v183 = vld [vmem:[%s1] sm:$0xf]
      %v184 = vld [vmem:[%s1 + $0x4] sm:$0xf]
      %v185 = vld [vmem:[%s1 + $0x8] sm:$0xf]
      %v186 = vld [vmem:[%s1 + $0xc] sm:$0xf]
      %v187 = vld [vmem:[%s1 + $0x10] sm:$0xf]
      %v188 = vld [vmem:[%s1 + $0x14] sm:$0xf]
      %v189 = vld [vmem:[%s1 + $0x18] sm:$0xf]
      %v190 = vld [vmem:[%s1 + $0x1c] sm:$0xf]
      %v191 = vld [vmem:[%s1 + $0x20] sm:$0xf]
      %v192 = vld [vmem:[%s1 + $0x24] sm:$0xf]
      %v193 = vld [vmem:[%s1 + $0x28] sm:$0xf]
      %v194 = vld [vmem:[%s1 + $0x2c] sm:$0xf]
      %v195 = vld [vmem:[%s1 + $0x30] sm:$0xf]
      %v196 = vld [vmem:[%s1 + $0x34] sm:$0xf]
      %v197 = vld [vmem:[%s1 + $0x38] sm:$0xf]
      %v198 = vld [vmem:[%s1 + $0x3c] sm:$0xf]
      %v199 = vld [vmem:[%s2] sm:$0x1]
      %v201 = vlaneseq
      %v202 = vshrl.u32 %v201, 7
      %v203 = vsub.s32 0, %v202
      %v204 = vrot.slane %v199, %v203
      %v214 = vunpack.c.l.b16 %v175
      %v215 = vunpack.c.l.b16 %v176
      %v216 = vunpack.c.l.b16 %v177
      %v217 = vunpack.c.l.b16 %v178
      %v218 = vunpack.c.l.b16 %v179
      %v219 = vunpack.c.l.b16 %v180
      %v220 = vunpack.c.l.b16 %v181
      %v221 = vunpack.c.l.b16 %v182
      %v222 = vpack.c.b16 %v215, %v214
      %v223 = vpack.c.b16 %v217, %v216
      %v224 = vpack.c.b16 %v219, %v218
      %v225 = vpack.c.b16 %v221, %v220
      %v246 = vunpack.c.l.b16 %v183
      %v247 = vunpack.c.l.b16 %v184
      %v248 = vunpack.c.l.b16 %v185
      %v249 = vunpack.c.l.b16 %v186
      %v250 = vunpack.c.l.b16 %v187
      %v251 = vunpack.c.l.b16 %v188
      %v252 = vunpack.c.l.b16 %v189
      %v253 = vunpack.c.l.b16 %v190
      %v254 = vunpack.c.l.b16 %v191
      %v255 = vunpack.c.l.b16 %v192
      %v256 = vunpack.c.l.b16 %v193
      %v257 = vunpack.c.l.b16 %v194
      %v258 = vunpack.c.l.b16 %v195
      %v259 = vunpack.c.l.b16 %v196
      %v260 = vunpack.c.l.b16 %v197
      %v261 = vunpack.c.l.b16 %v198
      %v262 = vpack.c.b16 %v247, %v246
      %v263 = vpack.c.b16 %v249, %v248
      %v264 = vpack.c.b16 %v251, %v250
      %v265 = vpack.c.b16 %v253, %v252
      %v266 = vpack.c.b16 %v255, %v254
      %v267 = vpack.c.b16 %v257, %v256
      %v268 = vpack.c.b16 %v259, %v258
      %v269 = vpack.c.b16 %v261, %v260
      %278 = vmatprep.subr.bf16.mxu0 0
      %279 = vmatpush1.bf16.msra.mxu0 %v269
      %280 = vmatprep.subr.bf16.mxu0 0
      %281 = vmatpush1.bf16.msra.mxu0 %v268
      %282 = vmatprep.subr.bf16.mxu0 0
      %283 = vmatpush1.bf16.msra.mxu0 %v267
      %284 = vmatprep.subr.bf16.mxu0 0
      %285 = vmatpush1.bf16.msra.mxu0 %v266
      %286 = vmatprep.subr.bf16.mxu0 0
      %287 = vmatpush1.bf16.msra.mxu0 %v265
      %288 = vmatprep.subr.bf16.mxu0 0
      %289 = vmatpush1.bf16.msra.mxu0 %v264
      %290 = vmatprep.subr.bf16.mxu0 0
      %291 = vmatpush1.bf16.msra.mxu0 %v263
      %292 = vmatprep.subr.bf16.mxu0 0
      %293 = vmatpush1.bf16.msra.mxu0 %v262
      %294 = vmatprep.subr.bf16.mxu0 0
      %295 = vmatpush2.bf16.msra.mxu0 0
      %296 = vmatprep.subr.bf16.mxu0 0
      %297 = vmatpush2.bf16.msra.mxu0 0
      %298 = vmatprep.subr.bf16.mxu0 0
      %299 = vmatpush2.bf16.msra.mxu0 0
      %300 = vmatprep.subr.bf16.mxu0 0
      %301 = vmatpush2.bf16.msra.mxu0 0
      %302 = vmatprep.subr.bf16.mxu0 0
      %303 = vmatpush2.bf16.msra.mxu0 0
      %304 = vmatprep.subr.bf16.mxu0 0
      %305 = vmatpush2.bf16.msra.mxu0 0
      %306 = vmatprep.subr.bf16.mxu0 0
      %307 = vmatpush2.bf16.msra.mxu0 0
      %308 = vmatprep.subr.bf16.mxu0 0
      %309 = vmatpush2.bf16.msra.mxu0 0
      %310 = vmatprep.mubr.bf16.mxu0 0
      %311 = vmatmul.mubr.bf16.gmra.mxu0 %v222
      %v312 = vpop.f32.mrf.mxu0
      %v313 = vadd.f32 %v204, %v312
      %v314 = vpop.f32.mrf.mxu0
      %v315 = vpop.f32.mrf.mxu0
      %v316 = vadd.f32 %v204, %v315
      %v317 = vpop.f32.mrf.mxu0
      %318 = vmatprep.mubr.bf16.mxu0 0
      %319 = vmatmul.mubr.bf16.gmra.mxu0 %v223
      %v320 = vpop.f32.mrf.mxu0
      %v321 = vadd.f32 %v204, %v320
      %v322 = vpop.f32.mrf.mxu0
      %v323 = vpop.f32.mrf.mxu0
      %v324 = vadd.f32 %v204, %v323
      %v325 = vpop.f32.mrf.mxu0
      %326 = vmatprep.mubr.bf16.mxu0 0
      %327 = vmatmul.mubr.bf16.gmra.mxu0 %v224
      %v328 = vpop.f32.mrf.mxu0
      %v329 = vadd.f32 %v204, %v328
      %v330 = vpop.f32.mrf.mxu0
      %v331 = vpop.f32.mrf.mxu0
      %v332 = vadd.f32 %v204, %v331
      %v333 = vpop.f32.mrf.mxu0
      %334 = vmatprep.mubr.bf16.mxu0 0
      %335 = vmatmul.mubr.bf16.gmra.mxu0 %v225
      %v336 = vpop.f32.mrf.mxu0
      %v337 = vadd.f32 %v204, %v336
      %v338 = vpop.f32.mrf.mxu0
      %v339 = vpop.f32.mrf.mxu0
      %v340 = vadd.f32 %v204, %v339
      %v341 = vpop.f32.mrf.mxu0
      %342 = vdwg.mxu0
      %v343 = vmax.f32 %v313, 0.0
      %v344 = vmax.f32 %v316, 0.0
      %v345 = vmax.f32 %v321, 0.0
      %v346 = vmax.f32 %v324, 0.0
      %v347 = vmax.f32 %v329, 0.0
      %v348 = vmax.f32 %v332, 0.0
      %v349 = vmax.f32 %v337, 0.0
      %v350 = vmax.f32 %v340, 0.0
      %v351 = vpack.c.bf16 %v344, %v343
      %v352 = vpack.c.bf16 %v346, %v345
      %v353 = vpack.c.bf16 %v348, %v347
      %v354 = vpack.c.bf16 %v350, %v349
      %v359 = vunpack.c.l.b16 %v351
      %v360 = vunpack.c.h.b16 %v351
      %v361 = vunpack.c.l.b16 %v352
      %v362 = vunpack.c.h.b16 %v352
      %v363 = vunpack.c.l.b16 %v353
      %v364 = vunpack.c.h.b16 %v353
      %v365 = vunpack.c.l.b16 %v354
      %v366 = vunpack.c.h.b16 %v354
      %v367 = vpack.c.b16 %v359, %v359
      %v368 = vpack.c.b16 %v360, %v360
      %v369 = vpack.c.b16 %v361, %v361
      %v370 = vpack.c.b16 %v362, %v362
      %v371 = vpack.c.b16 %v363, %v363
      %v372 = vpack.c.b16 %v364, %v364
      %v373 = vpack.c.b16 %v365, %v365
      %v374 = vpack.c.b16 %v366, %v366
      %383 = vst [vmem:[%s172] sm:$0xf] %v367
      %384 = vst [vmem:[%s172 + $0x4] sm:$0xf] %v368
      %385 = vst [vmem:[%s172 + $0x8] sm:$0xf] %v369
      %386 = vst [vmem:[%s172 + $0xc] sm:$0xf] %v370
      %387 = vst [vmem:[%s172 + $0x10] sm:$0xf] %v371
      %388 = vst [vmem:[%s172 + $0x14] sm:$0xf] %v372
      %389 = vst [vmem:[%s172 + $0x18] sm:$0xf] %v373
      %390 = vst [vmem:[%s172 + $0x1c] sm:$0xf] %v374
      %s391 = smul.u32 8, %s14
      %p392 = scmp.lt.s32.totalorder %s391, 15
      %s393 = scalar_select %p392, %s391, 15
      %s394 = smul.addr %s393, 4
      %s395 = scalar_lea.vmem %s3, %s394
      // Predicated region
      $region33: #{_lambda_.10} parent=31 // pred_check
        %p396 = pneg %p100
      $region34: #{_lambda_.10} parent=31 // pred_check_branch
        %398 = sbr.rel (%p396) target = $region36
      $region35: #{_lambda_.10} parent=31 // pred_region
        %s399 = smul.u32 8, %s14
      $region36: #{_lambda_.10} parent=31 // pred_fallthru
        _
    $region32: #{_lambda_.10} parent=5 // pred_fallthru
      _
    %p400 = scmp.le.s32.totalorder 2, %s9
    // Predicated region
    $region37: #{_lambda_.10} parent=5 // pred_check
      %p401 = pneg %p400
    $region38: #{_lambda_.10} parent=5 // pred_check_branch
      %403 = sbr.rel (%p401) target = $region40
    $region39: #{_lambda_.10} parent=5 // pred_region
      %s404 = ssub.s32 %s9, 2
      // Predicated region
      $region41: #{_lambda_.10} parent=39 // pred_check
        %p405 = pneg %p106
      $region42: #{_lambda_.10} parent=39 // pred_check_branch
        %407 = sbr.rel (%p405) target = $region44
      $region43: #{_lambda_.10} parent=39 // pred_region
        %s408 = smul.u32 8, %s15
        %p409 = scmp.lt.s32.totalorder %s408, 15
        %s410 = scalar_select %p409, %s408, 15
        %s411 = smul.addr %s410, 4
        %s412 = scalar_lea.vmem %s3, %s411
      $region44: #{_lambda_.10} parent=39 // pred_fallthru
        _
    $region40: #{_lambda_.10} parent=5 // pred_fallthru
      _
  $region6: #{_lambda_.10} parent=0 // loop_footer
    %s13 = sadd.s32 1, %s9
  $region7: #{_lambda_.10} parent=0 // loop_footer_branch
    %8 = sbr.rel target = $region3
  $region8: #{_lambda_.10} parent=0 // loop_exit
    _

// kernel: _lambda_.11
$region0: #{_lambda_.11}
  #allocation0 [shape = 'u32[]', space=smem, size = 0x4, offset = 0x4, fixed_abs, tag = 'smem constant byte address 0x4 - core index']
  #allocation1 [shape = 'u32[144,128]{1,0:T(1,128)}', space=vmem, size = 0x12000, scoped, tag = 'internal scratch']
  %s0 = inlined_call_operand.vmem [shape: bf16[128,128], index: 0, kind: input, shape index: {}]
  %s1 = inlined_call_operand.vmem [shape: bf16[128,128], index: 1, kind: input, shape index: {}]
  %s2 = inlined_call_operand.vmem [shape: f32[1,128], index: 2, kind: input, shape index: {}]
  %s3 = inlined_call_operand.vmem [shape: bf16[128,128], index: 3, kind: input, shape index: {}]
  %s4 = inlined_call_operand.vmem [shape: bf16[128,128], index: 4, kind: output, shape index: {}]
  %s5 = sld [smem:[#allocation0]]
  $region49: #{_lambda_.11} parent=0
    _
  %s7 = ssub.s32 1, %s5
  %s8 = scalar_select 0, %s7, %s5
  loop: start=0, step=1, limit=4
  $region2: #{_lambda_.11} parent=0 // loop_pre_header
    _
  $region3: #{_lambda_.11} parent=0 // loop_header
    %s10 = sphi 0, %s14
    %p11 = scmp.ge.s32.totalorder %s10, 4
    %s20 = sphi 0, %s22
    %s23 = sphi 0, %s20
    %s24 = sphi 0, %s23
    %s40 = sphi 0, %s24
    %s44 = sphi 0, %s44
    %s46 = sphi 0, %s44
    %s47 = sphi 0, %s46
    %s61 = sphi 0, %s47
    %s65 = sphi 0, %s65
    %s67 = sphi 0, %s65
    %s68 = sphi 0, %s67
    %s82 = sphi 0, %s68
    %s88 = sphi 0, %s90
    %s91 = sphi 0, %s88
    %s92 = sphi 0, %s91
    %s108 = sphi 0, %s92
    %s114 = sphi 0, %s116
    %s117 = sphi 0, %s114
    %s118 = sphi 0, %s117
    %s134 = sphi 0, %s118
  $region4: #{_lambda_.11} parent=0 // loop_header_branch
    %13 = sbr.rel (%p11) target = $region8
  $region5: #{_lambda_.11} parent=0 // loop_body
    %s15 = ssub.s32 %s10, 1
    %s16 = ssub.s32 %s10, 2
    %s17 = sadd.s32 %s10, 1
    %s18 = ssub.s32 %s10, %s17
    %p19 = scmp.eq.s32.totalorder %s18, 0
    %s21 = sadd.s32 %s20, 1
    %s22 = scalar_select %p19, %s20, %s21
    %p25 = pneg %p19
    %p26 = scmp.eq.s32.totalorder %s10, 1
    %p27 = por %p25, %p26
    %p28 = scmp.ne.s32.totalorder %s20, %s23
    %p29 = scmp.eq.s32.totalorder %s10, 0
    %p30 = por %p28, %p29
    %p31 = scmp.ne.s32.totalorder %s20, %s23
    %p32 = scmp.eq.s32.totalorder %s15, 1
    %p33 = por %p31, %p32
    %p34 = scmp.ne.s32.totalorder %s23, %s24
    %p35 = scmp.eq.s32.totalorder %s15, 0
    %p36 = por %p34, %p35
    %p37 = scmp.ne.s32.totalorder %s23, %s24
    %p38 = scmp.eq.s32.totalorder %s16, 1
    %p39 = por %p37, %p38
    %p41 = scmp.ne.s32.totalorder %s24, %s40
    %p42 = scmp.eq.s32.totalorder %s16, 0
    %p43 = por %p41, %p42
    %s45 = sadd.s32 %s44, 1
    %p48 = scmp.eq.s32.totalorder %s10, 1
    %p49 = scmp.ne.s32.totalorder %s44, %s46
    %p50 = scmp.eq.s32.totalorder %s10, 0
    %p51 = por %p49, %p50
    %p52 = scmp.ne.s32.totalorder %s44, %s46
    %p53 = scmp.eq.s32.totalorder %s15, 1
    %p54 = por %p52, %p53
    %p55 = scmp.ne.s32.totalorder %s46, %s47
    %p56 = scmp.eq.s32.totalorder %s15, 0
    %p57 = por %p55, %p56
    %p58 = scmp.ne.s32.totalorder %s46, %s47
    %p59 = scmp.eq.s32.totalorder %s16, 1
    %p60 = por %p58, %p59
    %p62 = scmp.ne.s32.totalorder %s47, %s61
    %p63 = scmp.eq.s32.totalorder %s16, 0
    %p64 = por %p62, %p63
    %s66 = sadd.s32 %s65, 1
    %p69 = scmp.eq.s32.totalorder %s10, 1
    %p70 = scmp.ne.s32.totalorder %s65, %s67
    %p71 = scmp.eq.s32.totalorder %s10, 0
    %p72 = por %p70, %p71
    %p73 = scmp.ne.s32.totalorder %s65, %s67
    %p74 = scmp.eq.s32.totalorder %s15, 1
    %p75 = por %p73, %p74
    %p76 = scmp.ne.s32.totalorder %s67, %s68
    %p77 = scmp.eq.s32.totalorder %s15, 0
    %p78 = por %p76, %p77
    %p79 = scmp.ne.s32.totalorder %s67, %s68
    %p80 = scmp.eq.s32.totalorder %s16, 1
    %p81 = por %p79, %p80
    %p83 = scmp.ne.s32.totalorder %s68, %s82
    %p84 = scmp.eq.s32.totalorder %s16, 0
    %p85 = por %p83, %p84
    %s86 = ssub.s32 %s10, %s17
    %p87 = scmp.eq.s32.totalorder %s86, 0
    %s89 = sadd.s32 %s88, 1
    %s90 = scalar_select %p87, %s88, %s89
    %p93 = pneg %p87
    %p94 = scmp.eq.s32.totalorder %s10, 1
    %p95 = por %p93, %p94
    %p96 = scmp.ne.s32.totalorder %s88, %s91
    %p97 = scmp.eq.s32.totalorder %s10, 0
    %p98 = por %p96, %p97
    %p99 = scmp.ne.s32.totalorder %s88, %s91
    %p100 = scmp.eq.s32.totalorder %s15, 1
    %p101 = por %p99, %p100
    %p102 = scmp.ne.s32.totalorder %s91, %s92
    %p103 = scmp.eq.s32.totalorder %s15, 0
    %p104 = por %p102, %p103
    %p105 = scmp.ne.s32.totalorder %s91, %s92
    %p106 = scmp.eq.s32.totalorder %s16, 1
    %p107 = por %p105, %p106
    %p109 = scmp.ne.s32.totalorder %s92, %s108
    %p110 = scmp.eq.s32.totalorder %s16, 0
    %p111 = por %p109, %p110
    %s112 = ssub.s32 %s10, %s17
    %p113 = scmp.eq.s32.totalorder %s112, 0
    %s115 = sadd.s32 %s114, 1
    %s116 = scalar_select %p113, %s114, %s115
    %p119 = pneg %p113
    %p120 = scmp.eq.s32.totalorder %s10, 1
    %p121 = por %p119, %p120
    %p122 = scmp.ne.s32.totalorder %s114, %s117
    %p123 = scmp.eq.s32.totalorder %s10, 0
    %p124 = por %p122, %p123
    %p125 = scmp.ne.s32.totalorder %s114, %s117
    %p126 = scmp.eq.s32.totalorder %s15, 1
    %p127 = por %p125, %p126
    %p128 = scmp.ne.s32.totalorder %s117, %s118
    %p129 = scmp.eq.s32.totalorder %s15, 0
    %p130 = por %p128, %p129
    %p131 = scmp.ne.s32.totalorder %s117, %s118
    %p132 = scmp.eq.s32.totalorder %s16, 1
    %p133 = por %p131, %p132
    %p135 = scmp.ne.s32.totalorder %s118, %s134
    %p136 = scmp.eq.s32.totalorder %s16, 0
    %p137 = por %p135, %p136
    %p138 = scmp.le.s32.totalorder 1, %s10
    %p139 = scmp.lt.s32.totalorder %s10, 3
    %p140 = pnand %p138, %p139
    %p141 = pneg %p140
    // Predicated region
    $region9: #{_lambda_.11} parent=5 // pred_check
      _
    $region10: #{_lambda_.11} parent=5 // pred_check_branch
      %143 = sbr.rel (%p140) target = $region12
    $region11: #{_lambda_.11} parent=5 // pred_region
      %s144 = ssub.s32 %s10, 1
      // Predicated region
      $region13: #{_lambda_.11} parent=11 // pred_check
        %p145 = pneg %p57
      $region14: #{_lambda_.11} parent=11 // pred_check_branch
        %147 = sbr.rel (%p145) target = $region16
      $region15: #{_lambda_.11} parent=11 // pred_region
        _
      $region16: #{_lambda_.11} parent=11 // pred_fallthru
        _
      // Predicated region
      $region17: #{_lambda_.11} parent=11 // pred_check
        %p148 = pneg %p78
      $region18: #{_lambda_.11} parent=11 // pred_check_branch
        %150 = sbr.rel (%p148) target = $region20
      $region19: #{_lambda_.11} parent=11 // pred_region
        _
      $region20: #{_lambda_.11} parent=11 // pred_fallthru
        _
    $region12: #{_lambda_.11} parent=5 // pred_fallthru
      _
    %p151 = scmp.lt.s32.totalorder %s10, 2
    // Predicated region
    $region21: #{_lambda_.11} parent=5 // pred_check
      %p152 = pneg %p151
    $region22: #{_lambda_.11} parent=5 // pred_check_branch
      %154 = sbr.rel (%p152) target = $region24
    $region23: #{_lambda_.11} parent=5 // pred_region
      // Predicated region
      $region25: #{_lambda_.11} parent=23 // pred_check
        %p155 = pneg %p30
      $region26: #{_lambda_.11} parent=23 // pred_check_branch
        %157 = sbr.rel (%p155) target = $region28
      $region27: #{_lambda_.11} parent=23 // pred_region
        %s158 = smul.u32 8, %s10
        %p159 = scmp.lt.s32.totalorder %s158, 15
        %s160 = scalar_select %p159, %s158, 15
        %s161 = smul.addr %s160, 4
        %s162 = scalar_lea.vmem %s0, %s161
        %s163 = smul.u32 8, %s10
      $region28: #{_lambda_.11} parent=23 // pred_fallthru
        _
      // Predicated region
      $region29: #{_lambda_.11} parent=23 // pred_check
        %p164 = pneg %p98
      $region30: #{_lambda_.11} parent=23 // pred_check_branch
        %166 = sbr.rel (%p164) target = $region32
      $region31: #{_lambda_.11} parent=23 // pred_region
        %s167 = smul.u32 8, %s10
        %p168 = scmp.lt.s32.totalorder %s167, 15
        %s169 = scalar_select %p168, %s167, 15
        %s170 = smul.addr %s169, 4
        %s171 = scalar_lea.vmem %s3, %s170
        %s172 = smul.u32 8, %s10
      $region32: #{_lambda_.11} parent=23 // pred_fallthru
        _
    $region24: #{_lambda_.11} parent=5 // pred_fallthru
      _
    %p173 = scmp.le.s32.totalorder 1, %s10
    %p174 = scmp.lt.s32.totalorder %s10, 3
    %p175 = pnand %p173, %p174
    %p176 = pneg %p175
    // Predicated region
    $region33: #{_lambda_.11} parent=5 // pred_check
      _
    $region34: #{_lambda_.11} parent=5 // pred_check_branch
      %178 = sbr.rel (%p175) target = $region36
    $region35: #{_lambda_.11} parent=5 // pred_region
      %s179 = ssub.s32 %s10, 1
      %s180 = smul.u32 8, %s15
      %p181 = scmp.lt.s32.totalorder %s180, 15
      %s182 = scalar_select %p181, %s180, 15
      %s183 = smul.addr %s182, 4
      %s184 = scalar_lea.vmem %s0, %s183
      %p185 = pneg %p36
      %p186 = pneg %p33
      %p187 = pneg %p57
      %p188 = pneg %p54
      %p189 = pneg %p78
      %p190 = pneg %p75
      %s191 = smul.u32 8, %s15
      %p192 = scmp.lt.s32.totalorder %s191, 15
      %s193 = scalar_select %p192, %s191, 15
      %s194 = smul.addr %s193, 4
      %s195 = scalar_lea.vmem %s3, %s194
      %p196 = pneg %p104
      %p197 = pneg %p101
      %p198 = pneg %p130
      %p199 = pneg %p127
      %s200 = smul.u32 8, %s15
      %p201 = scmp.lt.s32.totalorder %s200, 15
      %s202 = scalar_select %p201, %s200, 15
      %s203 = smul.addr %s202, 4
      %s204 = scalar_lea.vmem %s4, %s203
      %s205 = smul.u32 8, %s15
      %p206 = scmp.lt.s32.totalorder %s205, 15
      %s207 = scalar_select %p206, %s205, 15
      %s208 = smul.addr %s207, 4
      %s209 = scalar_lea.vmem %s0, %s208
      %s210 = smul.u32 8, %s15
      %s211 = smul.u32 8, %s15
      %p212 = scmp.lt.s32.totalorder %s211, 15
      %s213 = scalar_select %p212, %s211, 15
      %s214 = smul.addr %s213, 4
      %s215 = scalar_lea.vmem %s3, %s214
      %s216 = smul.u32 8, %s15
      %s217 = smul.u32 8, %s15
      %p218 = scmp.lt.s32.totalorder %s217, 15
      %s219 = scalar_select %p218, %s217, 15
      %s220 = smul.addr %s219, 4
      %s221 = scalar_lea.vmem %s4, %s220
      %s222 = smul.u32 8, %s15
      %v224 = vld [vmem:[%s209] sm:$0xf]
      %v225 = vld [vmem:[%s209 + $0x4] sm:$0xf]
      %v226 = vld [vmem:[%s209 + $0x8] sm:$0xf]
      %v227 = vld [vmem:[%s209 + $0xc] sm:$0xf]
      %v228 = vld [vmem:[%s209 + $0x10] sm:$0xf]
      %v229 = vld [vmem:[%s209 + $0x14] sm:$0xf]
      %v230 = vld [vmem:[%s209 + $0x18] sm:$0xf]
      %v231 = vld [vmem:[%s209 + $0x1c] sm:$0xf]
      %v232 = vld [vmem:[%s1] sm:$0xf]
      %v233 = vld [vmem:[%s1 + $0x4] sm:$0xf]
      %v234 = vld [vmem:[%s1 + $0x8] sm:$0xf]
      %v235 = vld [vmem:[%s1 + $0xc] sm:$0xf]
      %v236 = vld [vmem:[%s1 + $0x10] sm:$0xf]
      %v237 = vld [vmem:[%s1 + $0x14] sm:$0xf]
      %v238 = vld [vmem:[%s1 + $0x18] sm:$0xf]
      %v239 = vld [vmem:[%s1 + $0x1c] sm:$0xf]
      %v240 = vld [vmem:[%s1 + $0x20] sm:$0xf]
      %v241 = vld [vmem:[%s1 + $0x24] sm:$0xf]
      %v242 = vld [vmem:[%s1 + $0x28] sm:$0xf]
      %v243 = vld [vmem:[%s1 + $0x2c] sm:$0xf]
      %v244 = vld [vmem:[%s1 + $0x30] sm:$0xf]
      %v245 = vld [vmem:[%s1 + $0x34] sm:$0xf]
      %v246 = vld [vmem:[%s1 + $0x38] sm:$0xf]
      %v247 = vld [vmem:[%s1 + $0x3c] sm:$0xf]
      %v248 = vld [vmem:[%s2] sm:$0x1]
      %v250 = vlaneseq
      %v251 = vshrl.u32 %v250, 7
      %v252 = vsub.s32 0, %v251
      %v253 = vrot.slane %v248, %v252
      %v263 = vunpack.c.l.b16 %v224
      %v264 = vunpack.c.l.b16 %v225
      %v265 = vunpack.c.l.b16 %v226
      %v266 = vunpack.c.l.b16 %v227
      %v267 = vunpack.c.l.b16 %v228
      %v268 = vunpack.c.l.b16 %v229
      %v269 = vunpack.c.l.b16 %v230
      %v270 = vunpack.c.l.b16 %v231
      %v271 = vpack.c.b16 %v264, %v263
      %v272 = vpack.c.b16 %v266, %v265
      %v273 = vpack.c.b16 %v268, %v267
      %v274 = vpack.c.b16 %v270, %v269
      %v295 = vunpack.c.l.b16 %v232
      %v296 = vunpack.c.l.b16 %v233
      %v297 = vunpack.c.l.b16 %v234
      %v298 = vunpack.c.l.b16 %v235
      %v299 = vunpack.c.l.b16 %v236
      %v300 = vunpack.c.l.b16 %v237
      %v301 = vunpack.c.l.b16 %v238
      %v302 = vunpack.c.l.b16 %v239
      %v303 = vunpack.c.l.b16 %v240
      %v304 = vunpack.c.l.b16 %v241
      %v305 = vunpack.c.l.b16 %v242
      %v306 = vunpack.c.l.b16 %v243
      %v307 = vunpack.c.l.b16 %v244
      %v308 = vunpack.c.l.b16 %v245
      %v309 = vunpack.c.l.b16 %v246
      %v310 = vunpack.c.l.b16 %v247
      %v311 = vpack.c.b16 %v296, %v295
      %v312 = vpack.c.b16 %v298, %v297
      %v313 = vpack.c.b16 %v300, %v299
      %v314 = vpack.c.b16 %v302, %v301
      %v315 = vpack.c.b16 %v304, %v303
      %v316 = vpack.c.b16 %v306, %v305
      %v317 = vpack.c.b16 %v308, %v307
      %v318 = vpack.c.b16 %v310, %v309
      %327 = vmatprep.subr.bf16.mxu0 0
      %328 = vmatpush1.bf16.msra.mxu0 %v318
      %329 = vmatprep.subr.bf16.mxu0 0
      %330 = vmatpush1.bf16.msra.mxu0 %v317
      %331 = vmatprep.subr.bf16.mxu0 0
      %332 = vmatpush1.bf16.msra.mxu0 %v316
      %333 = vmatprep.subr.bf16.mxu0 0
      %334 = vmatpush1.bf16.msra.mxu0 %v315
      %335 = vmatprep.subr.bf16.mxu0 0
      %336 = vmatpush1.bf16.msra.mxu0 %v314
      %337 = vmatprep.subr.bf16.mxu0 0
      %338 = vmatpush1.bf16.msra.mxu0 %v313
      %339 = vmatprep.subr.bf16.mxu0 0
      %340 = vmatpush1.bf16.msra.mxu0 %v312
      %341 = vmatprep.subr.bf16.mxu0 0
      %342 = vmatpush1.bf16.msra.mxu0 %v311
      %343 = vmatprep.subr.bf16.mxu0 0
      %344 = vmatpush2.bf16.msra.mxu0 0
      %345 = vmatprep.subr.bf16.mxu0 0
      %346 = vmatpush2.bf16.msra.mxu0 0
      %347 = vmatprep.subr.bf16.mxu0 0
      %348 = vmatpush2.bf16.msra.mxu0 0
      %349 = vmatprep.subr.bf16.mxu0 0
      %350 = vmatpush2.bf16.msra.mxu0 0
      %351 = vmatprep.subr.bf16.mxu0 0
      %352 = vmatpush2.bf16.msra.mxu0 0
      %353 = vmatprep.subr.bf16.mxu0 0
      %354 = vmatpush2.bf16.msra.mxu0 0
      %355 = vmatprep.subr.bf16.mxu0 0
      %356 = vmatpush2.bf16.msra.mxu0 0
      %357 = vmatprep.subr.bf16.mxu0 0
      %358 = vmatpush2.bf16.msra.mxu0 0
      %359 = vmatprep.mubr.bf16.mxu0 0
      %360 = vmatmul.mubr.bf16.gmra.mxu0 %v271
      %v361 = vpop.f32.mrf.mxu0
      %v362 = vadd.f32 %v253, %v361
      %v363 = vpop.f32.mrf.mxu0
      %v364 = vpop.f32.mrf.mxu0
      %v365 = vadd.f32 %v253, %v364
      %v366 = vpop.f32.mrf.mxu0
      %367 = vmatprep.mubr.bf16.mxu0 0
      %368 = vmatmul.mubr.bf16.gmra.mxu0 %v272
      %v369 = vpop.f32.mrf.mxu0
      %v370 = vadd.f32 %v253, %v369
      %v371 = vpop.f32.mrf.mxu0
      %v372 = vpop.f32.mrf.mxu0
      %v373 = vadd.f32 %v253, %v372
      %v374 = vpop.f32.mrf.mxu0
      %375 = vmatprep.mubr.bf16.mxu0 0
      %376 = vmatmul.mubr.bf16.gmra.mxu0 %v273
      %v377 = vpop.f32.mrf.mxu0
      %v378 = vadd.f32 %v253, %v377
      %v379 = vpop.f32.mrf.mxu0
      %v380 = vpop.f32.mrf.mxu0
      %v381 = vadd.f32 %v253, %v380
      %v382 = vpop.f32.mrf.mxu0
      %383 = vmatprep.mubr.bf16.mxu0 0
      %384 = vmatmul.mubr.bf16.gmra.mxu0 %v274
      %v385 = vpop.f32.mrf.mxu0
      %v386 = vadd.f32 %v253, %v385
      %v387 = vpop.f32.mrf.mxu0
      %v388 = vpop.f32.mrf.mxu0
      %v389 = vadd.f32 %v253, %v388
      %v390 = vpop.f32.mrf.mxu0
      %391 = vdwg.mxu0
      %v392 = vld [vmem:[%s215] sm:$0xf]
      %v393 = vld [vmem:[%s215 + $0x4] sm:$0xf]
      %v394 = vld [vmem:[%s215 + $0x8] sm:$0xf]
      %v395 = vld [vmem:[%s215 + $0xc] sm:$0xf]
      %v396 = vld [vmem:[%s215 + $0x10] sm:$0xf]
      %v397 = vld [vmem:[%s215 + $0x14] sm:$0xf]
      %v398 = vld [vmem:[%s215 + $0x18] sm:$0xf]
      %v399 = vld [vmem:[%s215 + $0x1c] sm:$0xf]
      %v400 = vunpack.c.l.bf16 %v392
      %v401 = vunpack.c.l.bf16 %v393
      %v402 = vunpack.c.l.bf16 %v394
      %v403 = vunpack.c.l.bf16 %v395
      %v404 = vunpack.c.l.bf16 %v396
      %v405 = vunpack.c.l.bf16 %v397
      %v406 = vunpack.c.l.bf16 %v398
      %v407 = vunpack.c.l.bf16 %v399
      %v408 = vadd.f32 %v362, %v400
      %v409 = vadd.f32 %v365, %v401
      %v410 = vadd.f32 %v370, %v402
      %v411 = vadd.f32 %v373, %v403
      %v412 = vadd.f32 %v378, %v404
      %v413 = vadd.f32 %v381, %v405
      %v414 = vadd.f32 %v386, %v406
      %v415 = vadd.f32 %v389, %v407
      %v416 = vmax.f32 %v408, 0.0
      %v417 = vmax.f32 %v409, 0.0
      %v418 = vmax.f32 %v410, 0.0
      %v419 = vmax.f32 %v411, 0.0
      %v420 = vmax.f32 %v412, 0.0
      %v421 = vmax.f32 %v413, 0.0
      %v422 = vmax.f32 %v414, 0.0
      %v423 = vmax.f32 %v415, 0.0
      %v424 = vpack.c.bf16 %v417, %v416
      %v425 = vpack.c.bf16 %v419, %v418
      %v426 = vpack.c.bf16 %v421, %v420
      %v427 = vpack.c.bf16 %v423, %v422
      %v432 = vunpack.c.l.b16 %v424
      %v433 = vunpack.c.h.b16 %v424
      %v434 = vunpack.c.l.b16 %v425
      %v435 = vunpack.c.h.b16 %v425
      %v436 = vunpack.c.l.b16 %v426
      %v437 = vunpack.c.h.b16 %v426
      %v438 = vunpack.c.l.b16 %v427
      %v439 = vunpack.c.h.b16 %v427
      %v440 = vpack.c.b16 %v432, %v432
      %v441 = vpack.c.b16 %v433, %v433
      %v442 = vpack.c.b16 %v434, %v434
      %v443 = vpack.c.b16 %v435, %v435
      %v444 = vpack.c.b16 %v436, %v436
      %v445 = vpack.c.b16 %v437, %v437
      %v446 = vpack.c.b16 %v438, %v438
      %v447 = vpack.c.b16 %v439, %v439
      %456 = vst [vmem:[%s221] sm:$0xf] %v440
      %457 = vst [vmem:[%s221 + $0x4] sm:$0xf] %v441
      %458 = vst [vmem:[%s221 + $0x8] sm:$0xf] %v442
      %459 = vst [vmem:[%s221 + $0xc] sm:$0xf] %v443
      %460 = vst [vmem:[%s221 + $0x10] sm:$0xf] %v444
      %461 = vst [vmem:[%s221 + $0x14] sm:$0xf] %v445
      %462 = vst [vmem:[%s221 + $0x18] sm:$0xf] %v446
      %463 = vst [vmem:[%s221 + $0x1c] sm:$0xf] %v447
      %s464 = smul.u32 8, %s15
      %p465 = scmp.lt.s32.totalorder %s464, 15
      %s466 = scalar_select %p465, %s464, 15
      %s467 = smul.addr %s466, 4
      %s468 = scalar_lea.vmem %s4, %s467
      // Predicated region
      $region37: #{_lambda_.11} parent=35 // pred_check
        %p469 = pneg %p127
      $region38: #{_lambda_.11} parent=35 // pred_check_branch
        %471 = sbr.rel (%p469) target = $region40
      $region39: #{_lambda_.11} parent=35 // pred_region
        %s472 = smul.u32 8, %s15
      $region40: #{_lambda_.11} parent=35 // pred_fallthru
        _
    $region36: #{_lambda_.11} parent=5 // pred_fallthru
      _
    %p473 = scmp.le.s32.totalorder 2, %s10
    // Predicated region
    $region41: #{_lambda_.11} parent=5 // pred_check
      %p474 = pneg %p473
    $region42: #{_lambda_.11} parent=5 // pred_check_branch
      %476 = sbr.rel (%p474) target = $region44
    $region43: #{_lambda_.11} parent=5 // pred_region
      %s477 = ssub.s32 %s10, 2
      // Predicated region
      $region45: #{_lambda_.11} parent=43 // pred_check
        %p478 = pneg %p133
      $region46: #{_lambda_.11} parent=43 // pred_check_branch
        %480 = sbr.rel (%p478) target = $region48
      $region47: #{_lambda_.11} parent=43 // pred_region
        %s481 = smul.u32 8, %s16
        %p482 = scmp.lt.s32.totalorder %s481, 15
        %s483 = scalar_select %p482, %s481, 15
        %s484 = smul.addr %s483, 4
        %s485 = scalar_lea.vmem %s4, %s484
      $region48: #{_lambda_.11} parent=43 // pred_fallthru
        _
    $region44: #{_lambda_.11} parent=5 // pred_fallthru
      _
  $region6: #{_lambda_.11} parent=0 // loop_footer
    %s14 = sadd.s32 1, %s10
  $region7: #{_lambda_.11} parent=0 // loop_footer_branch
    %9 = sbr.rel target = $region3
  $region8: #{_lambda_.11} parent=0 // loop_exit
    _

// kernel: _lambda_.12
$region0: #{_lambda_.12}
  #allocation0 [shape = 'u32[]', space=smem, size = 0x4, offset = 0x4, fixed_abs, tag = 'smem constant byte address 0x4 - core index']
  #allocation1 [shape = 'u32[144,128]{1,0:T(1,128)}', space=vmem, size = 0x12000, scoped, tag = 'internal scratch']
  %s0 = inlined_call_operand.vmem [shape: bf16[32,128], index: 0, kind: input, shape index: {}]
  %s1 = inlined_call_operand.vmem [shape: bf16[128,256], index: 1, kind: input, shape index: {}]
  %s2 = inlined_call_operand.vmem [shape: f32[1,256], index: 2, kind: input, shape index: {}]
  %s3 = inlined_call_operand.vmem [shape: bf16[32,256], index: 3, kind: output, shape index: {}]
  %s4 = sld [smem:[#allocation0]]
  $region45: #{_lambda_.12} parent=0
    _
  %s6 = ssub.s32 1, %s4
  %s7 = scalar_select 0, %s6, %s4
  loop: start=0, step=1, limit=4
  $region2: #{_lambda_.12} parent=0 // loop_pre_header
    _
  $region3: #{_lambda_.12} parent=0 // loop_header
    %s9 = sphi 0, %s13
    %p10 = scmp.ge.s32.totalorder %s9, 4
    %s19 = sphi 0, %s21
    %s22 = sphi 0, %s19
    %s23 = sphi 0, %s22
    %s39 = sphi 0, %s23
    %s43 = sphi 0, %s43
    %s45 = sphi 0, %s43
    %s46 = sphi 0, %s45
    %s60 = sphi 0, %s46
    %s64 = sphi 0, %s64
    %s66 = sphi 0, %s64
    %s67 = sphi 0, %s66
    %s81 = sphi 0, %s67
    %s87 = sphi 0, %s89
    %s90 = sphi 0, %s87
    %s91 = sphi 0, %s90
    %s107 = sphi 0, %s91
  $region4: #{_lambda_.12} parent=0 // loop_header_branch
    %12 = sbr.rel (%p10) target = $region8
  $region5: #{_lambda_.12} parent=0 // loop_body
    %s14 = ssub.s32 %s9, 1
    %s15 = ssub.s32 %s9, 2
    %s16 = sadd.s32 %s9, 1
    %s17 = ssub.s32 %s9, %s16
    %p18 = scmp.eq.s32.totalorder %s17, 0
    %s20 = sadd.s32 %s19, 1
    %s21 = scalar_select %p18, %s19, %s20
    %p24 = pneg %p18
    %p25 = scmp.eq.s32.totalorder %s9, 1
    %p26 = por %p24, %p25
    %p27 = scmp.ne.s32.totalorder %s19, %s22
    %p28 = scmp.eq.s32.totalorder %s9, 0
    %p29 = por %p27, %p28
    %p30 = scmp.ne.s32.totalorder %s19, %s22
    %p31 = scmp.eq.s32.totalorder %s14, 1
    %p32 = por %p30, %p31
    %p33 = scmp.ne.s32.totalorder %s22, %s23
    %p34 = scmp.eq.s32.totalorder %s14, 0
    %p35 = por %p33, %p34
    %p36 = scmp.ne.s32.totalorder %s22, %s23
    %p37 = scmp.eq.s32.totalorder %s15, 1
    %p38 = por %p36, %p37
    %p40 = scmp.ne.s32.totalorder %s23, %s39
    %p41 = scmp.eq.s32.totalorder %s15, 0
    %p42 = por %p40, %p41
    %s44 = sadd.s32 %s43, 1
    %p47 = scmp.eq.s32.totalorder %s9, 1
    %p48 = scmp.ne.s32.totalorder %s43, %s45
    %p49 = scmp.eq.s32.totalorder %s9, 0
    %p50 = por %p48, %p49
    %p51 = scmp.ne.s32.totalorder %s43, %s45
    %p52 = scmp.eq.s32.totalorder %s14, 1
    %p53 = por %p51, %p52
    %p54 = scmp.ne.s32.totalorder %s45, %s46
    %p55 = scmp.eq.s32.totalorder %s14, 0
    %p56 = por %p54, %p55
    %p57 = scmp.ne.s32.totalorder %s45, %s46
    %p58 = scmp.eq.s32.totalorder %s15, 1
    %p59 = por %p57, %p58
    %p61 = scmp.ne.s32.totalorder %s46, %s60
    %p62 = scmp.eq.s32.totalorder %s15, 0
    %p63 = por %p61, %p62
    %s65 = sadd.s32 %s64, 1
    %p68 = scmp.eq.s32.totalorder %s9, 1
    %p69 = scmp.ne.s32.totalorder %s64, %s66
    %p70 = scmp.eq.s32.totalorder %s9, 0
    %p71 = por %p69, %p70
    %p72 = scmp.ne.s32.totalorder %s64, %s66
    %p73 = scmp.eq.s32.totalorder %s14, 1
    %p74 = por %p72, %p73
    %p75 = scmp.ne.s32.totalorder %s66, %s67
    %p76 = scmp.eq.s32.totalorder %s14, 0
    %p77 = por %p75, %p76
    %p78 = scmp.ne.s32.totalorder %s66, %s67
    %p79 = scmp.eq.s32.totalorder %s15, 1
    %p80 = por %p78, %p79
    %p82 = scmp.ne.s32.totalorder %s67, %s81
    %p83 = scmp.eq.s32.totalorder %s15, 0
    %p84 = por %p82, %p83
    %s85 = ssub.s32 %s9, %s16
    %p86 = scmp.eq.s32.totalorder %s85, 0
    %s88 = sadd.s32 %s87, 1
    %s89 = scalar_select %p86, %s87, %s88
    %p92 = pneg %p86
    %p93 = scmp.eq.s32.totalorder %s9, 1
    %p94 = por %p92, %p93
    %p95 = scmp.ne.s32.totalorder %s87, %s90
    %p96 = scmp.eq.s32.totalorder %s9, 0
    %p97 = por %p95, %p96
    %p98 = scmp.ne.s32.totalorder %s87, %s90
    %p99 = scmp.eq.s32.totalorder %s14, 1
    %p100 = por %p98, %p99
    %p101 = scmp.ne.s32.totalorder %s90, %s91
    %p102 = scmp.eq.s32.totalorder %s14, 0
    %p103 = por %p101, %p102
    %p104 = scmp.ne.s32.totalorder %s90, %s91
    %p105 = scmp.eq.s32.totalorder %s15, 1
    %p106 = por %p104, %p105
    %p108 = scmp.ne.s32.totalorder %s91, %s107
    %p109 = scmp.eq.s32.totalorder %s15, 0
    %p110 = por %p108, %p109
    %p111 = scmp.le.s32.totalorder 1, %s9
    %p112 = scmp.lt.s32.totalorder %s9, 3
    %p113 = pnand %p111, %p112
    %p114 = pneg %p113
    // Predicated region
    $region9: #{_lambda_.12} parent=5 // pred_check
      _
    $region10: #{_lambda_.12} parent=5 // pred_check_branch
      %116 = sbr.rel (%p113) target = $region12
    $region11: #{_lambda_.12} parent=5 // pred_region
      %s117 = ssub.s32 %s9, 1
      // Predicated region
      $region13: #{_lambda_.12} parent=11 // pred_check
        %p118 = pneg %p56
      $region14: #{_lambda_.12} parent=11 // pred_check_branch
        %120 = sbr.rel (%p118) target = $region16
      $region15: #{_lambda_.12} parent=11 // pred_region
        _
      $region16: #{_lambda_.12} parent=11 // pred_fallthru
        _
      // Predicated region
      $region17: #{_lambda_.12} parent=11 // pred_check
        %p121 = pneg %p77
      $region18: #{_lambda_.12} parent=11 // pred_check_branch
        %123 = sbr.rel (%p121) target = $region20
      $region19: #{_lambda_.12} parent=11 // pred_region
        _
      $region20: #{_lambda_.12} parent=11 // pred_fallthru
        _
    $region12: #{_lambda_.12} parent=5 // pred_fallthru
      _
    %p124 = scmp.lt.s32.totalorder %s9, 2
    // Predicated region
    $region21: #{_lambda_.12} parent=5 // pred_check
      %p125 = pneg %p124
    $region22: #{_lambda_.12} parent=5 // pred_check_branch
      %127 = sbr.rel (%p125) target = $region24
    $region23: #{_lambda_.12} parent=5 // pred_region
      // Predicated region
      $region25: #{_lambda_.12} parent=23 // pred_check
        %p128 = pneg %p29
      $region26: #{_lambda_.12} parent=23 // pred_check_branch
        %130 = sbr.rel (%p128) target = $region28
      $region27: #{_lambda_.12} parent=23 // pred_region
        %s131 = smul.u32 2, %s9
        %p132 = scmp.lt.s32.totalorder %s131, 3
        %s133 = scalar_select %p132, %s131, 3
        %s134 = smul.addr %s133, 4
        %s135 = scalar_lea.vmem %s0, %s134
        %s136 = smul.u32 2, %s9
      $region28: #{_lambda_.12} parent=23 // pred_fallthru
        _
    $region24: #{_lambda_.12} parent=5 // pred_fallthru
      _
    %p137 = scmp.le.s32.totalorder 1, %s9
    %p138 = scmp.lt.s32.totalorder %s9, 3
    %p139 = pnand %p137, %p138
    %p140 = pneg %p139
    // Predicated region
    $region29: #{_lambda_.12} parent=5 // pred_check
      _
    $region30: #{_lambda_.12} parent=5 // pred_check_branch
      %142 = sbr.rel (%p139) target = $region32
    $region31: #{_lambda_.12} parent=5 // pred_region
      %s143 = ssub.s32 %s9, 1
      %s144 = smul.u32 2, %s14
      %p145 = scmp.lt.s32.totalorder %s144, 3
      %s146 = scalar_select %p145, %s144, 3
      %s147 = smul.addr %s146, 4
      %s148 = scalar_lea.vmem %s0, %s147
      %p149 = pneg %p35
      %p150 = pneg %p32
      %p151 = pneg %p56
      %p152 = pneg %p53
      %p153 = pneg %p77
      %p154 = pneg %p74
      %p155 = pneg %p103
      %p156 = pneg %p100
      %s157 = smul.u32 2, %s14
      %p158 = scmp.lt.s32.totalorder %s157, 3
      %s159 = scalar_select %p158, %s157, 3
      %s160 = smul.addr %s159, 2
      %s161 = smul.addr %s160, 4
      %s162 = scalar_lea.vmem %s3, %s161
      %s163 = smul.u32 2, %s14
      %p164 = scmp.lt.s32.totalorder %s163, 3
      %s165 = scalar_select %p164, %s163, 3
      %s166 = smul.addr %s165, 4
      %s167 = scalar_lea.vmem %s0, %s166
      %s168 = smul.u32 2, %s14
      %s169 = smul.u32 2, %s14
      %p170 = scmp.lt.s32.totalorder %s169, 3
      %s171 = scalar_select %p170, %s169, 3
      %s172 = smul.addr %s171, 2
      %s173 = smul.addr %s172, 4
      %s174 = scalar_lea.vmem %s3, %s173
      %s175 = smul.u32 2, %s14
      %v177 = vld [vmem:[%s167] sm:$0xf]
      %v178 = vld [vmem:[%s167 + $0x4] sm:$0xf]
      %v179 = vld [vmem:[%s1] sm:$0xff]
      %v180 = vld [vmem:[%s1 + $0x8] sm:$0xff]
      %v181 = vld [vmem:[%s1 + $0x10] sm:$0xff]
      %v182 = vld [vmem:[%s1 + $0x18] sm:$0xff]
      %v183 = vld [vmem:[%s1 + $0x20] sm:$0xff]
      %v184 = vld [vmem:[%s1 + $0x28] sm:$0xff]
      %v185 = vld [vmem:[%s1 + $0x30] sm:$0xff]
      %v186 = vld [vmem:[%s1 + $0x38] sm:$0xff]
      %v187 = vld [vmem:[%s1 + $0x40] sm:$0xff]
      %v188 = vld [vmem:[%s1 + $0x48] sm:$0xff]
      %v189 = vld [vmem:[%s1 + $0x50] sm:$0xff]
      %v190 = vld [vmem:[%s1 + $0x58] sm:$0xff]
      %v191 = vld [vmem:[%s1 + $0x60] sm:$0xff]
      %v192 = vld [vmem:[%s1 + $0x68] sm:$0xff]
      %v193 = vld [vmem:[%s1 + $0x70] sm:$0xff]
      %v194 = vld [vmem:[%s1 + $0x78] sm:$0xff]
      %v195 = vld [vmem:[%s2] sm:$0x3]
      %v197 = vlaneseq
      %v198 = vshrl.u32 %v197, 7
      %v199 = vsub.s32 0, %v198
      %v200 = vrot.slane %v195, %v199
      %v201 = vlaneseq
      %v202 = vshrl.u32 %v201, 7
      %v203 = vsub.s32 1, %v202
      %v204 = vrot.slane %v195, %v203
      %v209 = vunpack.c.l.b16 %v177
      %v210 = vunpack.c.l.b16 %v178
      %v211 = vpack.c.b16 %v210, %v209
      %v229 = vunpack.c.l.b16 %v179
      %v230 = vunpack.c.h.b16 %v179
      %v231 = vunpack.c.l.b16 %v180
      %v232 = vunpack.c.h.b16 %v180
      %v233 = vunpack.c.l.b16 %v181
      %v234 = vunpack.c.h.b16 %v181
      %v235 = vunpack.c.l.b16 %v182
      %v236 = vunpack.c.h.b16 %v182
      %v237 = vunpack.c.l.b16 %v183
      %v238 = vunpack.c.h.b16 %v183
      %v239 = vunpack.c.l.b16 %v184
      %v240 = vunpack.c.h.b16 %v184
      %v241 = vunpack.c.l.b16 %v185
      %v242 = vunpack.c.h.b16 %v185
      %v243 = vunpack.c.l.b16 %v186
      %v244 = vunpack.c.h.b16 %v186
      %v245 = vunpack.c.l.b16 %v187
      %v246 = vunpack.c.h.b16 %v187
      %v247 = vunpack.c.l.b16 %v188
      %v248 = vunpack.c.h.b16 %v188
      %v249 = vunpack.c.l.b16 %v189
      %v250 = vunpack.c.h.b16 %v189
      %v251 = vunpack.c.l.b16 %v190
      %v252 = vunpack.c.h.b16 %v190
      %v253 = vunpack.c.l.b16 %v191
      %v254 = vunpack.c.h.b16 %v191
      %v255 = vunpack.c.l.b16 %v192
      %v256 = vunpack.c.h.b16 %v192
      %v257 = vunpack.c.l.b16 %v193
      %v258 = vunpack.c.h.b16 %v193
      %v259 = vunpack.c.l.b16 %v194
      %v260 = vunpack.c.h.b16 %v194
      %v261 = vpack.c.b16 %v231, %v229
      %v262 = vpack.c.b16 %v232, %v230
      %v263 = vpack.c.b16 %v235, %v233
      %v264 = vpack.c.b16 %v236, %v234
      %v265 = vpack.c.b16 %v239, %v237
      %v266 = vpack.c.b16 %v240, %v238
      %v267 = vpack.c.b16 %v243, %v241
      %v268 = vpack.c.b16 %v244, %v242
      %v269 = vpack.c.b16 %v247, %v245
      %v270 = vpack.c.b16 %v248, %v246
      %v271 = vpack.c.b16 %v251, %v249
      %v272 = vpack.c.b16 %v252, %v250
      %v273 = vpack.c.b16 %v255, %v253
      %v274 = vpack.c.b16 %v256, %v254
      %v275 = vpack.c.b16 %v259, %v257
      %v276 = vpack.c.b16 %v260, %v258
      %293 = vmatprep.subr.bf16.mxu0 %v276
      %294 = vmatpush1.bf16.msra.mxu0 %v275
      %295 = vmatprep.subr.bf16.mxu0 %v274
      %296 = vmatpush1.bf16.msra.mxu0 %v273
      %297 = vmatprep.subr.bf16.mxu0 %v272
      %298 = vmatpush1.bf16.msra.mxu0 %v271
      %299 = vmatprep.subr.bf16.mxu0 %v270
      %300 = vmatpush1.bf16.msra.mxu0 %v269
      %301 = vmatprep.subr.bf16.mxu0 %v268
      %302 = vmatpush1.bf16.msra.mxu0 %v267
      %303 = vmatprep.subr.bf16.mxu0 %v266
      %304 = vmatpush1.bf16.msra.mxu0 %v265
      %305 = vmatprep.subr.bf16.mxu0 %v264
      %306 = vmatpush1.bf16.msra.mxu0 %v263
      %307 = vmatprep.subr.bf16.mxu0 %v262
      %308 = vmatpush1.bf16.msra.mxu0 %v261
      %309 = vmatprep.subr.bf16.mxu0 0
      %310 = vmatpush2.bf16.msra.mxu0 0
      %311 = vmatprep.subr.bf16.mxu0 0
      %312 = vmatpush2.bf16.msra.mxu0 0
      %313 = vmatprep.subr.bf16.mxu0 0
      %314 = vmatpush2.bf16.msra.mxu0 0
      %315 = vmatprep.subr.bf16.mxu0 0
      %316 = vmatpush2.bf16.msra.mxu0 0
      %317 = vmatprep.subr.bf16.mxu0 0
      %318 = vmatpush2.bf16.msra.mxu0 0
      %319 = vmatprep.subr.bf16.mxu0 0
      %320 = vmatpush2.bf16.msra.mxu0 0
      %321 = vmatprep.subr.bf16.mxu0 0
      %322 = vmatpush2.bf16.msra.mxu0 0
      %323 = vmatprep.subr.bf16.mxu0 0
      %324 = vmatpush2.bf16.msra.mxu0 0
      %325 = vmatprep.mubr.bf16.mxu0 0
      %326 = vmatmul.mubr.bf16.gmra.mxu0 %v211
      %v327 = vpop.f32.mrf.mxu0
      %v328 = vadd.f32 %v200, %v327
      %v329 = vpop.f32.mrf.mxu0
      %v330 = vadd.f32 %v204, %v329
      %v331 = vpop.f32.mrf.mxu0
      %v332 = vadd.f32 %v200, %v331
      %v333 = vpop.f32.mrf.mxu0
      %v334 = vadd.f32 %v204, %v333
      %335 = vdwg.mxu0
      %v336 = vlaneseq
      %v337 = vand.u32 %v336, 127
      %v338 = vadd.s32 %v337, 128
      %vm339 = vcmp.lt.s32.totalorder %v337, 128
      %vm340 = vcmp.lt.s32.totalorder %v338, 128
      %v341 = vmax.f32 %v328, 0.0
      %v342 = vmax.f32 %v330, 0.0
      %v343 = vmax.f32 %v332, 0.0
      %v344 = vmax.f32 %v334, 0.0
      %v345 = vsel %vm339, %v341, %v328
      %v346 = vsel %vm340, %v342, %v330
      %v347 = vsel %vm339, %v343, %v332
      %v348 = vsel %vm340, %v344, %v334
      %v349 = vpack.c.bf16 %v347, %v345
      %v350 = vpack.c.bf16 %v348, %v346
      %v353 = vunpack.c.l.b16 %v349
      %v354 = vunpack.c.l.b16 %v350
      %v355 = vunpack.c.h.b16 %v349
      %v356 = vunpack.c.h.b16 %v350
      %v357 = vpack.c.b16 %v354, %v353
      %v358 = vpack.c.b16 %v356, %v355
      %361 = vst [vmem:[%s174] sm:$0xff] %v357
      %362 = vst [vmem:[%s174 + $0x8] sm:$0xff] %v358
      %s363 = smul.u32 2, %s14
      %p364 = scmp.lt.s32.totalorder %s363, 3
      %s365 = scalar_select %p364, %s363, 3
      %s366 = smul.addr %s365, 2
      %s367 = smul.addr %s366, 4
      %s368 = scalar_lea.vmem %s3, %s367
      // Predicated region
      $region33: #{_lambda_.12} parent=31 // pred_check
        %p369 = pneg %p100
      $region34: #{_lambda_.12} parent=31 // pred_check_branch
        %371 = sbr.rel (%p369) target = $region36
      $region35: #{_lambda_.12} parent=31 // pred_region
        %s372 = smul.u32 2, %s14
      $region36: #{_lambda_.12} parent=31 // pred_fallthru
        _
    $region32: #{_lambda_.12} parent=5 // pred_fallthru
      _
    %p373 = scmp.le.s32.totalorder 2, %s9
    // Predicated region
    $region37: #{_lambda_.12} parent=5 // pred_check
      %p374 = pneg %p373
    $region38: #{_lambda_.12} parent=5 // pred_check_branch
      %376 = sbr.rel (%p374) target = $region40
    $region39: #{_lambda_.12} parent=5 // pred_region
      %s377 = ssub.s32 %s9, 2
      // Predicated region
      $region41: #{_lambda_.12} parent=39 // pred_check
        %p378 = pneg %p106
      $region42: #{_lambda_.12} parent=39 // pred_check_branch
        %380 = sbr.rel (%p378) target = $region44
      $region43: #{_lambda_.12} parent=39 // pred_region
        %s381 = smul.u32 2, %s15
        %p382 = scmp.lt.s32.totalorder %s381, 3
        %s383 = scalar_select %p382, %s381, 3
        %s384 = smul.addr %s383, 2
        %s385 = smul.addr %s384, 4
        %s386 = scalar_lea.vmem %s3, %s385
      $region44: #{_lambda_.12} parent=39 // pred_fallthru
        _
    $region40: #{_lambda_.12} parent=5 // pred_fallthru
      _
  $region6: #{_lambda_.12} parent=0 // loop_footer
    %s13 = sadd.s32 1, %s9
  $region7: #{_lambda_.12} parent=0 // loop_footer_branch
    %8 = sbr.rel target = $region3
  $region8: #{_lambda_.12} parent=0 // loop_exit
    _

// kernel: _lambda_.13
$region0: #{_lambda_.13}
  #allocation0 [shape = 'u32[]', space=smem, size = 0x4, offset = 0x4, fixed_abs, tag = 'smem constant byte address 0x4 - core index']
  #allocation1 [shape = 'u32[144,128]{1,0:T(1,128)}', space=vmem, size = 0x12000, scoped, tag = 'internal scratch']
  %s0 = inlined_call_operand.vmem [shape: bf16[32,256], index: 0, kind: input, shape index: {}]
  %s1 = inlined_call_operand.vmem [shape: bf16[256,128], index: 1, kind: input, shape index: {}]
  %s2 = inlined_call_operand.vmem [shape: f32[1,128], index: 2, kind: input, shape index: {}]
  %s3 = inlined_call_operand.vmem [shape: bf16[32,128], index: 3, kind: input, shape index: {}]
  %s4 = inlined_call_operand.vmem [shape: bf16[32,128], index: 4, kind: output, shape index: {}]
  %s5 = sld [smem:[#allocation0]]
  $region49: #{_lambda_.13} parent=0
    _
  %s7 = ssub.s32 1, %s5
  %s8 = scalar_select 0, %s7, %s5
  loop: start=0, step=1, limit=4
  $region2: #{_lambda_.13} parent=0 // loop_pre_header
    _
  $region3: #{_lambda_.13} parent=0 // loop_header
    %s10 = sphi 0, %s14
    %p11 = scmp.ge.s32.totalorder %s10, 4
    %s20 = sphi 0, %s22
    %s23 = sphi 0, %s20
    %s24 = sphi 0, %s23
    %s40 = sphi 0, %s24
    %s44 = sphi 0, %s44
    %s46 = sphi 0, %s44
    %s47 = sphi 0, %s46
    %s61 = sphi 0, %s47
    %s65 = sphi 0, %s65
    %s67 = sphi 0, %s65
    %s68 = sphi 0, %s67
    %s82 = sphi 0, %s68
    %s88 = sphi 0, %s90
    %s91 = sphi 0, %s88
    %s92 = sphi 0, %s91
    %s108 = sphi 0, %s92
    %s114 = sphi 0, %s116
    %s117 = sphi 0, %s114
    %s118 = sphi 0, %s117
    %s134 = sphi 0, %s118
  $region4: #{_lambda_.13} parent=0 // loop_header_branch
    %13 = sbr.rel (%p11) target = $region8
  $region5: #{_lambda_.13} parent=0 // loop_body
    %s15 = ssub.s32 %s10, 1
    %s16 = ssub.s32 %s10, 2
    %s17 = sadd.s32 %s10, 1
    %s18 = ssub.s32 %s10, %s17
    %p19 = scmp.eq.s32.totalorder %s18, 0
    %s21 = sadd.s32 %s20, 1
    %s22 = scalar_select %p19, %s20, %s21
    %p25 = pneg %p19
    %p26 = scmp.eq.s32.totalorder %s10, 1
    %p27 = por %p25, %p26
    %p28 = scmp.ne.s32.totalorder %s20, %s23
    %p29 = scmp.eq.s32.totalorder %s10, 0
    %p30 = por %p28, %p29
    %p31 = scmp.ne.s32.totalorder %s20, %s23
    %p32 = scmp.eq.s32.totalorder %s15, 1
    %p33 = por %p31, %p32
    %p34 = scmp.ne.s32.totalorder %s23, %s24
    %p35 = scmp.eq.s32.totalorder %s15, 0
    %p36 = por %p34, %p35
    %p37 = scmp.ne.s32.totalorder %s23, %s24
    %p38 = scmp.eq.s32.totalorder %s16, 1
    %p39 = por %p37, %p38
    %p41 = scmp.ne.s32.totalorder %s24, %s40
    %p42 = scmp.eq.s32.totalorder %s16, 0
    %p43 = por %p41, %p42
    %s45 = sadd.s32 %s44, 1
    %p48 = scmp.eq.s32.totalorder %s10, 1
    %p49 = scmp.ne.s32.totalorder %s44, %s46
    %p50 = scmp.eq.s32.totalorder %s10, 0
    %p51 = por %p49, %p50
    %p52 = scmp.ne.s32.totalorder %s44, %s46
    %p53 = scmp.eq.s32.totalorder %s15, 1
    %p54 = por %p52, %p53
    %p55 = scmp.ne.s32.totalorder %s46, %s47
    %p56 = scmp.eq.s32.totalorder %s15, 0
    %p57 = por %p55, %p56
    %p58 = scmp.ne.s32.totalorder %s46, %s47
    %p59 = scmp.eq.s32.totalorder %s16, 1
    %p60 = por %p58, %p59
    %p62 = scmp.ne.s32.totalorder %s47, %s61
    %p63 = scmp.eq.s32.totalorder %s16, 0
    %p64 = por %p62, %p63
    %s66 = sadd.s32 %s65, 1
    %p69 = scmp.eq.s32.totalorder %s10, 1
    %p70 = scmp.ne.s32.totalorder %s65, %s67
    %p71 = scmp.eq.s32.totalorder %s10, 0
    %p72 = por %p70, %p71
    %p73 = scmp.ne.s32.totalorder %s65, %s67
    %p74 = scmp.eq.s32.totalorder %s15, 1
    %p75 = por %p73, %p74
    %p76 = scmp.ne.s32.totalorder %s67, %s68
    %p77 = scmp.eq.s32.totalorder %s15, 0
    %p78 = por %p76, %p77
    %p79 = scmp.ne.s32.totalorder %s67, %s68
    %p80 = scmp.eq.s32.totalorder %s16, 1
    %p81 = por %p79, %p80
    %p83 = scmp.ne.s32.totalorder %s68, %s82
    %p84 = scmp.eq.s32.totalorder %s16, 0
    %p85 = por %p83, %p84
    %s86 = ssub.s32 %s10, %s17
    %p87 = scmp.eq.s32.totalorder %s86, 0
    %s89 = sadd.s32 %s88, 1
    %s90 = scalar_select %p87, %s88, %s89
    %p93 = pneg %p87
    %p94 = scmp.eq.s32.totalorder %s10, 1
    %p95 = por %p93, %p94
    %p96 = scmp.ne.s32.totalorder %s88, %s91
    %p97 = scmp.eq.s32.totalorder %s10, 0
    %p98 = por %p96, %p97
    %p99 = scmp.ne.s32.totalorder %s88, %s91
    %p100 = scmp.eq.s32.totalorder %s15, 1
    %p101 = por %p99, %p100
    %p102 = scmp.ne.s32.totalorder %s91, %s92
    %p103 = scmp.eq.s32.totalorder %s15, 0
    %p104 = por %p102, %p103
    %p105 = scmp.ne.s32.totalorder %s91, %s92
    %p106 = scmp.eq.s32.totalorder %s16, 1
    %p107 = por %p105, %p106
    %p109 = scmp.ne.s32.totalorder %s92, %s108
    %p110 = scmp.eq.s32.totalorder %s16, 0
    %p111 = por %p109, %p110
    %s112 = ssub.s32 %s10, %s17
    %p113 = scmp.eq.s32.totalorder %s112, 0
    %s115 = sadd.s32 %s114, 1
    %s116 = scalar_select %p113, %s114, %s115
    %p119 = pneg %p113
    %p120 = scmp.eq.s32.totalorder %s10, 1
    %p121 = por %p119, %p120
    %p122 = scmp.ne.s32.totalorder %s114, %s117
    %p123 = scmp.eq.s32.totalorder %s10, 0
    %p124 = por %p122, %p123
    %p125 = scmp.ne.s32.totalorder %s114, %s117
    %p126 = scmp.eq.s32.totalorder %s15, 1
    %p127 = por %p125, %p126
    %p128 = scmp.ne.s32.totalorder %s117, %s118
    %p129 = scmp.eq.s32.totalorder %s15, 0
    %p130 = por %p128, %p129
    %p131 = scmp.ne.s32.totalorder %s117, %s118
    %p132 = scmp.eq.s32.totalorder %s16, 1
    %p133 = por %p131, %p132
    %p135 = scmp.ne.s32.totalorder %s118, %s134
    %p136 = scmp.eq.s32.totalorder %s16, 0
    %p137 = por %p135, %p136
    %p138 = scmp.le.s32.totalorder 1, %s10
    %p139 = scmp.lt.s32.totalorder %s10, 3
    %p140 = pnand %p138, %p139
    %p141 = pneg %p140
    // Predicated region
    $region9: #{_lambda_.13} parent=5 // pred_check
      _
    $region10: #{_lambda_.13} parent=5 // pred_check_branch
      %143 = sbr.rel (%p140) target = $region12
    $region11: #{_lambda_.13} parent=5 // pred_region
      %s144 = ssub.s32 %s10, 1
      // Predicated region
      $region13: #{_lambda_.13} parent=11 // pred_check
        %p145 = pneg %p57
      $region14: #{_lambda_.13} parent=11 // pred_check_branch
        %147 = sbr.rel (%p145) target = $region16
      $region15: #{_lambda_.13} parent=11 // pred_region
        _
      $region16: #{_lambda_.13} parent=11 // pred_fallthru
        _
      // Predicated region
      $region17: #{_lambda_.13} parent=11 // pred_check
        %p148 = pneg %p78
      $region18: #{_lambda_.13} parent=11 // pred_check_branch
        %150 = sbr.rel (%p148) target = $region20
      $region19: #{_lambda_.13} parent=11 // pred_region
        _
      $region20: #{_lambda_.13} parent=11 // pred_fallthru
        _
    $region12: #{_lambda_.13} parent=5 // pred_fallthru
      _
    %p151 = scmp.lt.s32.totalorder %s10, 2
    // Predicated region
    $region21: #{_lambda_.13} parent=5 // pred_check
      %p152 = pneg %p151
    $region22: #{_lambda_.13} parent=5 // pred_check_branch
      %154 = sbr.rel (%p152) target = $region24
    $region23: #{_lambda_.13} parent=5 // pred_region
      // Predicated region
      $region25: #{_lambda_.13} parent=23 // pred_check
        %p155 = pneg %p30
      $region26: #{_lambda_.13} parent=23 // pred_check_branch
        %157 = sbr.rel (%p155) target = $region28
      $region27: #{_lambda_.13} parent=23 // pred_region
        %s158 = smul.u32 2, %s10
        %p159 = scmp.lt.s32.totalorder %s158, 3
        %s160 = scalar_select %p159, %s158, 3
        %s161 = smul.addr %s160, 2
        %s162 = smul.addr %s161, 4
        %s163 = scalar_lea.vmem %s0, %s162
        %s164 = smul.u32 2, %s10
      $region28: #{_lambda_.13} parent=23 // pred_fallthru
        _
      // Predicated region
      $region29: #{_lambda_.13} parent=23 // pred_check
        %p165 = pneg %p98
      $region30: #{_lambda_.13} parent=23 // pred_check_branch
        %167 = sbr.rel (%p165) target = $region32
      $region31: #{_lambda_.13} parent=23 // pred_region
        %s168 = smul.u32 2, %s10
        %p169 = scmp.lt.s32.totalorder %s168, 3
        %s170 = scalar_select %p169, %s168, 3
        %s171 = smul.addr %s170, 4
        %s172 = scalar_lea.vmem %s3, %s171
        %s173 = smul.u32 2, %s10
      $region32: #{_lambda_.13} parent=23 // pred_fallthru
        _
    $region24: #{_lambda_.13} parent=5 // pred_fallthru
      _
    %p174 = scmp.le.s32.totalorder 1, %s10
    %p175 = scmp.lt.s32.totalorder %s10, 3
    %p176 = pnand %p174, %p175
    %p177 = pneg %p176
    // Predicated region
    $region33: #{_lambda_.13} parent=5 // pred_check
      _
    $region34: #{_lambda_.13} parent=5 // pred_check_branch
      %179 = sbr.rel (%p176) target = $region36
    $region35: #{_lambda_.13} parent=5 // pred_region
      %s180 = ssub.s32 %s10, 1
      %s181 = smul.u32 2, %s15
      %p182 = scmp.lt.s32.totalorder %s181, 3
      %s183 = scalar_select %p182, %s181, 3
      %s184 = smul.addr %s183, 2
      %s185 = smul.addr %s184, 4
      %s186 = scalar_lea.vmem %s0, %s185
      %p187 = pneg %p36
      %p188 = pneg %p33
      %p189 = pneg %p57
      %p190 = pneg %p54
      %p191 = pneg %p78
      %p192 = pneg %p75
      %s193 = smul.u32 2, %s15
      %p194 = scmp.lt.s32.totalorder %s193, 3
      %s195 = scalar_select %p194, %s193, 3
      %s196 = smul.addr %s195, 4
      %s197 = scalar_lea.vmem %s3, %s196
      %p198 = pneg %p104
      %p199 = pneg %p101
      %p200 = pneg %p130
      %p201 = pneg %p127
      %s202 = smul.u32 2, %s15
      %p203 = scmp.lt.s32.totalorder %s202, 3
      %s204 = scalar_select %p203, %s202, 3
      %s205 = smul.addr %s204, 4
      %s206 = scalar_lea.vmem %s4, %s205
      %s207 = smul.u32 2, %s15
      %p208 = scmp.lt.s32.totalorder %s207, 3
      %s209 = scalar_select %p208, %s207, 3
      %s210 = smul.addr %s209, 2
      %s211 = smul.addr %s210, 4
      %s212 = scalar_lea.vmem %s0, %s211
      %s213 = smul.u32 2, %s15
      %s214 = smul.u32 2, %s15
      %p215 = scmp.lt.s32.totalorder %s214, 3
      %s216 = scalar_select %p215, %s214, 3
      %s217 = smul.addr %s216, 4
      %s218 = scalar_lea.vmem %s3, %s217
      %s219 = smul.u32 2, %s15
      %s220 = smul.u32 2, %s15
      %p221 = scmp.lt.s32.totalorder %s220, 3
      %s222 = scalar_select %p221, %s220, 3
      %s223 = smul.addr %s222, 4
      %s224 = scalar_lea.vmem %s4, %s223
      %s225 = smul.u32 2, %s15
      %v227 = vld [vmem:[%s212] sm:$0xff]
      %v228 = vld [vmem:[%s212 + $0x8] sm:$0xff]
      %v229 = vld [vmem:[%s1] sm:$0xf]
      %v230 = vld [vmem:[%s1 + $0x4] sm:$0xf]
      %v231 = vld [vmem:[%s1 + $0x8] sm:$0xf]
      %v232 = vld [vmem:[%s1 + $0xc] sm:$0xf]
      %v233 = vld [vmem:[%s1 + $0x10] sm:$0xf]
      %v234 = vld [vmem:[%s1 + $0x14] sm:$0xf]
      %v235 = vld [vmem:[%s1 + $0x18] sm:$0xf]
      %v236 = vld [vmem:[%s1 + $0x1c] sm:$0xf]
      %v237 = vld [vmem:[%s1 + $0x20] sm:$0xf]
      %v238 = vld [vmem:[%s1 + $0x24] sm:$0xf]
      %v239 = vld [vmem:[%s1 + $0x28] sm:$0xf]
      %v240 = vld [vmem:[%s1 + $0x2c] sm:$0xf]
      %v241 = vld [vmem:[%s1 + $0x30] sm:$0xf]
      %v242 = vld [vmem:[%s1 + $0x34] sm:$0xf]
      %v243 = vld [vmem:[%s1 + $0x38] sm:$0xf]
      %v244 = vld [vmem:[%s1 + $0x3c] sm:$0xf]
      %v245 = vld [vmem:[%s1 + $0x40] sm:$0xf]
      %v246 = vld [vmem:[%s1 + $0x44] sm:$0xf]
      %v247 = vld [vmem:[%s1 + $0x48] sm:$0xf]
      %v248 = vld [vmem:[%s1 + $0x4c] sm:$0xf]
      %v249 = vld [vmem:[%s1 + $0x50] sm:$0xf]
      %v250 = vld [vmem:[%s1 + $0x54] sm:$0xf]
      %v251 = vld [vmem:[%s1 + $0x58] sm:$0xf]
      %v252 = vld [vmem:[%s1 + $0x5c] sm:$0xf]
      %v253 = vld [vmem:[%s1 + $0x60] sm:$0xf]
      %v254 = vld [vmem:[%s1 + $0x64] sm:$0xf]
      %v255 = vld [vmem:[%s1 + $0x68] sm:$0xf]
      %v256 = vld [vmem:[%s1 + $0x6c] sm:$0xf]
      %v257 = vld [vmem:[%s1 + $0x70] sm:$0xf]
      %v258 = vld [vmem:[%s1 + $0x74] sm:$0xf]
      %v259 = vld [vmem:[%s1 + $0x78] sm:$0xf]
      %v260 = vld [vmem:[%s1 + $0x7c] sm:$0xf]
      %v261 = vld [vmem:[%s2] sm:$0x1]
      %v263 = vlaneseq
      %v264 = vshrl.u32 %v263, 7
      %v265 = vsub.s32 0, %v264
      %v266 = vrot.slane %v261, %v265
      %v270 = vunpack.c.l.b16 %v227
      %v271 = vunpack.c.h.b16 %v227
      %v272 = vunpack.c.l.b16 %v228
      %v273 = vunpack.c.h.b16 %v228
      %v274 = vpack.c.b16 %v272, %v270
      %v275 = vpack.c.b16 %v273, %v271
      %v310 = vunpack.c.l.b16 %v229
      %v311 = vunpack.c.l.b16 %v230
      %v312 = vunpack.c.l.b16 %v231
      %v313 = vunpack.c.l.b16 %v232
      %v314 = vunpack.c.l.b16 %v233
      %v315 = vunpack.c.l.b16 %v234
      %v316 = vunpack.c.l.b16 %v235
      %v317 = vunpack.c.l.b16 %v236
      %v318 = vunpack.c.l.b16 %v237
      %v319 = vunpack.c.l.b16 %v238
      %v320 = vunpack.c.l.b16 %v239
      %v321 = vunpack.c.l.b16 %v240
      %v322 = vunpack.c.l.b16 %v241
      %v323 = vunpack.c.l.b16 %v242
      %v324 = vunpack.c.l.b16 %v243
      %v325 = vunpack.c.l.b16 %v244
      %v326 = vunpack.c.l.b16 %v245
      %v327 = vunpack.c.l.b16 %v246
      %v328 = vunpack.c.l.b16 %v247
      %v329 = vunpack.c.l.b16 %v248
      %v330 = vunpack.c.l.b16 %v249
      %v331 = vunpack.c.l.b16 %v250
      %v332 = vunpack.c.l.b16 %v251
      %v333 = vunpack.c.l.b16 %v252
      %v334 = vunpack.c.l.b16 %v253
      %v335 = vunpack.c.l.b16 %v254
      %v336 = vunpack.c.l.b16 %v255
      %v337 = vunpack.c.l.b16 %v256
      %v338 = vunpack.c.l.b16 %v257
      %v339 = vunpack.c.l.b16 %v258
      %v340 = vunpack.c.l.b16 %v259
      %v341 = vunpack.c.l.b16 %v260
      %v342 = vpack.c.b16 %v311, %v310
      %v343 = vpack.c.b16 %v313, %v312
      %v344 = vpack.c.b16 %v315, %v314
      %v345 = vpack.c.b16 %v317, %v316
      %v346 = vpack.c.b16 %v319, %v318
      %v347 = vpack.c.b16 %v321, %v320
      %v348 = vpack.c.b16 %v323, %v322
      %v349 = vpack.c.b16 %v325, %v324
      %v350 = vpack.c.b16 %v327, %v326
      %v351 = vpack.c.b16 %v329, %v328
      %v352 = vpack.c.b16 %v331, %v330
      %v353 = vpack.c.b16 %v333, %v332
      %v354 = vpack.c.b16 %v335, %v334
      %v355 = vpack.c.b16 %v337, %v336
      %v356 = vpack.c.b16 %v339, %v338
      %v357 = vpack.c.b16 %v341, %v340
      %374 = vmatprep.subr.bf16.mxu0 0
      %375 = vmatpush1.bf16.msra.mxu0 %v349
      %376 = vmatprep.subr.bf16.mxu0 0
      %377 = vmatpush1.bf16.msra.mxu0 %v348
      %378 = vmatprep.subr.bf16.mxu0 0
      %379 = vmatpush1.bf16.msra.mxu0 %v347
      %380 = vmatprep.subr.bf16.mxu0 0
      %381 = vmatpush1.bf16.msra.mxu0 %v346
      %382 = vmatprep.subr.bf16.mxu0 0
      %383 = vmatpush1.bf16.msra.mxu0 %v345
      %384 = vmatprep.subr.bf16.mxu0 0
      %385 = vmatpush1.bf16.msra.mxu0 %v344
      %386 = vmatprep.subr.bf16.mxu0 0
      %387 = vmatpush1.bf16.msra.mxu0 %v343
      %388 = vmatprep.subr.bf16.mxu0 0
      %389 = vmatpush1.bf16.msra.mxu0 %v342
      %390 = vmatprep.subr.bf16.mxu0 0
      %391 = vmatpush2.bf16.msra.mxu0 %v357
      %392 = vmatprep.subr.bf16.mxu0 0
      %393 = vmatpush2.bf16.msra.mxu0 %v356
      %394 = vmatprep.subr.bf16.mxu0 0
      %395 = vmatpush2.bf16.msra.mxu0 %v355
      %396 = vmatprep.subr.bf16.mxu0 0
      %397 = vmatpush2.bf16.msra.mxu0 %v354
      %398 = vmatprep.subr.bf16.mxu0 0
      %399 = vmatpush2.bf16.msra.mxu0 %v353
      %400 = vmatprep.subr.bf16.mxu0 0
      %401 = vmatpush2.bf16.msra.mxu0 %v352
      %402 = vmatprep.subr.bf16.mxu0 0
      %403 = vmatpush2.bf16.msra.mxu0 %v351
      %404 = vmatprep.subr.bf16.mxu0 0
      %405 = vmatpush2.bf16.msra.mxu0 %v350
      %406 = vmatprep.mubr.bf16.mxu0 %v275
      %407 = vmatmul.mubr.bf16.gmra.mxu0 %v274
      %v408 = vpop.f32.mrf.mxu0
      %v409 = vadd.f32 %v266, %v408
      %v410 = vpop.f32.mrf.mxu0
      %v411 = vpop.f32.mrf.mxu0
      %v412 = vadd.f32 %v266, %v411
      %v413 = vpop.f32.mrf.mxu0
      %414 = vdwg.mxu0
      %v415 = vld [vmem:[%s218] sm:$0xf]
      %v416 = vld [vmem:[%s218 + $0x4] sm:$0xf]
      %v417 = vunpack.c.l.bf16 %v415
      %v418 = vunpack.c.l.bf16 %v416
      %v419 = vadd.f32 %v409, %v417
      %v420 = vadd.f32 %v412, %v418
      %v421 = vmax.f32 %v419, 0.0
      %v422 = vmax.f32 %v420, 0.0
      %v423 = vpack.c.bf16 %v422, %v421
      %v425 = vunpack.c.l.b16 %v423
      %v426 = vunpack.c.h.b16 %v423
      %v427 = vpack.c.b16 %v425, %v425
      %v428 = vpack.c.b16 %v426, %v426
      %431 = vst [vmem:[%s224] sm:$0xf] %v427
      %432 = vst [vmem:[%s224 + $0x4] sm:$0xf] %v428
      %s433 = smul.u32 2, %s15
      %p434 = scmp.lt.s32.totalorder %s433, 3
      %s435 = scalar_select %p434, %s433, 3
      %s436 = smul.addr %s435, 4
      %s437 = scalar_lea.vmem %s4, %s436
      // Predicated region
      $region37: #{_lambda_.13} parent=35 // pred_check
        %p438 = pneg %p127
      $region38: #{_lambda_.13} parent=35 // pred_check_branch
        %440 = sbr.rel (%p438) target = $region40
      $region39: #{_lambda_.13} parent=35 // pred_region
        %s441 = smul.u32 2, %s15
      $region40: #{_lambda_.13} parent=35 // pred_fallthru
        _
    $region36: #{_lambda_.13} parent=5 // pred_fallthru
      _
    %p442 = scmp.le.s32.totalorder 2, %s10
    // Predicated region
    $region41: #{_lambda_.13} parent=5 // pred_check
      %p443 = pneg %p442
    $region42: #{_lambda_.13} parent=5 // pred_check_branch
      %445 = sbr.rel (%p443) target = $region44
    $region43: #{_lambda_.13} parent=5 // pred_region
      %s446 = ssub.s32 %s10, 2
      // Predicated region
      $region45: #{_lambda_.13} parent=43 // pred_check
        %p447 = pneg %p133
      $region46: #{_lambda_.13} parent=43 // pred_check_branch
        %449 = sbr.rel (%p447) target = $region48
      $region47: #{_lambda_.13} parent=43 // pred_region
        %s450 = smul.u32 2, %s16
        %p451 = scmp.lt.s32.totalorder %s450, 3
        %s452 = scalar_select %p451, %s450, 3
        %s453 = smul.addr %s452, 4
        %s454 = scalar_lea.vmem %s4, %s453
      $region48: #{_lambda_.13} parent=43 // pred_fallthru
        _
    $region44: #{_lambda_.13} parent=5 // pred_fallthru
      _
  $region6: #{_lambda_.13} parent=0 // loop_footer
    %s14 = sadd.s32 1, %s10
  $region7: #{_lambda_.13} parent=0 // loop_footer_branch
    %9 = sbr.rel target = $region3
  $region8: #{_lambda_.13} parent=0 // loop_exit
    _

// kernel: _lambda_.14
$region0: #{_lambda_.14}
  #allocation0 [shape = 'u32[]', space=smem, size = 0x4, offset = 0x4, fixed_abs, tag = 'smem constant byte address 0x4 - core index']
  #allocation1 [shape = 'u32[144,128]{1,0:T(1,128)}', space=vmem, size = 0x12000, scoped, tag = 'internal scratch']
  %s0 = inlined_call_operand.vmem [shape: bf16[16,256], index: 0, kind: input, shape index: {}]
  %s1 = inlined_call_operand.vmem [shape: bf16[256,256], index: 1, kind: input, shape index: {}]
  %s2 = inlined_call_operand.vmem [shape: f32[1,256], index: 2, kind: input, shape index: {}]
  %s3 = inlined_call_operand.vmem [shape: bf16[16,256], index: 3, kind: output, shape index: {}]
  %s4 = sld [smem:[#allocation0]]
  $region22: #{_lambda_.14} parent=0
    _
  %s6 = ssub.s32 1, %s4
  %s7 = scalar_select 0, %s6, %s4
  // Predicated region
  $region2: #{_lambda_.14} parent=0 // pred_check
    _
  $region3: #{_lambda_.14} parent=0 // pred_check_branch
    %9 = sbr.rel (0) target = $region5
  $region4: #{_lambda_.14} parent=0 // pred_region
    _
  $region5: #{_lambda_.14} parent=0 // pred_fallthru
    _
  // Predicated region
  $region6: #{_lambda_.14} parent=0 // pred_check
    _
  $region7: #{_lambda_.14} parent=0 // pred_check_branch
    %11 = sbr.rel (0) target = $region9
  $region8: #{_lambda_.14} parent=0 // pred_region
    _
  $region9: #{_lambda_.14} parent=0 // pred_fallthru
    _
  // Predicated region
  $region10: #{_lambda_.14} parent=0 // pred_check
    _
  $region11: #{_lambda_.14} parent=0 // pred_check_branch
    %13 = sbr.rel (0) target = $region13
  $region12: #{_lambda_.14} parent=0 // pred_region
    _
  $region13: #{_lambda_.14} parent=0 // pred_fallthru
    _
  %v14 = vld [vmem:[%s0] sm:$0xff]
  %v15 = vld [vmem:[%s0 + $0x8] sm:$0xff]
  %v16 = vld [vmem:[%s1] sm:$0xff]
  %v17 = vld [vmem:[%s1 + $0x8] sm:$0xff]
  %v18 = vld [vmem:[%s1 + $0x10] sm:$0xff]
  %v19 = vld [vmem:[%s1 + $0x18] sm:$0xff]
  %v20 = vld [vmem:[%s1 + $0x20] sm:$0xff]
  %v21 = vld [vmem:[%s1 + $0x28] sm:$0xff]
  %v22 = vld [vmem:[%s1 + $0x30] sm:$0xff]
  %v23 = vld [vmem:[%s1 + $0x38] sm:$0xff]
  %v24 = vld [vmem:[%s1 + $0x40] sm:$0xff]
  %v25 = vld [vmem:[%s1 + $0x48] sm:$0xff]
  %v26 = vld [vmem:[%s1 + $0x50] sm:$0xff]
  %v27 = vld [vmem:[%s1 + $0x58] sm:$0xff]
  %v28 = vld [vmem:[%s1 + $0x60] sm:$0xff]
  %v29 = vld [vmem:[%s1 + $0x68] sm:$0xff]
  %v30 = vld [vmem:[%s1 + $0x70] sm:$0xff]
  %v31 = vld [vmem:[%s1 + $0x78] sm:$0xff]
  %v32 = vld [vmem:[%s1 + $0x80] sm:$0xff]
  %v33 = vld [vmem:[%s1 + $0x88] sm:$0xff]
  %v34 = vld [vmem:[%s1 + $0x90] sm:$0xff]
  %v35 = vld [vmem:[%s1 + $0x98] sm:$0xff]
  %v36 = vld [vmem:[%s1 + $0xa0] sm:$0xff]
  %v37 = vld [vmem:[%s1 + $0xa8] sm:$0xff]
  %v38 = vld [vmem:[%s1 + $0xb0] sm:$0xff]
  %v39 = vld [vmem:[%s1 + $0xb8] sm:$0xff]
  %v40 = vld [vmem:[%s1 + $0xc0] sm:$0xff]
  %v41 = vld [vmem:[%s1 + $0xc8] sm:$0xff]
  %v42 = vld [vmem:[%s1 + $0xd0] sm:$0xff]
  %v43 = vld [vmem:[%s1 + $0xd8] sm:$0xff]
  %v44 = vld [vmem:[%s1 + $0xe0] sm:$0xff]
  %v45 = vld [vmem:[%s1 + $0xe8] sm:$0xff]
  %v46 = vld [vmem:[%s1 + $0xf0] sm:$0xff]
  %v47 = vld [vmem:[%s1 + $0xf8] sm:$0xff]
  %v48 = vld [vmem:[%s2] sm:$0x3]
  %v50 = vlaneseq
  %v51 = vshrl.u32 %v50, 7
  %v52 = vsub.s32 0, %v51
  %v53 = vrot.slane %v48, %v52
  %v54 = vlaneseq
  %v55 = vshrl.u32 %v54, 7
  %v56 = vsub.s32 1, %v55
  %v57 = vrot.slane %v48, %v56
  %v62 = vunpack.c.l.b16 %v14
  %v63 = vunpack.c.h.b16 %v14
  %v64 = vunpack.c.l.b16 %v15
  %v65 = vunpack.c.h.b16 %v15
  %v66 = vpack.c.b16 %v64, %v62
  %v67 = vpack.c.b16 %v65, %v63
  %v102 = vunpack.c.l.b16 %v16
  %v103 = vunpack.c.h.b16 %v16
  %v104 = vunpack.c.l.b16 %v17
  %v105 = vunpack.c.h.b16 %v17
  %v106 = vunpack.c.l.b16 %v18
  %v107 = vunpack.c.h.b16 %v18
  %v108 = vunpack.c.l.b16 %v19
  %v109 = vunpack.c.h.b16 %v19
  %v110 = vunpack.c.l.b16 %v20
  %v111 = vunpack.c.h.b16 %v20
  %v112 = vunpack.c.l.b16 %v21
  %v113 = vunpack.c.h.b16 %v21
  %v114 = vunpack.c.l.b16 %v22
  %v115 = vunpack.c.h.b16 %v22
  %v116 = vunpack.c.l.b16 %v23
  %v117 = vunpack.c.h.b16 %v23
  %v118 = vunpack.c.l.b16 %v24
  %v119 = vunpack.c.h.b16 %v24
  %v120 = vunpack.c.l.b16 %v25
  %v121 = vunpack.c.h.b16 %v25
  %v122 = vunpack.c.l.b16 %v26
  %v123 = vunpack.c.h.b16 %v26
  %v124 = vunpack.c.l.b16 %v27
  %v125 = vunpack.c.h.b16 %v27
  %v126 = vunpack.c.l.b16 %v28
  %v127 = vunpack.c.h.b16 %v28
  %v128 = vunpack.c.l.b16 %v29
  %v129 = vunpack.c.h.b16 %v29
  %v130 = vunpack.c.l.b16 %v30
  %v131 = vunpack.c.h.b16 %v30
  %v132 = vunpack.c.l.b16 %v31
  %v133 = vunpack.c.h.b16 %v31
  %v134 = vunpack.c.l.b16 %v32
  %v135 = vunpack.c.h.b16 %v32
  %v136 = vunpack.c.l.b16 %v33
  %v137 = vunpack.c.h.b16 %v33
  %v138 = vunpack.c.l.b16 %v34
  %v139 = vunpack.c.h.b16 %v34
  %v140 = vunpack.c.l.b16 %v35
  %v141 = vunpack.c.h.b16 %v35
  %v142 = vunpack.c.l.b16 %v36
  %v143 = vunpack.c.h.b16 %v36
  %v144 = vunpack.c.l.b16 %v37
  %v145 = vunpack.c.h.b16 %v37
  %v146 = vunpack.c.l.b16 %v38
  %v147 = vunpack.c.h.b16 %v38
  %v148 = vunpack.c.l.b16 %v39
  %v149 = vunpack.c.h.b16 %v39
  %v150 = vunpack.c.l.b16 %v40
  %v151 = vunpack.c.h.b16 %v40
  %v152 = vunpack.c.l.b16 %v41
  %v153 = vunpack.c.h.b16 %v41
  %v154 = vunpack.c.l.b16 %v42
  %v155 = vunpack.c.h.b16 %v42
  %v156 = vunpack.c.l.b16 %v43
  %v157 = vunpack.c.h.b16 %v43
  %v158 = vunpack.c.l.b16 %v44
  %v159 = vunpack.c.h.b16 %v44
  %v160 = vunpack.c.l.b16 %v45
  %v161 = vunpack.c.h.b16 %v45
  %v162 = vunpack.c.l.b16 %v46
  %v163 = vunpack.c.h.b16 %v46
  %v164 = vunpack.c.l.b16 %v47
  %v165 = vunpack.c.h.b16 %v47
  %v166 = vpack.c.b16 %v104, %v102
  %v167 = vpack.c.b16 %v105, %v103
  %v168 = vpack.c.b16 %v108, %v106
  %v169 = vpack.c.b16 %v109, %v107
  %v170 = vpack.c.b16 %v112, %v110
  %v171 = vpack.c.b16 %v113, %v111
  %v172 = vpack.c.b16 %v116, %v114
  %v173 = vpack.c.b16 %v117, %v115
  %v174 = vpack.c.b16 %v120, %v118
  %v175 = vpack.c.b16 %v121, %v119
  %v176 = vpack.c.b16 %v124, %v122
  %v177 = vpack.c.b16 %v125, %v123
  %v178 = vpack.c.b16 %v128, %v126
  %v179 = vpack.c.b16 %v129, %v127
  %v180 = vpack.c.b16 %v132, %v130
  %v181 = vpack.c.b16 %v133, %v131
  %v182 = vpack.c.b16 %v136, %v134
  %v183 = vpack.c.b16 %v137, %v135
  %v184 = vpack.c.b16 %v140, %v138
  %v185 = vpack.c.b16 %v141, %v139
  %v186 = vpack.c.b16 %v144, %v142
  %v187 = vpack.c.b16 %v145, %v143
  %v188 = vpack.c.b16 %v148, %v146
  %v189 = vpack.c.b16 %v149, %v147
  %v190 = vpack.c.b16 %v152, %v150
  %v191 = vpack.c.b16 %v153, %v151
  %v192 = vpack.c.b16 %v156, %v154
  %v193 = vpack.c.b16 %v157, %v155
  %v194 = vpack.c.b16 %v160, %v158
  %v195 = vpack.c.b16 %v161, %v159
  %v196 = vpack.c.b16 %v164, %v162
  %v197 = vpack.c.b16 %v165, %v163
  %230 = vmatprep.subr.bf16.mxu0 %v181
  %231 = vmatpush1.bf16.msra.mxu0 %v180
  %232 = vmatprep.subr.bf16.mxu0 %v179
  %233 = vmatpush1.bf16.msra.mxu0 %v178
  %234 = vmatprep.subr.bf16.mxu0 %v177
  %235 = vmatpush1.bf16.msra.mxu0 %v176
  %236 = vmatprep.subr.bf16.mxu0 %v175
  %237 = vmatpush1.bf16.msra.mxu0 %v174
  %238 = vmatprep.subr.bf16.mxu0 %v173
  %239 = vmatpush1.bf16.msra.mxu0 %v172
  %240 = vmatprep.subr.bf16.mxu0 %v171
  %241 = vmatpush1.bf16.msra.mxu0 %v170
  %242 = vmatprep.subr.bf16.mxu0 %v169
  %243 = vmatpush1.bf16.msra.mxu0 %v168
  %244 = vmatprep.subr.bf16.mxu0 %v167
  %245 = vmatpush1.bf16.msra.mxu0 %v166
  %246 = vmatprep.subr.bf16.mxu0 %v197
  %247 = vmatpush2.bf16.msra.mxu0 %v196
  %248 = vmatprep.subr.bf16.mxu0 %v195
  %249 = vmatpush2.bf16.msra.mxu0 %v194
  %250 = vmatprep.subr.bf16.mxu0 %v193
  %251 = vmatpush2.bf16.msra.mxu0 %v192
  %252 = vmatprep.subr.bf16.mxu0 %v191
  %253 = vmatpush2.bf16.msra.mxu0 %v190
  %254 = vmatprep.subr.bf16.mxu0 %v189
  %255 = vmatpush2.bf16.msra.mxu0 %v188
  %256 = vmatprep.subr.bf16.mxu0 %v187
  %257 = vmatpush2.bf16.msra.mxu0 %v186
  %258 = vmatprep.subr.bf16.mxu0 %v185
  %259 = vmatpush2.bf16.msra.mxu0 %v184
  %260 = vmatprep.subr.bf16.mxu0 %v183
  %261 = vmatpush2.bf16.msra.mxu0 %v182
  %262 = vmatprep.mubr.bf16.mxu0 %v67
  %263 = vmatmul.mubr.bf16.gmra.mxu0 %v66
  %v264 = vpop.f32.mrf.mxu0
  %v265 = vadd.f32 %v53, %v264
  %v266 = vpop.f32.mrf.mxu0
  %v267 = vadd.f32 %v57, %v266
  %v268 = vpop.f32.mrf.mxu0
  %v269 = vadd.f32 %v53, %v268
  %v270 = vpop.f32.mrf.mxu0
  %v271 = vadd.f32 %v57, %v270
  %272 = vdwg.mxu0
  %v273 = vlaneseq
  %v274 = vand.u32 %v273, 127
  %v275 = vadd.s32 %v274, 128
  %vm276 = vcmp.lt.s32.totalorder %v274, 128
  %vm277 = vcmp.lt.s32.totalorder %v275, 128
  %v278 = vmax.f32 %v265, 0.0
  %v279 = vmax.f32 %v267, 0.0
  %v280 = vmax.f32 %v269, 0.0
  %v281 = vmax.f32 %v271, 0.0
  %v282 = vsel %vm276, %v278, %v265
  %v283 = vsel %vm277, %v279, %v267
  %v284 = vsel %vm276, %v280, %v269
  %v285 = vsel %vm277, %v281, %v271
  %v286 = vpack.c.bf16 %v284, %v282
  %v287 = vpack.c.bf16 %v285, %v283
  %v290 = vunpack.c.l.b16 %v286
  %v291 = vunpack.c.l.b16 %v287
  %v292 = vunpack.c.h.b16 %v286
  %v293 = vunpack.c.h.b16 %v287
  %v294 = vpack.c.b16 %v291, %v290
  %v295 = vpack.c.b16 %v293, %v292
  %298 = vst [vmem:[%s3] sm:$0xff] %v294
  %299 = vst [vmem:[%s3 + $0x8] sm:$0xff] %v295
  // Predicated region
  $region14: #{_lambda_.14} parent=0 // pred_check
    _
  $region15: #{_lambda_.14} parent=0 // pred_check_branch
    %301 = sbr.rel (0) target = $region17
  $region16: #{_lambda_.14} parent=0 // pred_region
    _
  $region17: #{_lambda_.14} parent=0 // pred_fallthru
    _
  // Predicated region
  $region18: #{_lambda_.14} parent=0 // pred_check
    _
  $region19: #{_lambda_.14} parent=0 // pred_check_branch
    %303 = sbr.rel (0) target = $region21
  $region20: #{_lambda_.14} parent=0 // pred_region
    _
  $region21: #{_lambda_.14} parent=0 // pred_fallthru
    _

// kernel: _lambda_.15
$region0: #{_lambda_.15}
  #allocation0 [shape = 'u32[]', space=smem, size = 0x4, offset = 0x4, fixed_abs, tag = 'smem constant byte address 0x4 - core index']
  #allocation1 [shape = 'u32[144,128]{1,0:T(1,128)}', space=vmem, size = 0x12000, scoped, tag = 'internal scratch']
  %s0 = inlined_call_operand.vmem [shape: bf16[16,384], index: 0, kind: input, shape index: {}]
  %s1 = inlined_call_operand.vmem [shape: bf16[384,128], index: 1, kind: input, shape index: {}]
  %s2 = inlined_call_operand.vmem [shape: f32[1,128], index: 2, kind: input, shape index: {}]
  %s3 = inlined_call_operand.vmem [shape: bf16[16,128], index: 3, kind: input, shape index: {}]
  %s4 = inlined_call_operand.vmem [shape: bf16[16,128], index: 4, kind: output, shape index: {}]
  %s5 = sld [smem:[#allocation0]]
  $region26: #{_lambda_.15} parent=0
    _
  %s7 = ssub.s32 1, %s5
  %s8 = scalar_select 0, %s7, %s5
  // Predicated region
  $region2: #{_lambda_.15} parent=0 // pred_check
    _
  $region3: #{_lambda_.15} parent=0 // pred_check_branch
    %10 = sbr.rel (0) target = $region5
  $region4: #{_lambda_.15} parent=0 // pred_region
    _
  $region5: #{_lambda_.15} parent=0 // pred_fallthru
    _
  // Predicated region
  $region6: #{_lambda_.15} parent=0 // pred_check
    _
  $region7: #{_lambda_.15} parent=0 // pred_check_branch
    %12 = sbr.rel (0) target = $region9
  $region8: #{_lambda_.15} parent=0 // pred_region
    _
  $region9: #{_lambda_.15} parent=0 // pred_fallthru
    _
  // Predicated region
  $region10: #{_lambda_.15} parent=0 // pred_check
    _
  $region11: #{_lambda_.15} parent=0 // pred_check_branch
    %14 = sbr.rel (0) target = $region13
  $region12: #{_lambda_.15} parent=0 // pred_region
    _
  $region13: #{_lambda_.15} parent=0 // pred_fallthru
    _
  // Predicated region
  $region14: #{_lambda_.15} parent=0 // pred_check
    _
  $region15: #{_lambda_.15} parent=0 // pred_check_branch
    %16 = sbr.rel (0) target = $region17
  $region16: #{_lambda_.15} parent=0 // pred_region
    _
  $region17: #{_lambda_.15} parent=0 // pred_fallthru
    _
  %v18 = vld [vmem:[%s0] sm:$0xff]
  %v19 = vld [vmem:[%s0 + $0x8] sm:$0xf]
  %v20 = vld [vmem:[%s0 + $0xc] sm:$0xff]
  %v21 = vld [vmem:[%s0 + $0x14] sm:$0xf]
  %v22 = vld [vmem:[%s1] sm:$0xf]
  %v23 = vld [vmem:[%s1 + $0x4] sm:$0xf]
  %v24 = vld [vmem:[%s1 + $0x8] sm:$0xf]
  %v25 = vld [vmem:[%s1 + $0xc] sm:$0xf]
  %v26 = vld [vmem:[%s1 + $0x10] sm:$0xf]
  %v27 = vld [vmem:[%s1 + $0x14] sm:$0xf]
  %v28 = vld [vmem:[%s1 + $0x18] sm:$0xf]
  %v29 = vld [vmem:[%s1 + $0x1c] sm:$0xf]
  %v30 = vld [vmem:[%s1 + $0x20] sm:$0xf]
  %v31 = vld [vmem:[%s1 + $0x24] sm:$0xf]
  %v32 = vld [vmem:[%s1 + $0x28] sm:$0xf]
  %v33 = vld [vmem:[%s1 + $0x2c] sm:$0xf]
  %v34 = vld [vmem:[%s1 + $0x30] sm:$0xf]
  %v35 = vld [vmem:[%s1 + $0x34] sm:$0xf]
  %v36 = vld [vmem:[%s1 + $0x38] sm:$0xf]
  %v37 = vld [vmem:[%s1 + $0x3c] sm:$0xf]
  %v38 = vld [vmem:[%s1 + $0x40] sm:$0xf]
  %v39 = vld [vmem:[%s1 + $0x44] sm:$0xf]
  %v40 = vld [vmem:[%s1 + $0x48] sm:$0xf]
  %v41 = vld [vmem:[%s1 + $0x4c] sm:$0xf]
  %v42 = vld [vmem:[%s1 + $0x50] sm:$0xf]
  %v43 = vld [vmem:[%s1 + $0x54] sm:$0xf]
  %v44 = vld [vmem:[%s1 + $0x58] sm:$0xf]
  %v45 = vld [vmem:[%s1 + $0x5c] sm:$0xf]
  %v46 = vld [vmem:[%s1 + $0x60] sm:$0xf]
  %v47 = vld [vmem:[%s1 + $0x64] sm:$0xf]
  %v48 = vld [vmem:[%s1 + $0x68] sm:$0xf]
  %v49 = vld [vmem:[%s1 + $0x6c] sm:$0xf]
  %v50 = vld [vmem:[%s1 + $0x70] sm:$0xf]
  %v51 = vld [vmem:[%s1 + $0x74] sm:$0xf]
  %v52 = vld [vmem:[%s1 + $0x78] sm:$0xf]
  %v53 = vld [vmem:[%s1 + $0x7c] sm:$0xf]
  %v54 = vld [vmem:[%s1 + $0x80] sm:$0xf]
  %v55 = vld [vmem:[%s1 + $0x84] sm:$0xf]
  %v56 = vld [vmem:[%s1 + $0x88] sm:$0xf]
  %v57 = vld [vmem:[%s1 + $0x8c] sm:$0xf]
  %v58 = vld [vmem:[%s1 + $0x90] sm:$0xf]
  %v59 = vld [vmem:[%s1 + $0x94] sm:$0xf]
  %v60 = vld [vmem:[%s1 + $0x98] sm:$0xf]
  %v61 = vld [vmem:[%s1 + $0x9c] sm:$0xf]
  %v62 = vld [vmem:[%s1 + $0xa0] sm:$0xf]
  %v63 = vld [vmem:[%s1 + $0xa4] sm:$0xf]
  %v64 = vld [vmem:[%s1 + $0xa8] sm:$0xf]
  %v65 = vld [vmem:[%s1 + $0xac] sm:$0xf]
  %v66 = vld [vmem:[%s1 + $0xb0] sm:$0xf]
  %v67 = vld [vmem:[%s1 + $0xb4] sm:$0xf]
  %v68 = vld [vmem:[%s1 + $0xb8] sm:$0xf]
  %v69 = vld [vmem:[%s1 + $0xbc] sm:$0xf]
  %v70 = vld [vmem:[%s2] sm:$0x1]
  %v72 = vlaneseq
  %v73 = vshrl.u32 %v72, 7
  %v74 = vsub.s32 0, %v73
  %v75 = vrot.slane %v70, %v74
  %v81 = vunpack.c.l.b16 %v18
  %v82 = vunpack.c.h.b16 %v18
  %v83 = vunpack.c.l.b16 %v19
  %v84 = vunpack.c.l.b16 %v20
  %v85 = vunpack.c.h.b16 %v20
  %v86 = vunpack.c.l.b16 %v21
  %v87 = vpack.c.b16 %v84, %v81
  %v88 = vpack.c.b16 %v85, %v82
  %v89 = vpack.c.b16 %v86, %v83
  %v141 = vunpack.c.l.b16 %v22
  %v142 = vunpack.c.l.b16 %v23
  %v143 = vunpack.c.l.b16 %v24
  %v144 = vunpack.c.l.b16 %v25
  %v145 = vunpack.c.l.b16 %v26
  %v146 = vunpack.c.l.b16 %v27
  %v147 = vunpack.c.l.b16 %v28
  %v148 = vunpack.c.l.b16 %v29
  %v149 = vunpack.c.l.b16 %v30
  %v150 = vunpack.c.l.b16 %v31
  %v151 = vunpack.c.l.b16 %v32
  %v152 = vunpack.c.l.b16 %v33
  %v153 = vunpack.c.l.b16 %v34
  %v154 = vunpack.c.l.b16 %v35
  %v155 = vunpack.c.l.b16 %v36
  %v156 = vunpack.c.l.b16 %v37
  %v157 = vunpack.c.l.b16 %v38
  %v158 = vunpack.c.l.b16 %v39
  %v159 = vunpack.c.l.b16 %v40
  %v160 = vunpack.c.l.b16 %v41
  %v161 = vunpack.c.l.b16 %v42
  %v162 = vunpack.c.l.b16 %v43
  %v163 = vunpack.c.l.b16 %v44
  %v164 = vunpack.c.l.b16 %v45
  %v165 = vunpack.c.l.b16 %v46
  %v166 = vunpack.c.l.b16 %v47
  %v167 = vunpack.c.l.b16 %v48
  %v168 = vunpack.c.l.b16 %v49
  %v169 = vunpack.c.l.b16 %v50
  %v170 = vunpack.c.l.b16 %v51
  %v171 = vunpack.c.l.b16 %v52
  %v172 = vunpack.c.l.b16 %v53
  %v173 = vunpack.c.l.b16 %v54
  %v174 = vunpack.c.l.b16 %v55
  %v175 = vunpack.c.l.b16 %v56
  %v176 = vunpack.c.l.b16 %v57
  %v177 = vunpack.c.l.b16 %v58
  %v178 = vunpack.c.l.b16 %v59
  %v179 = vunpack.c.l.b16 %v60
  %v180 = vunpack.c.l.b16 %v61
  %v181 = vunpack.c.l.b16 %v62
  %v182 = vunpack.c.l.b16 %v63
  %v183 = vunpack.c.l.b16 %v64
  %v184 = vunpack.c.l.b16 %v65
  %v185 = vunpack.c.l.b16 %v66
  %v186 = vunpack.c.l.b16 %v67
  %v187 = vunpack.c.l.b16 %v68
  %v188 = vunpack.c.l.b16 %v69
  %v189 = vpack.c.b16 %v142, %v141
  %v190 = vpack.c.b16 %v144, %v143
  %v191 = vpack.c.b16 %v146, %v145
  %v192 = vpack.c.b16 %v148, %v147
  %v193 = vpack.c.b16 %v150, %v149
  %v194 = vpack.c.b16 %v152, %v151
  %v195 = vpack.c.b16 %v154, %v153
  %v196 = vpack.c.b16 %v156, %v155
  %v197 = vpack.c.b16 %v158, %v157
  %v198 = vpack.c.b16 %v160, %v159
  %v199 = vpack.c.b16 %v162, %v161
  %v200 = vpack.c.b16 %v164, %v163
  %v201 = vpack.c.b16 %v166, %v165
  %v202 = vpack.c.b16 %v168, %v167
  %v203 = vpack.c.b16 %v170, %v169
  %v204 = vpack.c.b16 %v172, %v171
  %v205 = vpack.c.b16 %v174, %v173
  %v206 = vpack.c.b16 %v176, %v175
  %v207 = vpack.c.b16 %v178, %v177
  %v208 = vpack.c.b16 %v180, %v179
  %v209 = vpack.c.b16 %v182, %v181
  %v210 = vpack.c.b16 %v184, %v183
  %v211 = vpack.c.b16 %v186, %v185
  %v212 = vpack.c.b16 %v188, %v187
  %237 = vmatprep.subr.bf16.mxu0 0
  %238 = vmatpush1.bf16.msra.mxu0 %v196
  %239 = vmatprep.subr.bf16.mxu0 0
  %240 = vmatpush1.bf16.msra.mxu0 %v195
  %241 = vmatprep.subr.bf16.mxu0 0
  %242 = vmatpush1.bf16.msra.mxu0 %v194
  %243 = vmatprep.subr.bf16.mxu0 0
  %244 = vmatpush1.bf16.msra.mxu0 %v193
  %245 = vmatprep.subr.bf16.mxu0 0
  %246 = vmatpush1.bf16.msra.mxu0 %v192
  %247 = vmatprep.subr.bf16.mxu0 0
  %248 = vmatpush1.bf16.msra.mxu0 %v191
  %249 = vmatprep.subr.bf16.mxu0 0
  %250 = vmatpush1.bf16.msra.mxu0 %v190
  %251 = vmatprep.subr.bf16.mxu0 0
  %252 = vmatpush1.bf16.msra.mxu0 %v189
  %253 = vmatprep.subr.bf16.mxu0 0
  %254 = vmatpush2.bf16.msra.mxu0 %v204
  %255 = vmatprep.subr.bf16.mxu0 0
  %256 = vmatpush2.bf16.msra.mxu0 %v203
  %257 = vmatprep.subr.bf16.mxu0 0
  %258 = vmatpush2.bf16.msra.mxu0 %v202
  %259 = vmatprep.subr.bf16.mxu0 0
  %260 = vmatpush2.bf16.msra.mxu0 %v201
  %261 = vmatprep.subr.bf16.mxu0 0
  %262 = vmatpush2.bf16.msra.mxu0 %v200
  %263 = vmatprep.subr.bf16.mxu0 0
  %264 = vmatpush2.bf16.msra.mxu0 %v199
  %265 = vmatprep.subr.bf16.mxu0 0
  %266 = vmatpush2.bf16.msra.mxu0 %v198
  %267 = vmatprep.subr.bf16.mxu0 0
  %268 = vmatpush2.bf16.msra.mxu0 %v197
  %269 = vmatprep.mubr.bf16.mxu0 %v88
  %270 = vmatmul.mubr.bf16.gmra.mxu0 %v87
  %v271 = vpop.f32.mrf.mxu0
  %v272 = vadd.f32 %v75, %v271
  %v273 = vpop.f32.mrf.mxu0
  %v274 = vpop.f32.mrf.mxu0
  %v275 = vadd.f32 %v75, %v274
  %v276 = vpop.f32.mrf.mxu0
  %277 = vdwg.mxu0
  %278 = vmatprep.subr.bf16.mxu0 0
  %279 = vmatpush1.bf16.msra.mxu0 %v212
  %280 = vmatprep.subr.bf16.mxu0 0
  %281 = vmatpush1.bf16.msra.mxu0 %v211
  %282 = vmatprep.subr.bf16.mxu0 0
  %283 = vmatpush1.bf16.msra.mxu0 %v210
  %284 = vmatprep.subr.bf16.mxu0 0
  %285 = vmatpush1.bf16.msra.mxu0 %v209
  %286 = vmatprep.subr.bf16.mxu0 0
  %287 = vmatpush1.bf16.msra.mxu0 %v208
  %288 = vmatprep.subr.bf16.mxu0 0
  %289 = vmatpush1.bf16.msra.mxu0 %v207
  %290 = vmatprep.subr.bf16.mxu0 0
  %291 = vmatpush1.bf16.msra.mxu0 %v206
  %292 = vmatprep.subr.bf16.mxu0 0
  %293 = vmatpush1.bf16.msra.mxu0 %v205
  %294 = vmatprep.subr.bf16.mxu0 0
  %295 = vmatpush2.bf16.msra.mxu0 0
  %296 = vmatprep.subr.bf16.mxu0 0
  %297 = vmatpush2.bf16.msra.mxu0 0
  %298 = vmatprep.subr.bf16.mxu0 0
  %299 = vmatpush2.bf16.msra.mxu0 0
  %300 = vmatprep.subr.bf16.mxu0 0
  %301 = vmatpush2.bf16.msra.mxu0 0
  %302 = vmatprep.subr.bf16.mxu0 0
  %303 = vmatpush2.bf16.msra.mxu0 0
  %304 = vmatprep.subr.bf16.mxu0 0
  %305 = vmatpush2.bf16.msra.mxu0 0
  %306 = vmatprep.subr.bf16.mxu0 0
  %307 = vmatpush2.bf16.msra.mxu0 0
  %308 = vmatprep.subr.bf16.mxu0 0
  %309 = vmatpush2.bf16.msra.mxu0 0
  %310 = vmatprep.mubr.bf16.mxu0 0
  %311 = vmatmul.mubr.bf16.gmra.mxu0 %v89
  %v312 = vpop.f32.mrf.mxu0
  %v313 = vadd.f32 %v272, %v312
  %v314 = vpop.f32.mrf.mxu0
  %v315 = vpop.f32.mrf.mxu0
  %v316 = vadd.f32 %v275, %v315
  %v317 = vpop.f32.mrf.mxu0
  %318 = vdwg.mxu0
  %v319 = vld [vmem:[%s3] sm:$0xf]
  %v320 = vld [vmem:[%s3 + $0x4] sm:$0xf]
  %v321 = vunpack.c.l.bf16 %v319
  %v322 = vunpack.c.l.bf16 %v320
  %v323 = vadd.f32 %v313, %v321
  %v324 = vadd.f32 %v316, %v322
  %v325 = vmax.f32 %v323, 0.0
  %v326 = vmax.f32 %v324, 0.0
  %v327 = vpack.c.bf16 %v326, %v325
  %v329 = vunpack.c.l.b16 %v327
  %v330 = vunpack.c.h.b16 %v327
  %v331 = vpack.c.b16 %v329, %v329
  %v332 = vpack.c.b16 %v330, %v330
  %335 = vst [vmem:[%s4] sm:$0xf] %v331
  %336 = vst [vmem:[%s4 + $0x4] sm:$0xf] %v332
  // Predicated region
  $region18: #{_lambda_.15} parent=0 // pred_check
    _
  $region19: #{_lambda_.15} parent=0 // pred_check_branch
    %338 = sbr.rel (0) target = $region21
  $region20: #{_lambda_.15} parent=0 // pred_region
    _
  $region21: #{_lambda_.15} parent=0 // pred_fallthru
    _
  // Predicated region
  $region22: #{_lambda_.15} parent=0 // pred_check
    _
  $region23: #{_lambda_.15} parent=0 // pred_check_branch
    %340 = sbr.rel (0) target = $region25
  $region24: #{_lambda_.15} parent=0 // pred_region
    _
  $region25: #{_lambda_.15} parent=0 // pred_fallthru
    _

// kernel: _lambda_.16
$region0: #{_lambda_.16}
  #allocation0 [shape = 'u32[]', space=smem, size = 0x4, offset = 0x4, fixed_abs, tag = 'smem constant byte address 0x4 - core index']
  #allocation1 [shape = 'u32[144,128]{1,0:T(1,128)}', space=vmem, size = 0x12000, scoped, tag = 'internal scratch']
  %s0 = inlined_call_operand.vmem [shape: bf16[16,384], index: 0, kind: input, shape index: {}]
  %s1 = inlined_call_operand.vmem [shape: bf16[384,256], index: 1, kind: input, shape index: {}]
  %s2 = inlined_call_operand.vmem [shape: f32[1,256], index: 2, kind: input, shape index: {}]
  %s3 = inlined_call_operand.vmem [shape: bf16[16,256], index: 3, kind: output, shape index: {}]
  %s4 = sld [smem:[#allocation0]]
  $region22: #{_lambda_.16} parent=0
    _
  %s6 = ssub.s32 1, %s4
  %s7 = scalar_select 0, %s6, %s4
  // Predicated region
  $region2: #{_lambda_.16} parent=0 // pred_check
    _
  $region3: #{_lambda_.16} parent=0 // pred_check_branch
    %9 = sbr.rel (0) target = $region5
  $region4: #{_lambda_.16} parent=0 // pred_region
    _
  $region5: #{_lambda_.16} parent=0 // pred_fallthru
    _
  // Predicated region
  $region6: #{_lambda_.16} parent=0 // pred_check
    _
  $region7: #{_lambda_.16} parent=0 // pred_check_branch
    %11 = sbr.rel (0) target = $region9
  $region8: #{_lambda_.16} parent=0 // pred_region
    _
  $region9: #{_lambda_.16} parent=0 // pred_fallthru
    _
  // Predicated region
  $region10: #{_lambda_.16} parent=0 // pred_check
    _
  $region11: #{_lambda_.16} parent=0 // pred_check_branch
    %13 = sbr.rel (0) target = $region13
  $region12: #{_lambda_.16} parent=0 // pred_region
    _
  $region13: #{_lambda_.16} parent=0 // pred_fallthru
    _
  %v15 = vld [vmem:[%s0] sm:$0xff]
  %v16 = vld [vmem:[%s0 + $0x8] sm:$0xf]
  %v17 = vld [vmem:[%s0 + $0xc] sm:$0xff]
  %v18 = vld [vmem:[%s0 + $0x14] sm:$0xf]
  %v19 = vld [vmem:[%s1] sm:$0xff]
  %v20 = vld [vmem:[%s1 + $0x8] sm:$0xff]
  %v21 = vld [vmem:[%s1 + $0x10] sm:$0xff]
  %v22 = vld [vmem:[%s1 + $0x18] sm:$0xff]
  %v23 = vld [vmem:[%s1 + $0x20] sm:$0xff]
  %v24 = vld [vmem:[%s1 + $0x28] sm:$0xff]
  %v25 = vld [vmem:[%s1 + $0x30] sm:$0xff]
  %v26 = vld [vmem:[%s1 + $0x38] sm:$0xff]
  %v27 = vld [vmem:[%s1 + $0x40] sm:$0xff]
  %v28 = vld [vmem:[%s1 + $0x48] sm:$0xff]
  %v29 = vld [vmem:[%s1 + $0x50] sm:$0xff]
  %v30 = vld [vmem:[%s1 + $0x58] sm:$0xff]
  %v31 = vld [vmem:[%s1 + $0x60] sm:$0xff]
  %v32 = vld [vmem:[%s1 + $0x68] sm:$0xff]
  %v33 = vld [vmem:[%s1 + $0x70] sm:$0xff]
  %v34 = vld [vmem:[%s1 + $0x78] sm:$0xff]
  %v35 = vld [vmem:[%s1 + $0x80] sm:$0xff]
  %v36 = vld [vmem:[%s1 + $0x88] sm:$0xff]
  %v37 = vld [vmem:[%s1 + $0x90] sm:$0xff]
  %v38 = vld [vmem:[%s1 + $0x98] sm:$0xff]
  %v39 = vld [vmem:[%s1 + $0xa0] sm:$0xff]
  %v40 = vld [vmem:[%s1 + $0xa8] sm:$0xff]
  %v41 = vld [vmem:[%s1 + $0xb0] sm:$0xff]
  %v42 = vld [vmem:[%s1 + $0xb8] sm:$0xff]
  %v43 = vld [vmem:[%s1 + $0xc0] sm:$0xff]
  %v44 = vld [vmem:[%s1 + $0xc8] sm:$0xff]
  %v45 = vld [vmem:[%s1 + $0xd0] sm:$0xff]
  %v46 = vld [vmem:[%s1 + $0xd8] sm:$0xff]
  %v47 = vld [vmem:[%s1 + $0xe0] sm:$0xff]
  %v48 = vld [vmem:[%s1 + $0xe8] sm:$0xff]
  %v49 = vld [vmem:[%s1 + $0xf0] sm:$0xff]
  %v50 = vld [vmem:[%s1 + $0xf8] sm:$0xff]
  %v51 = vld [vmem:[%s1 + $0x100] sm:$0xff]
  %v52 = vld [vmem:[%s1 + $0x108] sm:$0xff]
  %v53 = vld [vmem:[%s1 + $0x110] sm:$0xff]
  %v54 = vld [vmem:[%s1 + $0x118] sm:$0xff]
  %v55 = vld [vmem:[%s1 + $0x120] sm:$0xff]
  %v56 = vld [vmem:[%s1 + $0x128] sm:$0xff]
  %v57 = vld [vmem:[%s1 + $0x130] sm:$0xff]
  %v58 = vld [vmem:[%s1 + $0x138] sm:$0xff]
  %v59 = vld [vmem:[%s1 + $0x140] sm:$0xff]
  %v60 = vld [vmem:[%s1 + $0x148] sm:$0xff]
  %v61 = vld [vmem:[%s1 + $0x150] sm:$0xff]
  %v62 = vld [vmem:[%s1 + $0x158] sm:$0xff]
  %v63 = vld [vmem:[%s1 + $0x160] sm:$0xff]
  %v64 = vld [vmem:[%s1 + $0x168] sm:$0xff]
  %v65 = vld [vmem:[%s1 + $0x170] sm:$0xff]
  %v66 = vld [vmem:[%s1 + $0x178] sm:$0xff]
  %v67 = vld [vmem:[%s2] sm:$0x3]
  %v69 = vlaneseq
  %v70 = vshrl.u32 %v69, 7
  %v71 = vsub.s32 0, %v70
  %v72 = vrot.slane %v67, %v71
  %v73 = vlaneseq
  %v74 = vshrl.u32 %v73, 7
  %v75 = vsub.s32 1, %v74
  %v76 = vrot.slane %v67, %v75
  %v83 = vunpack.c.l.b16 %v15
  %v84 = vunpack.c.h.b16 %v15
  %v85 = vunpack.c.l.b16 %v16
  %v86 = vunpack.c.l.b16 %v17
  %v87 = vunpack.c.h.b16 %v17
  %v88 = vunpack.c.l.b16 %v18
  %v89 = vpack.c.b16 %v86, %v83
  %v90 = vpack.c.b16 %v87, %v84
  %v91 = vpack.c.b16 %v88, %v85
  %v143 = vunpack.c.l.b16 %v19
  %v144 = vunpack.c.h.b16 %v19
  %v145 = vunpack.c.l.b16 %v20
  %v146 = vunpack.c.h.b16 %v20
  %v147 = vunpack.c.l.b16 %v21
  %v148 = vunpack.c.h.b16 %v21
  %v149 = vunpack.c.l.b16 %v22
  %v150 = vunpack.c.h.b16 %v22
  %v151 = vunpack.c.l.b16 %v23
  %v152 = vunpack.c.h.b16 %v23
  %v153 = vunpack.c.l.b16 %v24
  %v154 = vunpack.c.h.b16 %v24
  %v155 = vunpack.c.l.b16 %v25
  %v156 = vunpack.c.h.b16 %v25
  %v157 = vunpack.c.l.b16 %v26
  %v158 = vunpack.c.h.b16 %v26
  %v159 = vunpack.c.l.b16 %v27
  %v160 = vunpack.c.h.b16 %v27
  %v161 = vunpack.c.l.b16 %v28
  %v162 = vunpack.c.h.b16 %v28
  %v163 = vunpack.c.l.b16 %v29
  %v164 = vunpack.c.h.b16 %v29
  %v165 = vunpack.c.l.b16 %v30
  %v166 = vunpack.c.h.b16 %v30
  %v167 = vunpack.c.l.b16 %v31
  %v168 = vunpack.c.h.b16 %v31
  %v169 = vunpack.c.l.b16 %v32
  %v170 = vunpack.c.h.b16 %v32
  %v171 = vunpack.c.l.b16 %v33
  %v172 = vunpack.c.h.b16 %v33
  %v173 = vunpack.c.l.b16 %v34
  %v174 = vunpack.c.h.b16 %v34
  %v175 = vunpack.c.l.b16 %v35
  %v176 = vunpack.c.h.b16 %v35
  %v177 = vunpack.c.l.b16 %v36
  %v178 = vunpack.c.h.b16 %v36
  %v179 = vunpack.c.l.b16 %v37
  %v180 = vunpack.c.h.b16 %v37
  %v181 = vunpack.c.l.b16 %v38
  %v182 = vunpack.c.h.b16 %v38
  %v183 = vunpack.c.l.b16 %v39
  %v184 = vunpack.c.h.b16 %v39
  %v185 = vunpack.c.l.b16 %v40
  %v186 = vunpack.c.h.b16 %v40
  %v187 = vunpack.c.l.b16 %v41
  %v188 = vunpack.c.h.b16 %v41
  %v189 = vunpack.c.l.b16 %v42
  %v190 = vunpack.c.h.b16 %v42
  %v191 = vunpack.c.l.b16 %v43
  %v192 = vunpack.c.h.b16 %v43
  %v193 = vunpack.c.l.b16 %v44
  %v194 = vunpack.c.h.b16 %v44
  %v195 = vunpack.c.l.b16 %v45
  %v196 = vunpack.c.h.b16 %v45
  %v197 = vunpack.c.l.b16 %v46
  %v198 = vunpack.c.h.b16 %v46
  %v199 = vunpack.c.l.b16 %v47
  %v200 = vunpack.c.h.b16 %v47
  %v201 = vunpack.c.l.b16 %v48
  %v202 = vunpack.c.h.b16 %v48
  %v203 = vunpack.c.l.b16 %v49
  %v204 = vunpack.c.h.b16 %v49
  %v205 = vunpack.c.l.b16 %v50
  %v206 = vunpack.c.h.b16 %v50
  %v207 = vunpack.c.l.b16 %v51
  %v208 = vunpack.c.h.b16 %v51
  %v209 = vunpack.c.l.b16 %v52
  %v210 = vunpack.c.h.b16 %v52
  %v211 = vunpack.c.l.b16 %v53
  %v212 = vunpack.c.h.b16 %v53
  %v213 = vunpack.c.l.b16 %v54
  %v214 = vunpack.c.h.b16 %v54
  %v215 = vunpack.c.l.b16 %v55
  %v216 = vunpack.c.h.b16 %v55
  %v217 = vunpack.c.l.b16 %v56
  %v218 = vunpack.c.h.b16 %v56
  %v219 = vunpack.c.l.b16 %v57
  %v220 = vunpack.c.h.b16 %v57
  %v221 = vunpack.c.l.b16 %v58
  %v222 = vunpack.c.h.b16 %v58
  %v223 = vunpack.c.l.b16 %v59
  %v224 = vunpack.c.h.b16 %v59
  %v225 = vunpack.c.l.b16 %v60
  %v226 = vunpack.c.h.b16 %v60
  %v227 = vunpack.c.l.b16 %v61
  %v228 = vunpack.c.h.b16 %v61
  %v229 = vunpack.c.l.b16 %v62
  %v230 = vunpack.c.h.b16 %v62
  %v231 = vunpack.c.l.b16 %v63
  %v232 = vunpack.c.h.b16 %v63
  %v233 = vunpack.c.l.b16 %v64
  %v234 = vunpack.c.h.b16 %v64
  %v235 = vunpack.c.l.b16 %v65
  %v236 = vunpack.c.h.b16 %v65
  %v237 = vunpack.c.l.b16 %v66
  %v238 = vunpack.c.h.b16 %v66
  %v239 = vpack.c.b16 %v145, %v143
  %v240 = vpack.c.b16 %v146, %v144
  %v241 = vpack.c.b16 %v149, %v147
  %v242 = vpack.c.b16 %v150, %v148
  %v243 = vpack.c.b16 %v153, %v151
  %v244 = vpack.c.b16 %v154, %v152
  %v245 = vpack.c.b16 %v157, %v155
  %v246 = vpack.c.b16 %v158, %v156
  %v247 = vpack.c.b16 %v161, %v159
  %v248 = vpack.c.b16 %v162, %v160
  %v249 = vpack.c.b16 %v165, %v163
  %v250 = vpack.c.b16 %v166, %v164
  %v251 = vpack.c.b16 %v169, %v167
  %v252 = vpack.c.b16 %v170, %v168
  %v253 = vpack.c.b16 %v173, %v171
  %v254 = vpack.c.b16 %v174, %v172
  %v255 = vpack.c.b16 %v177, %v175
  %v256 = vpack.c.b16 %v178, %v176
  %v257 = vpack.c.b16 %v181, %v179
  %v258 = vpack.c.b16 %v182, %v180
  %v259 = vpack.c.b16 %v185, %v183
  %v260 = vpack.c.b16 %v186, %v184
  %v261 = vpack.c.b16 %v189, %v187
  %v262 = vpack.c.b16 %v190, %v188
  %v263 = vpack.c.b16 %v193, %v191
  %v264 = vpack.c.b16 %v194, %v192
  %v265 = vpack.c.b16 %v197, %v195
  %v266 = vpack.c.b16 %v198, %v196
  %v267 = vpack.c.b16 %v201, %v199
  %v268 = vpack.c.b16 %v202, %v200
  %v269 = vpack.c.b16 %v205, %v203
  %v270 = vpack.c.b16 %v206, %v204
  %v271 = vpack.c.b16 %v209, %v207
  %v272 = vpack.c.b16 %v210, %v208
  %v273 = vpack.c.b16 %v213, %v211
  %v274 = vpack.c.b16 %v214, %v212
  %v275 = vpack.c.b16 %v217, %v215
  %v276 = vpack.c.b16 %v218, %v216
  %v277 = vpack.c.b16 %v221, %v219
  %v278 = vpack.c.b16 %v222, %v220
  %v279 = vpack.c.b16 %v225, %v223
  %v280 = vpack.c.b16 %v226, %v224
  %v281 = vpack.c.b16 %v229, %v227
  %v282 = vpack.c.b16 %v230, %v228
  %v283 = vpack.c.b16 %v233, %v231
  %v284 = vpack.c.b16 %v234, %v232
  %v285 = vpack.c.b16 %v237, %v235
  %v286 = vpack.c.b16 %v238, %v236
  %335 = vmatprep.subr.bf16.mxu0 %v254
  %336 = vmatpush1.bf16.msra.mxu0 %v253
  %337 = vmatprep.subr.bf16.mxu0 %v252
  %338 = vmatpush1.bf16.msra.mxu0 %v251
  %339 = vmatprep.subr.bf16.mxu0 %v250
  %340 = vmatpush1.bf16.msra.mxu0 %v249
  %341 = vmatprep.subr.bf16.mxu0 %v248
  %342 = vmatpush1.bf16.msra.mxu0 %v247
  %343 = vmatprep.subr.bf16.mxu0 %v246
  %344 = vmatpush1.bf16.msra.mxu0 %v245
  %345 = vmatprep.subr.bf16.mxu0 %v244
  %346 = vmatpush1.bf16.msra.mxu0 %v243
  %347 = vmatprep.subr.bf16.mxu0 %v242
  %348 = vmatpush1.bf16.msra.mxu0 %v241
  %349 = vmatprep.subr.bf16.mxu0 %v240
  %350 = vmatpush1.bf16.msra.mxu0 %v239
  %351 = vmatprep.subr.bf16.mxu0 %v270
  %352 = vmatpush2.bf16.msra.mxu0 %v269
  %353 = vmatprep.subr.bf16.mxu0 %v268
  %354 = vmatpush2.bf16.msra.mxu0 %v267
  %355 = vmatprep.subr.bf16.mxu0 %v266
  %356 = vmatpush2.bf16.msra.mxu0 %v265
  %357 = vmatprep.subr.bf16.mxu0 %v264
  %358 = vmatpush2.bf16.msra.mxu0 %v263
  %359 = vmatprep.subr.bf16.mxu0 %v262
  %360 = vmatpush2.bf16.msra.mxu0 %v261
  %361 = vmatprep.subr.bf16.mxu0 %v260
  %362 = vmatpush2.bf16.msra.mxu0 %v259
  %363 = vmatprep.subr.bf16.mxu0 %v258
  %364 = vmatpush2.bf16.msra.mxu0 %v257
  %365 = vmatprep.subr.bf16.mxu0 %v256
  %366 = vmatpush2.bf16.msra.mxu0 %v255
  %367 = vmatprep.mubr.bf16.mxu0 %v90
  %368 = vmatmul.mubr.bf16.gmra.mxu0 %v89
  %v369 = vpop.f32.mrf.mxu0
  %v370 = vadd.f32 %v72, %v369
  %v371 = vpop.f32.mrf.mxu0
  %v372 = vadd.f32 %v76, %v371
  %v373 = vpop.f32.mrf.mxu0
  %v374 = vadd.f32 %v72, %v373
  %v375 = vpop.f32.mrf.mxu0
  %v376 = vadd.f32 %v76, %v375
  %377 = vdwg.mxu0
  %378 = vmatprep.subr.bf16.mxu0 %v286
  %379 = vmatpush1.bf16.msra.mxu0 %v285
  %380 = vmatprep.subr.bf16.mxu0 %v284
  %381 = vmatpush1.bf16.msra.mxu0 %v283
  %382 = vmatprep.subr.bf16.mxu0 %v282
  %383 = vmatpush1.bf16.msra.mxu0 %v281
  %384 = vmatprep.subr.bf16.mxu0 %v280
  %385 = vmatpush1.bf16.msra.mxu0 %v279
  %386 = vmatprep.subr.bf16.mxu0 %v278
  %387 = vmatpush1.bf16.msra.mxu0 %v277
  %388 = vmatprep.subr.bf16.mxu0 %v276
  %389 = vmatpush1.bf16.msra.mxu0 %v275
  %390 = vmatprep.subr.bf16.mxu0 %v274
  %391 = vmatpush1.bf16.msra.mxu0 %v273
  %392 = vmatprep.subr.bf16.mxu0 %v272
  %393 = vmatpush1.bf16.msra.mxu0 %v271
  %394 = vmatprep.subr.bf16.mxu0 0
  %395 = vmatpush2.bf16.msra.mxu0 0
  %396 = vmatprep.subr.bf16.mxu0 0
  %397 = vmatpush2.bf16.msra.mxu0 0
  %398 = vmatprep.subr.bf16.mxu0 0
  %399 = vmatpush2.bf16.msra.mxu0 0
  %400 = vmatprep.subr.bf16.mxu0 0
  %401 = vmatpush2.bf16.msra.mxu0 0
  %402 = vmatprep.subr.bf16.mxu0 0
  %403 = vmatpush2.bf16.msra.mxu0 0
  %404 = vmatprep.subr.bf16.mxu0 0
  %405 = vmatpush2.bf16.msra.mxu0 0
  %406 = vmatprep.subr.bf16.mxu0 0
  %407 = vmatpush2.bf16.msra.mxu0 0
  %408 = vmatprep.subr.bf16.mxu0 0
  %409 = vmatpush2.bf16.msra.mxu0 0
  %410 = vmatprep.mubr.bf16.mxu0 0
  %411 = vmatmul.mubr.bf16.gmra.mxu0 %v91
  %v412 = vpop.f32.mrf.mxu0
  %v413 = vadd.f32 %v370, %v412
  %v414 = vpop.f32.mrf.mxu0
  %v415 = vadd.f32 %v372, %v414
  %v416 = vpop.f32.mrf.mxu0
  %v417 = vadd.f32 %v374, %v416
  %v418 = vpop.f32.mrf.mxu0
  %v419 = vadd.f32 %v376, %v418
  %420 = vdwg.mxu0
  %v421 = vlaneseq
  %v422 = vand.u32 %v421, 127
  %v423 = vadd.s32 %v422, 128
  %vm424 = vcmp.lt.s32.totalorder %v422, 128
  %vm425 = vcmp.lt.s32.totalorder %v423, 128
  %v426 = vmax.f32 %v413, 0.0
  %v427 = vmax.f32 %v415, 0.0
  %v428 = vmax.f32 %v417, 0.0
  %v429 = vmax.f32 %v419, 0.0
  %v430 = vsel %vm424, %v426, %v413
  %v431 = vsel %vm425, %v427, %v415
  %v432 = vsel %vm424, %v428, %v417
  %v433 = vsel %vm425, %v429, %v419
  %v434 = vpack.c.bf16 %v432, %v430
  %v435 = vpack.c.bf16 %v433, %v431
  %v438 = vunpack.c.l.b16 %v434
  %v439 = vunpack.c.l.b16 %v435
  %v440 = vunpack.c.h.b16 %v434
  %v441 = vunpack.c.h.b16 %v435
  %v442 = vpack.c.b16 %v439, %v438
  %v443 = vpack.c.b16 %v441, %v440
  %446 = vst [vmem:[%s3] sm:$0xff] %v442
  %447 = vst [vmem:[%s3 + $0x8] sm:$0xff] %v443
  // Predicated region
  $region14: #{_lambda_.16} parent=0 // pred_check
    _
  $region15: #{_lambda_.16} parent=0 // pred_check_branch
    %449 = sbr.rel (0) target = $region17
  $region16: #{_lambda_.16} parent=0 // pred_region
    _
  $region17: #{_lambda_.16} parent=0 // pred_fallthru
    _
  // Predicated region
  $region18: #{_lambda_.16} parent=0 // pred_check
    _
  $region19: #{_lambda_.16} parent=0 // pred_check_branch
    %451 = sbr.rel (0) target = $region21
  $region20: #{_lambda_.16} parent=0 // pred_region
    _
  $region21: #{_lambda_.16} parent=0 // pred_fallthru
    _

// kernel: _lambda_.17
$region0: #{_lambda_.17}
  #allocation0 [shape = 'u32[]', space=smem, size = 0x4, offset = 0x4, fixed_abs, tag = 'smem constant byte address 0x4 - core index']
  #allocation1 [shape = 'u32[144,128]{1,0:T(1,128)}', space=vmem, size = 0x12000, scoped, tag = 'internal scratch']
  %s0 = inlined_call_operand.vmem [shape: bf16[16,640], index: 0, kind: input, shape index: {}]
  %s1 = inlined_call_operand.vmem [shape: bf16[640,128], index: 1, kind: input, shape index: {}]
  %s2 = inlined_call_operand.vmem [shape: f32[1,128], index: 2, kind: input, shape index: {}]
  %s3 = inlined_call_operand.vmem [shape: bf16[16,128], index: 3, kind: input, shape index: {}]
  %s4 = inlined_call_operand.vmem [shape: bf16[16,128], index: 4, kind: output, shape index: {}]
  %s5 = sld [smem:[#allocation0]]
  $region26: #{_lambda_.17} parent=0
    _
  %s7 = ssub.s32 1, %s5
  %s8 = scalar_select 0, %s7, %s5
  // Predicated region
  $region2: #{_lambda_.17} parent=0 // pred_check
    _
  $region3: #{_lambda_.17} parent=0 // pred_check_branch
    %10 = sbr.rel (0) target = $region5
  $region4: #{_lambda_.17} parent=0 // pred_region
    _
  $region5: #{_lambda_.17} parent=0 // pred_fallthru
    _
  // Predicated region
  $region6: #{_lambda_.17} parent=0 // pred_check
    _
  $region7: #{_lambda_.17} parent=0 // pred_check_branch
    %12 = sbr.rel (0) target = $region9
  $region8: #{_lambda_.17} parent=0 // pred_region
    _
  $region9: #{_lambda_.17} parent=0 // pred_fallthru
    _
  // Predicated region
  $region10: #{_lambda_.17} parent=0 // pred_check
    _
  $region11: #{_lambda_.17} parent=0 // pred_check_branch
    %14 = sbr.rel (0) target = $region13
  $region12: #{_lambda_.17} parent=0 // pred_region
    _
  $region13: #{_lambda_.17} parent=0 // pred_fallthru
    _
  // Predicated region
  $region14: #{_lambda_.17} parent=0 // pred_check
    _
  $region15: #{_lambda_.17} parent=0 // pred_check_branch
    %16 = sbr.rel (0) target = $region17
  $region16: #{_lambda_.17} parent=0 // pred_region
    _
  $region17: #{_lambda_.17} parent=0 // pred_fallthru
    _
  %v18 = vld [vmem:[%s0] sm:$0xff]
  %v19 = vld [vmem:[%s0 + $0x8] sm:$0xff]
  %v20 = vld [vmem:[%s0 + $0x10] sm:$0xf]
  %v21 = vld [vmem:[%s0 + $0x14] sm:$0xff]
  %v22 = vld [vmem:[%s0 + $0x1c] sm:$0xff]
  %v23 = vld [vmem:[%s0 + $0x24] sm:$0xf]
  %v24 = vld [vmem:[%s1] sm:$0xf]
  %v25 = vld [vmem:[%s1 + $0x4] sm:$0xf]
  %v26 = vld [vmem:[%s1 + $0x8] sm:$0xf]
  %v27 = vld [vmem:[%s1 + $0xc] sm:$0xf]
  %v28 = vld [vmem:[%s1 + $0x10] sm:$0xf]
  %v29 = vld [vmem:[%s1 + $0x14] sm:$0xf]
  %v30 = vld [vmem:[%s1 + $0x18] sm:$0xf]
  %v31 = vld [vmem:[%s1 + $0x1c] sm:$0xf]
  %v32 = vld [vmem:[%s1 + $0x20] sm:$0xf]
  %v33 = vld [vmem:[%s1 + $0x24] sm:$0xf]
  %v34 = vld [vmem:[%s1 + $0x28] sm:$0xf]
  %v35 = vld [vmem:[%s1 + $0x2c] sm:$0xf]
  %v36 = vld [vmem:[%s1 + $0x30] sm:$0xf]
  %v37 = vld [vmem:[%s1 + $0x34] sm:$0xf]
  %v38 = vld [vmem:[%s1 + $0x38] sm:$0xf]
  %v39 = vld [vmem:[%s1 + $0x3c] sm:$0xf]
  %v40 = vld [vmem:[%s1 + $0x40] sm:$0xf]
  %v41 = vld [vmem:[%s1 + $0x44] sm:$0xf]
  %v42 = vld [vmem:[%s1 + $0x48] sm:$0xf]
  %v43 = vld [vmem:[%s1 + $0x4c] sm:$0xf]
  %v44 = vld [vmem:[%s1 + $0x50] sm:$0xf]
  %v45 = vld [vmem:[%s1 + $0x54] sm:$0xf]
  %v46 = vld [vmem:[%s1 + $0x58] sm:$0xf]
  %v47 = vld [vmem:[%s1 + $0x5c] sm:$0xf]
  %v48 = vld [vmem:[%s1 + $0x60] sm:$0xf]
  %v49 = vld [vmem:[%s1 + $0x64] sm:$0xf]
  %v50 = vld [vmem:[%s1 + $0x68] sm:$0xf]
  %v51 = vld [vmem:[%s1 + $0x6c] sm:$0xf]
  %v52 = vld [vmem:[%s1 + $0x70] sm:$0xf]
  %v53 = vld [vmem:[%s1 + $0x74] sm:$0xf]
  %v54 = vld [vmem:[%s1 + $0x78] sm:$0xf]
  %v55 = vld [vmem:[%s1 + $0x7c] sm:$0xf]
  %v56 = vld [vmem:[%s1 + $0x80] sm:$0xf]
  %v57 = vld [vmem:[%s1 + $0x84] sm:$0xf]
  %v58 = vld [vmem:[%s1 + $0x88] sm:$0xf]
  %v59 = vld [vmem:[%s1 + $0x8c] sm:$0xf]
  %v60 = vld [vmem:[%s1 + $0x90] sm:$0xf]
  %v61 = vld [vmem:[%s1 + $0x94] sm:$0xf]
  %v62 = vld [vmem:[%s1 + $0x98] sm:$0xf]
  %v63 = vld [vmem:[%s1 + $0x9c] sm:$0xf]
  %v64 = vld [vmem:[%s1 + $0xa0] sm:$0xf]
  %v65 = vld [vmem:[%s1 + $0xa4] sm:$0xf]
  %v66 = vld [vmem:[%s1 + $0xa8] sm:$0xf]
  %v67 = vld [vmem:[%s1 + $0xac] sm:$0xf]
  %v68 = vld [vmem:[%s1 + $0xb0] sm:$0xf]
  %v69 = vld [vmem:[%s1 + $0xb4] sm:$0xf]
  %v70 = vld [vmem:[%s1 + $0xb8] sm:$0xf]
  %v71 = vld [vmem:[%s1 + $0xbc] sm:$0xf]
  %v72 = vld [vmem:[%s1 + $0xc0] sm:$0xf]
  %v73 = vld [vmem:[%s1 + $0xc4] sm:$0xf]
  %v74 = vld [vmem:[%s1 + $0xc8] sm:$0xf]
  %v75 = vld [vmem:[%s1 + $0xcc] sm:$0xf]
  %v76 = vld [vmem:[%s1 + $0xd0] sm:$0xf]
  %v77 = vld [vmem:[%s1 + $0xd4] sm:$0xf]
  %v78 = vld [vmem:[%s1 + $0xd8] sm:$0xf]
  %v79 = vld [vmem:[%s1 + $0xdc] sm:$0xf]
  %v80 = vld [vmem:[%s1 + $0xe0] sm:$0xf]
  %v81 = vld [vmem:[%s1 + $0xe4] sm:$0xf]
  %v82 = vld [vmem:[%s1 + $0xe8] sm:$0xf]
  %v83 = vld [vmem:[%s1 + $0xec] sm:$0xf]
  %v84 = vld [vmem:[%s1 + $0xf0] sm:$0xf]
  %v85 = vld [vmem:[%s1 + $0xf4] sm:$0xf]
  %v86 = vld [vmem:[%s1 + $0xf8] sm:$0xf]
  %v87 = vld [vmem:[%s1 + $0xfc] sm:$0xf]
  %v88 = vld [vmem:[%s1 + $0x100] sm:$0xf]
  %v89 = vld [vmem:[%s1 + $0x104] sm:$0xf]
  %v90 = vld [vmem:[%s1 + $0x108] sm:$0xf]
  %v91 = vld [vmem:[%s1 + $0x10c] sm:$0xf]
  %v92 = vld [vmem:[%s1 + $0x110] sm:$0xf]
  %v93 = vld [vmem:[%s1 + $0x114] sm:$0xf]
  %v94 = vld [vmem:[%s1 + $0x118] sm:$0xf]
  %v95 = vld [vmem:[%s1 + $0x11c] sm:$0xf]
  %v96 = vld [vmem:[%s1 + $0x120] sm:$0xf]
  %v97 = vld [vmem:[%s1 + $0x124] sm:$0xf]
  %v98 = vld [vmem:[%s1 + $0x128] sm:$0xf]
  %v99 = vld [vmem:[%s1 + $0x12c] sm:$0xf]
  %v100 = vld [vmem:[%s1 + $0x130] sm:$0xf]
  %v101 = vld [vmem:[%s1 + $0x134] sm:$0xf]
  %v102 = vld [vmem:[%s1 + $0x138] sm:$0xf]
  %v103 = vld [vmem:[%s1 + $0x13c] sm:$0xf]
  %v104 = vld [vmem:[%s2] sm:$0x1]
  %v106 = vlaneseq
  %v107 = vshrl.u32 %v106, 7
  %v108 = vsub.s32 0, %v107
  %v109 = vrot.slane %v104, %v108
  %v117 = vunpack.c.l.b16 %v18
  %v118 = vunpack.c.h.b16 %v18
  %v119 = vunpack.c.l.b16 %v19
  %v120 = vunpack.c.h.b16 %v19
  %v121 = vunpack.c.l.b16 %v20
  %v122 = vunpack.c.l.b16 %v21
  %v123 = vunpack.c.h.b16 %v21
  %v124 = vunpack.c.l.b16 %v22
  %v125 = vunpack.c.h.b16 %v22
  %v126 = vunpack.c.l.b16 %v23
  %v127 = vpack.c.b16 %v122, %v117
  %v128 = vpack.c.b16 %v123, %v118
  %v129 = vpack.c.b16 %v124, %v119
  %v130 = vpack.c.b16 %v125, %v120
  %v131 = vpack.c.b16 %v126, %v121
  %v217 = vunpack.c.l.b16 %v24
  %v218 = vunpack.c.l.b16 %v25
  %v219 = vunpack.c.l.b16 %v26
  %v220 = vunpack.c.l.b16 %v27
  %v221 = vunpack.c.l.b16 %v28
  %v222 = vunpack.c.l.b16 %v29
  %v223 = vunpack.c.l.b16 %v30
  %v224 = vunpack.c.l.b16 %v31
  %v225 = vunpack.c.l.b16 %v32
  %v226 = vunpack.c.l.b16 %v33
  %v227 = vunpack.c.l.b16 %v34
  %v228 = vunpack.c.l.b16 %v35
  %v229 = vunpack.c.l.b16 %v36
  %v230 = vunpack.c.l.b16 %v37
  %v231 = vunpack.c.l.b16 %v38
  %v232 = vunpack.c.l.b16 %v39
  %v233 = vunpack.c.l.b16 %v40
  %v234 = vunpack.c.l.b16 %v41
  %v235 = vunpack.c.l.b16 %v42
  %v236 = vunpack.c.l.b16 %v43
  %v237 = vunpack.c.l.b16 %v44
  %v238 = vunpack.c.l.b16 %v45
  %v239 = vunpack.c.l.b16 %v46
  %v240 = vunpack.c.l.b16 %v47
  %v241 = vunpack.c.l.b16 %v48
  %v242 = vunpack.c.l.b16 %v49
  %v243 = vunpack.c.l.b16 %v50
  %v244 = vunpack.c.l.b16 %v51
  %v245 = vunpack.c.l.b16 %v52
  %v246 = vunpack.c.l.b16 %v53
  %v247 = vunpack.c.l.b16 %v54
  %v248 = vunpack.c.l.b16 %v55
  %v249 = vunpack.c.l.b16 %v56
  %v250 = vunpack.c.l.b16 %v57
  %v251 = vunpack.c.l.b16 %v58
  %v252 = vunpack.c.l.b16 %v59
  %v253 = vunpack.c.l.b16 %v60
  %v254 = vunpack.c.l.b16 %v61
  %v255 = vunpack.c.l.b16 %v62
  %v256 = vunpack.c.l.b16 %v63
  %v257 = vunpack.c.l.b16 %v64
  %v258 = vunpack.c.l.b16 %v65
  %v259 = vunpack.c.l.b16 %v66
  %v260 = vunpack.c.l.b16 %v67
  %v261 = vunpack.c.l.b16 %v68
  %v262 = vunpack.c.l.b16 %v69
  %v263 = vunpack.c.l.b16 %v70
  %v264 = vunpack.c.l.b16 %v71
  %v265 = vunpack.c.l.b16 %v72
  %v266 = vunpack.c.l.b16 %v73
  %v267 = vunpack.c.l.b16 %v74
  %v268 = vunpack.c.l.b16 %v75
  %v269 = vunpack.c.l.b16 %v76
  %v270 = vunpack.c.l.b16 %v77
  %v271 = vunpack.c.l.b16 %v78
  %v272 = vunpack.c.l.b16 %v79
  %v273 = vunpack.c.l.b16 %v80
  %v274 = vunpack.c.l.b16 %v81
  %v275 = vunpack.c.l.b16 %v82
  %v276 = vunpack.c.l.b16 %v83
  %v277 = vunpack.c.l.b16 %v84
  %v278 = vunpack.c.l.b16 %v85
  %v279 = vunpack.c.l.b16 %v86
  %v280 = vunpack.c.l.b16 %v87
  %v281 = vunpack.c.l.b16 %v88
  %v282 = vunpack.c.l.b16 %v89
  %v283 = vunpack.c.l.b16 %v90
  %v284 = vunpack.c.l.b16 %v91
  %v285 = vunpack.c.l.b16 %v92
  %v286 = vunpack.c.l.b16 %v93
  %v287 = vunpack.c.l.b16 %v94
  %v288 = vunpack.c.l.b16 %v95
  %v289 = vunpack.c.l.b16 %v96
  %v290 = vunpack.c.l.b16 %v97
  %v291 = vunpack.c.l.b16 %v98
  %v292 = vunpack.c.l.b16 %v99
  %v293 = vunpack.c.l.b16 %v100
  %v294 = vunpack.c.l.b16 %v101
  %v295 = vunpack.c.l.b16 %v102
  %v296 = vunpack.c.l.b16 %v103
  %v297 = vpack.c.b16 %v218, %v217
  %v298 = vpack.c.b16 %v220, %v219
  %v299 = vpack.c.b16 %v222, %v221
  %v300 = vpack.c.b16 %v224, %v223
  %v301 = vpack.c.b16 %v226, %v225
  %v302 = vpack.c.b16 %v228, %v227
  %v303 = vpack.c.b16 %v230, %v229
  %v304 = vpack.c.b16 %v232, %v231
  %v305 = vpack.c.b16 %v234, %v233
  %v306 = vpack.c.b16 %v236, %v235
  %v307 = vpack.c.b16 %v238, %v237
  %v308 = vpack.c.b16 %v240, %v239
  %v309 = vpack.c.b16 %v242, %v241
  %v310 = vpack.c.b16 %v244, %v243
  %v311 = vpack.c.b16 %v246, %v245
  %v312 = vpack.c.b16 %v248, %v247
  %v313 = vpack.c.b16 %v250, %v249
  %v314 = vpack.c.b16 %v252, %v251
  %v315 = vpack.c.b16 %v254, %v253
  %v316 = vpack.c.b16 %v256, %v255
  %v317 = vpack.c.b16 %v258, %v257
  %v318 = vpack.c.b16 %v260, %v259
  %v319 = vpack.c.b16 %v262, %v261
  %v320 = vpack.c.b16 %v264, %v263
  %v321 = vpack.c.b16 %v266, %v265
  %v322 = vpack.c.b16 %v268, %v267
  %v323 = vpack.c.b16 %v270, %v269
  %v324 = vpack.c.b16 %v272, %v271
  %v325 = vpack.c.b16 %v274, %v273
  %v326 = vpack.c.b16 %v276, %v275
  %v327 = vpack.c.b16 %v278, %v277
  %v328 = vpack.c.b16 %v280, %v279
  %v329 = vpack.c.b16 %v282, %v281
  %v330 = vpack.c.b16 %v284, %v283
  %v331 = vpack.c.b16 %v286, %v285
  %v332 = vpack.c.b16 %v288, %v287
  %v333 = vpack.c.b16 %v290, %v289
  %v334 = vpack.c.b16 %v292, %v291
  %v335 = vpack.c.b16 %v294, %v293
  %v336 = vpack.c.b16 %v296, %v295
  %377 = vmatprep.subr.bf16.mxu0 0
  %378 = vmatpush1.bf16.msra.mxu0 %v304
  %379 = vmatprep.subr.bf16.mxu0 0
  %380 = vmatpush1.bf16.msra.mxu0 %v303
  %381 = vmatprep.subr.bf16.mxu0 0
  %382 = vmatpush1.bf16.msra.mxu0 %v302
  %383 = vmatprep.subr.bf16.mxu0 0
  %384 = vmatpush1.bf16.msra.mxu0 %v301
  %385 = vmatprep.subr.bf16.mxu0 0
  %386 = vmatpush1.bf16.msra.mxu0 %v300
  %387 = vmatprep.subr.bf16.mxu0 0
  %388 = vmatpush1.bf16.msra.mxu0 %v299
  %389 = vmatprep.subr.bf16.mxu0 0
  %390 = vmatpush1.bf16.msra.mxu0 %v298
  %391 = vmatprep.subr.bf16.mxu0 0
  %392 = vmatpush1.bf16.msra.mxu0 %v297
  %393 = vmatprep.subr.bf16.mxu0 0
  %394 = vmatpush2.bf16.msra.mxu0 %v312
  %395 = vmatprep.subr.bf16.mxu0 0
  %396 = vmatpush2.bf16.msra.mxu0 %v311
  %397 = vmatprep.subr.bf16.mxu0 0
  %398 = vmatpush2.bf16.msra.mxu0 %v310
  %399 = vmatprep.subr.bf16.mxu0 0
  %400 = vmatpush2.bf16.msra.mxu0 %v309
  %401 = vmatprep.subr.bf16.mxu0 0
  %402 = vmatpush2.bf16.msra.mxu0 %v308
  %403 = vmatprep.subr.bf16.mxu0 0
  %404 = vmatpush2.bf16.msra.mxu0 %v307
  %405 = vmatprep.subr.bf16.mxu0 0
  %406 = vmatpush2.bf16.msra.mxu0 %v306
  %407 = vmatprep.subr.bf16.mxu0 0
  %408 = vmatpush2.bf16.msra.mxu0 %v305
  %409 = vmatprep.mubr.bf16.mxu0 %v128
  %410 = vmatmul.mubr.bf16.gmra.mxu0 %v127
  %v411 = vpop.f32.mrf.mxu0
  %v412 = vadd.f32 %v109, %v411
  %v413 = vpop.f32.mrf.mxu0
  %v414 = vpop.f32.mrf.mxu0
  %v415 = vadd.f32 %v109, %v414
  %v416 = vpop.f32.mrf.mxu0
  %417 = vdwg.mxu0
  %418 = vmatprep.subr.bf16.mxu0 0
  %419 = vmatpush1.bf16.msra.mxu0 %v320
  %420 = vmatprep.subr.bf16.mxu0 0
  %421 = vmatpush1.bf16.msra.mxu0 %v319
  %422 = vmatprep.subr.bf16.mxu0 0
  %423 = vmatpush1.bf16.msra.mxu0 %v318
  %424 = vmatprep.subr.bf16.mxu0 0
  %425 = vmatpush1.bf16.msra.mxu0 %v317
  %426 = vmatprep.subr.bf16.mxu0 0
  %427 = vmatpush1.bf16.msra.mxu0 %v316
  %428 = vmatprep.subr.bf16.mxu0 0
  %429 = vmatpush1.bf16.msra.mxu0 %v315
  %430 = vmatprep.subr.bf16.mxu0 0
  %431 = vmatpush1.bf16.msra.mxu0 %v314
  %432 = vmatprep.subr.bf16.mxu0 0
  %433 = vmatpush1.bf16.msra.mxu0 %v313
  %434 = vmatprep.subr.bf16.mxu0 0
  %435 = vmatpush2.bf16.msra.mxu0 %v328
  %436 = vmatprep.subr.bf16.mxu0 0
  %437 = vmatpush2.bf16.msra.mxu0 %v327
  %438 = vmatprep.subr.bf16.mxu0 0
  %439 = vmatpush2.bf16.msra.mxu0 %v326
  %440 = vmatprep.subr.bf16.mxu0 0
  %441 = vmatpush2.bf16.msra.mxu0 %v325
  %442 = vmatprep.subr.bf16.mxu0 0
  %443 = vmatpush2.bf16.msra.mxu0 %v324
  %444 = vmatprep.subr.bf16.mxu0 0
  %445 = vmatpush2.bf16.msra.mxu0 %v323
  %446 = vmatprep.subr.bf16.mxu0 0
  %447 = vmatpush2.bf16.msra.mxu0 %v322
  %448 = vmatprep.subr.bf16.mxu0 0
  %449 = vmatpush2.bf16.msra.mxu0 %v321
  %450 = vmatprep.mubr.bf16.mxu0 %v130
  %451 = vmatmul.mubr.bf16.gmra.mxu0 %v129
  %v452 = vpop.f32.mrf.mxu0
  %v453 = vadd.f32 %v412, %v452
  %v454 = vpop.f32.mrf.mxu0
  %v455 = vpop.f32.mrf.mxu0
  %v456 = vadd.f32 %v415, %v455
  %v457 = vpop.f32.mrf.mxu0
  %458 = vdwg.mxu0
  %459 = vmatprep.subr.bf16.mxu0 0
  %460 = vmatpush1.bf16.msra.mxu0 %v336
  %461 = vmatprep.subr.bf16.mxu0 0
  %462 = vmatpush1.bf16.msra.mxu0 %v335
  %463 = vmatprep.subr.bf16.mxu0 0
  %464 = vmatpush1.bf16.msra.mxu0 %v334
  %465 = vmatprep.subr.bf16.mxu0 0
  %466 = vmatpush1.bf16.msra.mxu0 %v333
  %467 = vmatprep.subr.bf16.mxu0 0
  %468 = vmatpush1.bf16.msra.mxu0 %v332
  %469 = vmatprep.subr.bf16.mxu0 0
  %470 = vmatpush1.bf16.msra.mxu0 %v331
  %471 = vmatprep.subr.bf16.mxu0 0
  %472 = vmatpush1.bf16.msra.mxu0 %v330
  %473 = vmatprep.subr.bf16.mxu0 0
  %474 = vmatpush1.bf16.msra.mxu0 %v329
  %475 = vmatprep.subr.bf16.mxu0 0
  %476 = vmatpush2.bf16.msra.mxu0 0
  %477 = vmatprep.subr.bf16.mxu0 0
  %478 = vmatpush2.bf16.msra.mxu0 0
  %479 = vmatprep.subr.bf16.mxu0 0
  %480 = vmatpush2.bf16.msra.mxu0 0
  %481 = vmatprep.subr.bf16.mxu0 0
  %482 = vmatpush2.bf16.msra.mxu0 0
  %483 = vmatprep.subr.bf16.mxu0 0
  %484 = vmatpush2.bf16.msra.mxu0 0
  %485 = vmatprep.subr.bf16.mxu0 0
  %486 = vmatpush2.bf16.msra.mxu0 0
  %487 = vmatprep.subr.bf16.mxu0 0
  %488 = vmatpush2.bf16.msra.mxu0 0
  %489 = vmatprep.subr.bf16.mxu0 0
  %490 = vmatpush2.bf16.msra.mxu0 0
  %491 = vmatprep.mubr.bf16.mxu0 0
  %492 = vmatmul.mubr.bf16.gmra.mxu0 %v131
  %v493 = vpop.f32.mrf.mxu0
  %v494 = vadd.f32 %v453, %v493
  %v495 = vpop.f32.mrf.mxu0
  %v496 = vpop.f32.mrf.mxu0
  %v497 = vadd.f32 %v456, %v496
  %v498 = vpop.f32.mrf.mxu0
  %499 = vdwg.mxu0
  %v500 = vld [vmem:[%s3] sm:$0xf]
  %v501 = vld [vmem:[%s3 + $0x4] sm:$0xf]
  %v502 = vunpack.c.l.bf16 %v500
  %v503 = vunpack.c.l.bf16 %v501
  %v504 = vadd.f32 %v494, %v502
  %v505 = vadd.f32 %v497, %v503
  %v506 = vmax.f32 %v504, 0.0
  %v507 = vmax.f32 %v505, 0.0
  %v508 = vpack.c.bf16 %v507, %v506
  %v510 = vunpack.c.l.b16 %v508
  %v511 = vunpack.c.h.b16 %v508
  %v512 = vpack.c.b16 %v510, %v510
  %v513 = vpack.c.b16 %v511, %v511
  %516 = vst [vmem:[%s4] sm:$0xf] %v512
  %517 = vst [vmem:[%s4 + $0x4] sm:$0xf] %v513
  // Predicated region
  $region18: #{_lambda_.17} parent=0 // pred_check
    _
  $region19: #{_lambda_.17} parent=0 // pred_check_branch
    %519 = sbr.rel (0) target = $region21
  $region20: #{_lambda_.17} parent=0 // pred_region
    _
  $region21: #{_lambda_.17} parent=0 // pred_fallthru
    _
  // Predicated region
  $region22: #{_lambda_.17} parent=0 // pred_check
    _
  $region23: #{_lambda_.17} parent=0 // pred_check_branch
    %521 = sbr.rel (0) target = $region25
  $region24: #{_lambda_.17} parent=0 // pred_region
    _
  $region25: #{_lambda_.17} parent=0 // pred_fallthru
    _

</llo_original>
